<compile_context>
chip_gen: v7x
topology: tpu7x:2x2x1
jax: 0.10.0
libtpu: 0.0.40
codegen_flags: <defaults>
</compile_context>

<pallas_src>
from functools import partial

import jax
import jax.numpy as jnp
from jax.experimental import pallas as pl
from jax.experimental.pallas import tpu as pltpu

EPS = 1e-5  # nn.BatchNorm2d default


# ----------------------------- Pallas kernels ------------------------------ #

def _conv3x3_stats_kernel(xp_ref, w_ref, b_ref, y_ref, sum_ref, ssq_ref, *, H, W):
    """3x3 "same" (zero-pad) conv + bias for one sample, channel-major.

    xp_ref : (1, C_in, (H + 4) * W)  input, rows zero-padded 2 top / 2 bottom
    w_ref  : (9, C_out, C_in)        weights, index k = 3*ky + kx
    b_ref  : (C_out, 1)              conv bias
    y_ref  : (1, C_out, H * W)       raw conv output (pre-norm), lane-dense in S
    sum_ref, ssq_ref : (1, C_out, 1) per-channel sum / sum-of-squares over S
    """
    S = H * W
    C_in = xp_ref.shape[1]
    C_out = w_ref.shape[1]

    # Output column index of every lane position (zero the contributions that
    # would wrap around the left/right image border, since we only pad rows).
    col = jax.lax.broadcasted_iota(jnp.int32, (C_in, S), 1) % W

    acc = jnp.zeros((C_out, S), jnp.float32)
    for ky in range(3):
        for kx in range(3):
            # output flat index o = h*W + w reads input flat index
            #   (h + ky + 1) * W + (w + kx - 1) = o + (ky + 1) * W + kx - 1
            start = (ky + 1) * W + kx - 1
            xs = xp_ref[0, :, pl.ds(start, S)]                    # (C_in, S)
            if kx == 0:
                xs = jnp.where(col == 0, 0.0, xs)                 # left border
            elif kx == 2:
                xs = jnp.where(col == W - 1, 0.0, xs)             # right border
            acc = acc + jnp.dot(w_ref[3 * ky + kx], xs,
                                preferred_element_type=jnp.float32)
    acc = acc + b_ref[...]                                         # (C_out, 1) bcast

    y_ref[0] = acc.astype(y_ref.dtype)
    # Single-pass stats, reduced over the lane axis.
    sum_ref[0] = jnp.sum(acc, axis=1, keepdims=True)
    ssq_ref[0] = jnp.sum(acc * acc, axis=1, keepdims=True)


def _bn_relu_kernel(y_ref, scale_ref, shift_ref, o_ref):
    """Fused per-channel affine (BatchNorm as scale/shift) + ReLU.

    y_ref: (1, C, S); scale_ref/shift_ref: (C, 1); o_ref: (1, C, S)
    """
    o_ref[0] = jnp.maximum(y_ref[0] * scale_ref[...] + shift_ref[...], 0.0
                           ).astype(o_ref.dtype)


# ----------------------------- pallas_call wrappers ------------------------- #

def _conv3x3_pallas(xp_flat, w9, b_col, H, W):
    # TODO(synk): for large H*W, add an S-tile grid axis (lane blocks in multiples
    # of 128), carry the per-channel sum/sum-sq across tiles (the stats outputs
    # are already partial sums), and cast matmul operands to bf16 on v6e/v7x.
    N, C_in, Sp = xp_flat.shape
    C_out = w9.shape[1]
    S = H * W
    kernel = partial(_conv3x3_stats_kernel, H=H, W=W)
    return pl.pallas_call(
        kernel,
        out_shape=(
            jax.ShapeDtypeStruct((N, C_out, S), jnp.float32),
            jax.ShapeDtypeStruct((N, C_out, 1), jnp.float32),
            jax.ShapeDtypeStruct((N, C_out, 1), jnp.float32),
        ),
        grid=(N,),
        in_specs=[
            pl.BlockSpec((1, C_in, Sp), lambda n: (n, 0, 0)),
            pl.BlockSpec((9, C_out, C_in), lambda n: (0, 0, 0)),  # VMEM-resident
            pl.BlockSpec((C_out, 1), lambda n: (0, 0)),            # VMEM-resident
        ],
        out_specs=(
            pl.BlockSpec((1, C_out, S), lambda n: (n, 0, 0)),
            pl.BlockSpec((1, C_out, 1), lambda n: (n, 0, 0)),
            pl.BlockSpec((1, C_out, 1), lambda n: (n, 0, 0)),
        ),
        compiler_params=pltpu.CompilerParams(dimension_semantics=("parallel",)),
    )(xp_flat, w9, b_col)


def _bn_relu_pallas(y, scale_col, shift_col):
    N, C, S = y.shape
    return pl.pallas_call(
        _bn_relu_kernel,
        out_shape=jax.ShapeDtypeStruct((N, C, S), jnp.float32),
        grid=(N,),
        in_specs=[
            pl.BlockSpec((1, C, S), lambda n: (n, 0, 0)),
            pl.BlockSpec((C, 1), lambda n: (0, 0)),
            pl.BlockSpec((C, 1), lambda n: (0, 0)),
        ],
        out_specs=pl.BlockSpec((1, C, S), lambda n: (n, 0, 0)),
        compiler_params=pltpu.CompilerParams(dimension_semantics=("parallel",)),
    )(y, scale_col, shift_col)


# ------------------------------- forward pass ------------------------------- #

def _conv_bn_relu_layer(x_nchw, w, b, gamma, beta):
    N, C_in, H, W = x_nchw.shape
    C_out = w.shape[0]
    S = H * W

    # Channel-major flat input with 2 rows of zero padding top/bottom (W handled
    # by the in-kernel border mask).  No 9x im2col blow-up, no transposes.
    xp = jnp.pad(x_nchw, ((0, 0), (0, 0), (2, 2), (0, 0)))
    xp = xp.reshape(N, C_in, (H + 4) * W)
    # (C_out, C_in, 3, 3) -> (9, C_out, C_in), k = 3*ky + kx (host-side, once).
    w9 = jnp.transpose(w, (2, 3, 0, 1)).reshape(9, C_out, C_in)

    y, psum, pssq = _conv3x3_pallas(xp, w9, b.reshape(C_out, 1), H, W)

    # Finish the tiny batch reduction: BatchNorm stats over (N, H, W) per channel
    # (training-mode forward, biased variance), fold gamma/beta into scale/shift.
    cnt = jnp.float32(N * S)
    mean = jnp.sum(psum[:, :, 0], axis=0) / cnt                         # (C_out,)
    var = jnp.maximum(jnp.sum(pssq[:, :, 0], axis=0) / cnt - mean * mean, 0.0)
    scale = gamma * jax.lax.rsqrt(var + EPS)
    shift = beta - mean * scale

    z = _bn_relu_pallas(y, scale.reshape(C_out, 1), shift.reshape(C_out, 1))
    return z.reshape(N, C_out, H, W)


@jax.jit
def conv_block_forward(x, params):
    """ConvBlock.forward: (conv3x3 -> BatchNorm2d -> ReLU) x 2."""
    h = _conv_bn_relu_layer(x, params["w1"], params["b1"], params["g1"], params["bt1"])
    return _conv_bn_relu_layer(h, params["w2"], params["b2"], params["g2"], params["bt2"])


# ---------------------------- pure-JAX reference ---------------------------- #

def _ref_layer(x, w, b, gamma, beta):
    dn = ("NCHW", "OIHW", "NCHW")
    y = jax.lax.conv_general_dilated(
        x, w, (1, 1), ((1, 1), (1, 1)), dimension_numbers=dn,
        precision=jax.lax.Precision.HIGHEST)
    y = y + b.reshape(1, -1, 1, 1)
    mean = y.mean(axis=(0, 2, 3), keepdims=True)
    var = ((y - mean) ** 2).mean(axis=(0, 2, 3), keepdims=True)
    yhat = (y - mean) * jax.lax.rsqrt(var + EPS)
    return jnp.maximum(gamma.reshape(1, -1, 1, 1) * yhat + beta.reshape(1, -1, 1, 1), 0.0)


def _ref_forward(x, params):
    h = _ref_layer(x, params["w1"], params["b1"], params["g1"], params["bt1"])
    return _ref_layer(h, params["w2"], params["b2"], params["g2"], params["bt2"])


# ---------------------------------- main ------------------------------------ #

if __name__ == "__main__":
    # ConvBlock(in_channels=4, out_channels=8) -> mid_channels defaults to 8.
    N, C_in, H, W = 2, 4, 16, 16
    mid_channels = 8
    out_channels = 8

    key = jax.random.PRNGKey(0)
    ks = jax.random.split(key, 9)

    x = jax.random.normal(ks[0], (N, C_in, H, W), dtype=jnp.float32)
    params = dict(
        w1=0.2 * jax.random.normal(ks[1], (mid_channels, C_in, 3, 3), jnp.float32),
        b1=0.1 * jax.random.normal(ks[2], (mid_channels,), jnp.float32),
        g1=1.0 + 0.1 * jax.random.normal(ks[3], (mid_channels,), jnp.float32),
        bt1=0.1 * jax.random.normal(ks[4], (mid_channels,), jnp.float32),
        w2=0.2 * jax.random.normal(ks[5], (out_channels, mid_channels, 3, 3), jnp.float32),
        b2=0.1 * jax.random.normal(ks[6], (out_channels,), jnp.float32),
        g2=1.0 + 0.1 * jax.random.normal(ks[7], (out_channels,), jnp.float32),
        bt2=0.1 * jax.random.normal(ks[8], (out_channels,), jnp.float32),
    )

    out = jax.block_until_ready(conv_block_forward(x, params))
    ref = _ref_forward(x, params)

    assert out.shape == (N, out_channels, H, W), out.shape
    max_err = float(jnp.max(jnp.abs(out - ref)))
    # Precision contract: kernel matmuls run on the MXU f32 path with f32
    # accumulation; reference uses Precision.HIGHEST.
    assert jnp.allclose(out, ref, atol=2e-2, rtol=2e-2), max_err

    print("KERNEL_OK")
</pallas_src>

<mosaic_0001>
module attributes {stable_mosaic.version = 11 : i64} {
  func.func @_conv3x3_stats_kernel(%arg0: i32, %arg1: memref<1x4x320xf32, #tpu.memory_space<vmem>>, %arg2: memref<9x8x4xf32, #tpu.memory_space<vmem>>, %arg3: memref<8x1xf32, #tpu.memory_space<vmem>>, %arg4: memref<1x8x256xf32, #tpu.memory_space<vmem>>, %arg5: memref<1x8x1xf32, #tpu.memory_space<vmem>>, %arg6: memref<1x8x1xf32, #tpu.memory_space<vmem>>) attributes {dimension_semantics = [#tpu.dimension_semantics<parallel>], iteration_bounds = array<i64: 2>, scalar_prefetch = 0 : i64, scratch_operands = 0 : i64, tpu.core_type = #tpu.core_type<tc>, window_params = [{transform_indices = @transform_0, window_bounds = array<i64: 1, 4, 320>}, {pipeline_mode = #tpu.pipeline_mode<synchronous>, transform_indices = @transform_1, window_bounds = array<i64: 9, 8, 4>}, {pipeline_mode = #tpu.pipeline_mode<synchronous>, transform_indices = @transform_2, window_bounds = array<i64: 8, 1>}, {transform_indices = @transform_3, window_bounds = array<i64: 1, 8, 256>}, {transform_indices = @transform_4, window_bounds = array<i64: 1, 8, 1>}, {transform_indices = @transform_5, window_bounds = array<i64: 1, 8, 1>}]} {
    %0 = tpu.iota {dimensions = array<i32: 1>} : vector<4x256xi32>
    %c16_i32 = arith.constant 16 : i32
    %c0_i32 = arith.constant 0 : i32
    %1 = arith.cmpi eq, %c16_i32, %c0_i32 : i32
    %c1_i32 = arith.constant 1 : i32
    %2 = arith.select %1, %c1_i32, %c16_i32 : i32
    %3 = vector.broadcast %2 : i32 to vector<4x256xi32>
    %4 = arith.remsi %0, %3 : vector<4x256xi32>
    %c0_i32_0 = arith.constant 0 : i32
    %5 = vector.broadcast %c0_i32_0 : i32 to vector<4x256xi32>
    %6 = arith.cmpi ne, %4, %5 : vector<4x256xi32>
    %c0_i32_1 = arith.constant 0 : i32
    %7 = vector.broadcast %c0_i32_1 : i32 to vector<4x256xi32>
    %8 = arith.cmpi slt, %4, %7 : vector<4x256xi32>
    %c0_i32_2 = arith.constant 0 : i32
    %9 = arith.cmpi slt, %2, %c0_i32_2 : i32
    %10 = vector.broadcast %9 : i1 to vector<4x256xi1>
    %11 = vector.broadcast %10 : vector<4x256xi1> to vector<4x256xi1>
    %12 = arith.xori %8, %11 : vector<4x256xi1>
    %13 = arith.andi %12, %6 : vector<4x256xi1>
    %14 = vector.broadcast %2 : i32 to vector<4x256xi32>
    %15 = arith.addi %4, %14 : vector<4x256xi32>
    %16 = arith.select %13, %15, %4 : vector<4x256xi1>, vector<4x256xi32>
    %cst = arith.constant 0.000000e+00 : f32
    %17 = vector.broadcast %cst : f32 to vector<8x256xf32>
    %c0 = arith.constant 0 : index
    %c0_3 = arith.constant 0 : index
    %c15 = arith.constant 15 : index
    %18 = vector.load %arg1[%c0, %c0_3, %c15] : memref<1x4x320xf32, #tpu.memory_space<vmem>>, vector<1x4x256xf32>
    %19 = vector.shape_cast %18 : vector<1x4x256xf32> to vector<4x256xf32>
    %c0_i32_4 = arith.constant 0 : i32
    %20 = vector.broadcast %c0_i32_4 : i32 to vector<4x256xi32>
    %21 = arith.cmpi eq, %16, %20 : vector<4x256xi32>
    %cst_5 = arith.constant 0.000000e+00 : f32
    %22 = vector.broadcast %cst_5 : f32 to vector<4x256xf32>
    %23 = arith.select %21, %22, %19 : vector<4x256xi1>, vector<4x256xf32>
    %c0_6 = arith.constant 0 : index
    %c0_7 = arith.constant 0 : index
    %c0_8 = arith.constant 0 : index
    %24 = vector.load %arg2[%c0_6, %c0_7, %c0_8] : memref<9x8x4xf32, #tpu.memory_space<vmem>>, vector<1x8x4xf32>
    %25 = vector.shape_cast %24 : vector<1x8x4xf32> to vector<8x4xf32>
    %cst_9 = arith.constant dense<0.000000e+00> : vector<8x256xf32>
    %26 = tpu.matmul %25, %23, %cst_9 {dimension_numbers = #tpu.dot_dimension_numbers<[1], [0], [0], [1], [0, 0, 1, 1], [], []>} : vector<8x4xf32>, vector<4x256xf32>, vector<8x256xf32> -> vector<8x256xf32>
    %27 = arith.addf %17, %26 : vector<8x256xf32>
    %c0_10 = arith.constant 0 : index
    %c0_11 = arith.constant 0 : index
    %c16 = arith.constant 16 : index
    %28 = vector.load %arg1[%c0_10, %c0_11, %c16] : memref<1x4x320xf32, #tpu.memory_space<vmem>>, vector<1x4x256xf32>
    %29 = vector.shape_cast %28 : vector<1x4x256xf32> to vector<4x256xf32>
    %c1 = arith.constant 1 : index
    %c0_12 = arith.constant 0 : index
    %c0_13 = arith.constant 0 : index
    %30 = vector.load %arg2[%c1, %c0_12, %c0_13] : memref<9x8x4xf32, #tpu.memory_space<vmem>>, vector<1x8x4xf32>
    %31 = vector.shape_cast %30 : vector<1x8x4xf32> to vector<8x4xf32>
    %cst_14 = arith.constant dense<0.000000e+00> : vector<8x256xf32>
    %32 = tpu.matmul %31, %29, %cst_14 {dimension_numbers = #tpu.dot_dimension_numbers<[1], [0], [0], [1], [0, 0, 1, 1], [], []>} : vector<8x4xf32>, vector<4x256xf32>, vector<8x256xf32> -> vector<8x256xf32>
    %33 = arith.addf %27, %32 : vector<8x256xf32>
    %c0_15 = arith.constant 0 : index
    %c0_16 = arith.constant 0 : index
    %c17 = arith.constant 17 : index
    %34 = vector.load %arg1[%c0_15, %c0_16, %c17] : memref<1x4x320xf32, #tpu.memory_space<vmem>>, vector<1x4x256xf32>
    %35 = vector.shape_cast %34 : vector<1x4x256xf32> to vector<4x256xf32>
    %c15_i32 = arith.constant 15 : i32
    %36 = vector.broadcast %c15_i32 : i32 to vector<4x256xi32>
    %37 = arith.cmpi eq, %16, %36 : vector<4x256xi32>
    %cst_17 = arith.constant 0.000000e+00 : f32
    %38 = vector.broadcast %cst_17 : f32 to vector<4x256xf32>
    %39 = arith.select %37, %38, %35 : vector<4x256xi1>, vector<4x256xf32>
    %c2 = arith.constant 2 : index
    %c0_18 = arith.constant 0 : index
    %c0_19 = arith.constant 0 : index
    %40 = vector.load %arg2[%c2, %c0_18, %c0_19] : memref<9x8x4xf32, #tpu.memory_space<vmem>>, vector<1x8x4xf32>
    %41 = vector.shape_cast %40 : vector<1x8x4xf32> to vector<8x4xf32>
    %cst_20 = arith.constant dense<0.000000e+00> : vector<8x256xf32>
    %42 = tpu.matmul %41, %39, %cst_20 {dimension_numbers = #tpu.dot_dimension_numbers<[1], [0], [0], [1], [0, 0, 1, 1], [], []>} : vector<8x4xf32>, vector<4x256xf32>, vector<8x256xf32> -> vector<8x256xf32>
    %43 = arith.addf %33, %42 : vector<8x256xf32>
    %c0_21 = arith.constant 0 : index
    %c0_22 = arith.constant 0 : index
    %c31 = arith.constant 31 : index
    %44 = vector.load %arg1[%c0_21, %c0_22, %c31] : memref<1x4x320xf32, #tpu.memory_space<vmem>>, vector<1x4x256xf32>
    %45 = vector.shape_cast %44 : vector<1x4x256xf32> to vector<4x256xf32>
    %c0_i32_23 = arith.constant 0 : i32
    %46 = vector.broadcast %c0_i32_23 : i32 to vector<4x256xi32>
    %47 = arith.cmpi eq, %16, %46 : vector<4x256xi32>
    %cst_24 = arith.constant 0.000000e+00 : f32
    %48 = vector.broadcast %cst_24 : f32 to vector<4x256xf32>
    %49 = arith.select %47, %48, %45 : vector<4x256xi1>, vector<4x256xf32>
    %c3 = arith.constant 3 : index
    %c0_25 = arith.constant 0 : index
    %c0_26 = arith.constant 0 : index
    %50 = vector.load %arg2[%c3, %c0_25, %c0_26] : memref<9x8x4xf32, #tpu.memory_space<vmem>>, vector<1x8x4xf32>
    %51 = vector.shape_cast %50 : vector<1x8x4xf32> to vector<8x4xf32>
    %cst_27 = arith.constant dense<0.000000e+00> : vector<8x256xf32>
    %52 = tpu.matmul %51, %49, %cst_27 {dimension_numbers = #tpu.dot_dimension_numbers<[1], [0], [0], [1], [0, 0, 1, 1], [], []>} : vector<8x4xf32>, vector<4x256xf32>, vector<8x256xf32> -> vector<8x256xf32>
    %53 = arith.addf %43, %52 : vector<8x256xf32>
    %c0_28 = arith.constant 0 : index
    %c0_29 = arith.constant 0 : index
    %c32 = arith.constant 32 : index
    %54 = vector.load %arg1[%c0_28, %c0_29, %c32] : memref<1x4x320xf32, #tpu.memory_space<vmem>>, vector<1x4x256xf32>
    %55 = vector.shape_cast %54 : vector<1x4x256xf32> to vector<4x256xf32>
    %c4 = arith.constant 4 : index
    %c0_30 = arith.constant 0 : index
    %c0_31 = arith.constant 0 : index
    %56 = vector.load %arg2[%c4, %c0_30, %c0_31] : memref<9x8x4xf32, #tpu.memory_space<vmem>>, vector<1x8x4xf32>
    %57 = vector.shape_cast %56 : vector<1x8x4xf32> to vector<8x4xf32>
    %cst_32 = arith.constant dense<0.000000e+00> : vector<8x256xf32>
    %58 = tpu.matmul %57, %55, %cst_32 {dimension_numbers = #tpu.dot_dimension_numbers<[1], [0], [0], [1], [0, 0, 1, 1], [], []>} : vector<8x4xf32>, vector<4x256xf32>, vector<8x256xf32> -> vector<8x256xf32>
    %59 = arith.addf %53, %58 : vector<8x256xf32>
    %c0_33 = arith.constant 0 : index
    %c0_34 = arith.constant 0 : index
    %c33 = arith.constant 33 : index
    %60 = vector.load %arg1[%c0_33, %c0_34, %c33] : memref<1x4x320xf32, #tpu.memory_space<vmem>>, vector<1x4x256xf32>
    %61 = vector.shape_cast %60 : vector<1x4x256xf32> to vector<4x256xf32>
    %c15_i32_35 = arith.constant 15 : i32
    %62 = vector.broadcast %c15_i32_35 : i32 to vector<4x256xi32>
    %63 = arith.cmpi eq, %16, %62 : vector<4x256xi32>
    %cst_36 = arith.constant 0.000000e+00 : f32
    %64 = vector.broadcast %cst_36 : f32 to vector<4x256xf32>
    %65 = arith.select %63, %64, %61 : vector<4x256xi1>, vector<4x256xf32>
    %c5 = arith.constant 5 : index
    %c0_37 = arith.constant 0 : index
    %c0_38 = arith.constant 0 : index
    %66 = vector.load %arg2[%c5, %c0_37, %c0_38] : memref<9x8x4xf32, #tpu.memory_space<vmem>>, vector<1x8x4xf32>
    %67 = vector.shape_cast %66 : vector<1x8x4xf32> to vector<8x4xf32>
    %cst_39 = arith.constant dense<0.000000e+00> : vector<8x256xf32>
    %68 = tpu.matmul %67, %65, %cst_39 {dimension_numbers = #tpu.dot_dimension_numbers<[1], [0], [0], [1], [0, 0, 1, 1], [], []>} : vector<8x4xf32>, vector<4x256xf32>, vector<8x256xf32> -> vector<8x256xf32>
    %69 = arith.addf %59, %68 : vector<8x256xf32>
    %c0_40 = arith.constant 0 : index
    %c0_41 = arith.constant 0 : index
    %c47 = arith.constant 47 : index
    %70 = vector.load %arg1[%c0_40, %c0_41, %c47] : memref<1x4x320xf32, #tpu.memory_space<vmem>>, vector<1x4x256xf32>
    %71 = vector.shape_cast %70 : vector<1x4x256xf32> to vector<4x256xf32>
    %c0_i32_42 = arith.constant 0 : i32
    %72 = vector.broadcast %c0_i32_42 : i32 to vector<4x256xi32>
    %73 = arith.cmpi eq, %16, %72 : vector<4x256xi32>
    %cst_43 = arith.constant 0.000000e+00 : f32
    %74 = vector.broadcast %cst_43 : f32 to vector<4x256xf32>
    %75 = arith.select %73, %74, %71 : vector<4x256xi1>, vector<4x256xf32>
    %c6 = arith.constant 6 : index
    %c0_44 = arith.constant 0 : index
    %c0_45 = arith.constant 0 : index
    %76 = vector.load %arg2[%c6, %c0_44, %c0_45] : memref<9x8x4xf32, #tpu.memory_space<vmem>>, vector<1x8x4xf32>
    %77 = vector.shape_cast %76 : vector<1x8x4xf32> to vector<8x4xf32>
    %cst_46 = arith.constant dense<0.000000e+00> : vector<8x256xf32>
    %78 = tpu.matmul %77, %75, %cst_46 {dimension_numbers = #tpu.dot_dimension_numbers<[1], [0], [0], [1], [0, 0, 1, 1], [], []>} : vector<8x4xf32>, vector<4x256xf32>, vector<8x256xf32> -> vector<8x256xf32>
    %79 = arith.addf %69, %78 : vector<8x256xf32>
    %c0_47 = arith.constant 0 : index
    %c0_48 = arith.constant 0 : index
    %c48 = arith.constant 48 : index
    %80 = vector.load %arg1[%c0_47, %c0_48, %c48] : memref<1x4x320xf32, #tpu.memory_space<vmem>>, vector<1x4x256xf32>
    %81 = vector.shape_cast %80 : vector<1x4x256xf32> to vector<4x256xf32>
    %c7 = arith.constant 7 : index
    %c0_49 = arith.constant 0 : index
    %c0_50 = arith.constant 0 : index
    %82 = vector.load %arg2[%c7, %c0_49, %c0_50] : memref<9x8x4xf32, #tpu.memory_space<vmem>>, vector<1x8x4xf32>
    %83 = vector.shape_cast %82 : vector<1x8x4xf32> to vector<8x4xf32>
    %cst_51 = arith.constant dense<0.000000e+00> : vector<8x256xf32>
    %84 = tpu.matmul %83, %81, %cst_51 {dimension_numbers = #tpu.dot_dimension_numbers<[1], [0], [0], [1], [0, 0, 1, 1], [], []>} : vector<8x4xf32>, vector<4x256xf32>, vector<8x256xf32> -> vector<8x256xf32>
    %85 = arith.addf %79, %84 : vector<8x256xf32>
    %c0_52 = arith.constant 0 : index
    %c0_53 = arith.constant 0 : index
    %c49 = arith.constant 49 : index
    %86 = vector.load %arg1[%c0_52, %c0_53, %c49] : memref<1x4x320xf32, #tpu.memory_space<vmem>>, vector<1x4x256xf32>
    %87 = vector.shape_cast %86 : vector<1x4x256xf32> to vector<4x256xf32>
    %c15_i32_54 = arith.constant 15 : i32
    %88 = vector.broadcast %c15_i32_54 : i32 to vector<4x256xi32>
    %89 = arith.cmpi eq, %16, %88 : vector<4x256xi32>
    %cst_55 = arith.constant 0.000000e+00 : f32
    %90 = vector.broadcast %cst_55 : f32 to vector<4x256xf32>
    %91 = arith.select %89, %90, %87 : vector<4x256xi1>, vector<4x256xf32>
    %c8 = arith.constant 8 : index
    %c0_56 = arith.constant 0 : index
    %c0_57 = arith.constant 0 : index
    %92 = vector.load %arg2[%c8, %c0_56, %c0_57] : memref<9x8x4xf32, #tpu.memory_space<vmem>>, vector<1x8x4xf32>
    %93 = vector.shape_cast %92 : vector<1x8x4xf32> to vector<8x4xf32>
    %cst_58 = arith.constant dense<0.000000e+00> : vector<8x256xf32>
    %94 = tpu.matmul %93, %91, %cst_58 {dimension_numbers = #tpu.dot_dimension_numbers<[1], [0], [0], [1], [0, 0, 1, 1], [], []>} : vector<8x4xf32>, vector<4x256xf32>, vector<8x256xf32> -> vector<8x256xf32>
    %95 = arith.addf %85, %94 : vector<8x256xf32>
    %c0_59 = arith.constant 0 : index
    %c0_60 = arith.constant 0 : index
    %96 = vector.load %arg3[%c0_59, %c0_60] : memref<8x1xf32, #tpu.memory_space<vmem>>, vector<8x1xf32>
    %97 = vector.broadcast %96 : vector<8x1xf32> to vector<8x256xf32>
    %98 = arith.addf %95, %97 : vector<8x256xf32>
    %c0_61 = arith.constant 0 : index
    %c0_62 = arith.constant 0 : index
    %c0_63 = arith.constant 0 : index
    %99 = vector.load %arg4[%c0_61, %c0_62, %c0_63] : memref<1x8x256xf32, #tpu.memory_space<vmem>>, vector<1x8x256xf32>
    %100 = vector.shape_cast %99 : vector<1x8x256xf32> to vector<8x256xf32>
    %101 = vector.shape_cast %98 : vector<8x256xf32> to vector<1x8x256xf32>
    tpu.vector_store %arg4[%c0_61, %c0_62, %c0_63], %101 {strides = array<i32>} : memref<1x8x256xf32, #tpu.memory_space<vmem>>, vector<1x8x256xf32>,
    %cst_64 = arith.constant dense<0.000000e+00> : vector<8xf32>
    %102 = vector.multi_reduction <add>, %98, %cst_64 [1] : vector<8x256xf32> to vector<8xf32>
    %103 = vector.shape_cast %102 : vector<8xf32> to vector<8x1xf32>
    %c0_65 = arith.constant 0 : index
    %c0_66 = arith.constant 0 : index
    %c0_67 = arith.constant 0 : index
    %104 = vector.load %arg5[%c0_65, %c0_66, %c0_67] : memref<1x8x1xf32, #tpu.memory_space<vmem>>, vector<1x8x1xf32>
    %105 = vector.shape_cast %104 : vector<1x8x1xf32> to vector<8x1xf32>
    %106 = vector.shape_cast %103 : vector<8x1xf32> to vector<1x8x1xf32>
    tpu.vector_store %arg5[%c0_65, %c0_66, %c0_67], %106 {strides = array<i32>} : memref<1x8x1xf32, #tpu.memory_space<vmem>>, vector<1x8x1xf32>,
    %107 = arith.mulf %98, %98 : vector<8x256xf32>
    %cst_68 = arith.constant dense<0.000000e+00> : vector<8xf32>
    %108 = vector.multi_reduction <add>, %107, %cst_68 [1] : vector<8x256xf32> to vector<8xf32>
    %109 = vector.shape_cast %108 : vector<8xf32> to vector<8x1xf32>
    %c0_69 = arith.constant 0 : index
    %c0_70 = arith.constant 0 : index
    %c0_71 = arith.constant 0 : index
    %110 = vector.load %arg6[%c0_69, %c0_70, %c0_71] : memref<1x8x1xf32, #tpu.memory_space<vmem>>, vector<1x8x1xf32>
    %111 = vector.shape_cast %110 : vector<1x8x1xf32> to vector<8x1xf32>
    %112 = vector.shape_cast %109 : vector<8x1xf32> to vector<1x8x1xf32>
    tpu.vector_store %arg6[%c0_69, %c0_70, %c0_71], %112 {strides = array<i32>} : memref<1x8x1xf32, #tpu.memory_space<vmem>>, vector<1x8x1xf32>,
    return
  }
  func.func @transform_0(%arg0: i32) -> (i32, i32, i32) {
    %c0_i32 = arith.constant 0 : i32
    %c0_i32_0 = arith.constant 0 : i32
    %c0_i32_1 = arith.constant 0 : i32
    return %arg0, %c0_i32, %c0_i32_0 : i32, i32, i32
  }
  func.func @transform_1(%arg0: i32) -> (i32, i32, i32) {
    %c0_i32 = arith.constant 0 : i32
    %c0_i32_0 = arith.constant 0 : i32
    %c0_i32_1 = arith.constant 0 : i32
    %c0_i32_2 = arith.constant 0 : i32
    return %c0_i32, %c0_i32_0, %c0_i32_1 : i32, i32, i32
  }
  func.func @transform_2(%arg0: i32) -> (i32, i32) {
    %c0_i32 = arith.constant 0 : i32
    %c0_i32_0 = arith.constant 0 : i32
    %c0_i32_1 = arith.constant 0 : i32
    return %c0_i32, %c0_i32_0 : i32, i32
  }
  func.func @transform_3(%arg0: i32) -> (i32, i32, i32) {
    %c0_i32 = arith.constant 0 : i32
    %c0_i32_0 = arith.constant 0 : i32
    %c0_i32_1 = arith.constant 0 : i32
    return %arg0, %c0_i32, %c0_i32_0 : i32, i32, i32
  }
  func.func @transform_4(%arg0: i32) -> (i32, i32, i32) {
    %c0_i32 = arith.constant 0 : i32
    %c0_i32_0 = arith.constant 0 : i32
    %c0_i32_1 = arith.constant 0 : i32
    return %arg0, %c0_i32, %c0_i32_0 : i32, i32, i32
  }
  func.func @transform_5(%arg0: i32) -> (i32, i32, i32) {
    %c0_i32 = arith.constant 0 : i32
    %c0_i32_0 = arith.constant 0 : i32
    %c0_i32_1 = arith.constant 0 : i32
    return %arg0, %c0_i32, %c0_i32_0 : i32, i32, i32
  }
}

module attributes {stable_mosaic.version = 11 : i64} {
  func.func @_bn_relu_kernel(%arg0: i32, %arg1: memref<1x8x256xf32, #tpu.memory_space<vmem>>, %arg2: memref<8x1xf32, #tpu.memory_space<vmem>>, %arg3: memref<8x1xf32, #tpu.memory_space<vmem>>, %arg4: memref<1x8x256xf32, #tpu.memory_space<vmem>>) attributes {dimension_semantics = [#tpu.dimension_semantics<parallel>], iteration_bounds = array<i64: 2>, scalar_prefetch = 0 : i64, scratch_operands = 0 : i64, tpu.core_type = #tpu.core_type<tc>, window_params = [{transform_indices = @transform_0, window_bounds = array<i64: 1, 8, 256>}, {pipeline_mode = #tpu.pipeline_mode<synchronous>, transform_indices = @transform_1, window_bounds = array<i64: 8, 1>}, {pipeline_mode = #tpu.pipeline_mode<synchronous>, transform_indices = @transform_2, window_bounds = array<i64: 8, 1>}, {transform_indices = @transform_3, window_bounds = array<i64: 1, 8, 256>}]} {
    %c0 = arith.constant 0 : index
    %c0_0 = arith.constant 0 : index
    %c0_1 = arith.constant 0 : index
    %0 = vector.load %arg1[%c0, %c0_0, %c0_1] : memref<1x8x256xf32, #tpu.memory_space<vmem>>, vector<1x8x256xf32>
    %1 = vector.shape_cast %0 : vector<1x8x256xf32> to vector<8x256xf32>
    %c0_2 = arith.constant 0 : index
    %c0_3 = arith.constant 0 : index
    %2 = vector.load %arg2[%c0_2, %c0_3] : memref<8x1xf32, #tpu.memory_space<vmem>>, vector<8x1xf32>
    %3 = vector.broadcast %2 : vector<8x1xf32> to vector<8x256xf32>
    %4 = arith.mulf %1, %3 : vector<8x256xf32>
    %c0_4 = arith.constant 0 : index
    %c0_5 = arith.constant 0 : index
    %5 = vector.load %arg3[%c0_4, %c0_5] : memref<8x1xf32, #tpu.memory_space<vmem>>, vector<8x1xf32>
    %6 = vector.broadcast %5 : vector<8x1xf32> to vector<8x256xf32>
    %7 = arith.addf %4, %6 : vector<8x256xf32>
    %cst = arith.constant 0.000000e+00 : f32
    %8 = vector.broadcast %cst : f32 to vector<8x256xf32>
    %9 = arith.maximumf %7, %8 : vector<8x256xf32>
    %c0_6 = arith.constant 0 : index
    %c0_7 = arith.constant 0 : index
    %c0_8 = arith.constant 0 : index
    %10 = vector.load %arg4[%c0_6, %c0_7, %c0_8] : memref<1x8x256xf32, #tpu.memory_space<vmem>>, vector<1x8x256xf32>
    %11 = vector.shape_cast %10 : vector<1x8x256xf32> to vector<8x256xf32>
    %12 = vector.shape_cast %9 : vector<8x256xf32> to vector<1x8x256xf32>
    tpu.vector_store %arg4[%c0_6, %c0_7, %c0_8], %12 {strides = array<i32>} : memref<1x8x256xf32, #tpu.memory_space<vmem>>, vector<1x8x256xf32>,
    return
  }
  func.func @transform_0(%arg0: i32) -> (i32, i32, i32) {
    %c0_i32 = arith.constant 0 : i32
    %c0_i32_0 = arith.constant 0 : i32
    %c0_i32_1 = arith.constant 0 : i32
    return %arg0, %c0_i32, %c0_i32_0 : i32, i32, i32
  }
  func.func @transform_1(%arg0: i32) -> (i32, i32) {
    %c0_i32 = arith.constant 0 : i32
    %c0_i32_0 = arith.constant 0 : i32
    %c0_i32_1 = arith.constant 0 : i32
    return %c0_i32, %c0_i32_0 : i32, i32
  }
  func.func @transform_2(%arg0: i32) -> (i32, i32) {
    %c0_i32 = arith.constant 0 : i32
    %c0_i32_0 = arith.constant 0 : i32
    %c0_i32_1 = arith.constant 0 : i32
    return %c0_i32, %c0_i32_0 : i32, i32
  }
  func.func @transform_3(%arg0: i32) -> (i32, i32, i32) {
    %c0_i32 = arith.constant 0 : i32
    %c0_i32_0 = arith.constant 0 : i32
    %c0_i32_1 = arith.constant 0 : i32
    return %arg0, %c0_i32, %c0_i32_0 : i32, i32, i32
  }
}

module attributes {stable_mosaic.version = 11 : i64} {
  func.func @_conv3x3_stats_kernel(%arg0: i32, %arg1: memref<1x8x320xf32, #tpu.memory_space<vmem>>, %arg2: memref<9x8x8xf32, #tpu.memory_space<vmem>>, %arg3: memref<8x1xf32, #tpu.memory_space<vmem>>, %arg4: memref<1x8x256xf32, #tpu.memory_space<vmem>>, %arg5: memref<1x8x1xf32, #tpu.memory_space<vmem>>, %arg6: memref<1x8x1xf32, #tpu.memory_space<vmem>>) attributes {dimension_semantics = [#tpu.dimension_semantics<parallel>], iteration_bounds = array<i64: 2>, scalar_prefetch = 0 : i64, scratch_operands = 0 : i64, tpu.core_type = #tpu.core_type<tc>, window_params = [{transform_indices = @transform_0, window_bounds = array<i64: 1, 8, 320>}, {pipeline_mode = #tpu.pipeline_mode<synchronous>, transform_indices = @transform_1, window_bounds = array<i64: 9, 8, 8>}, {pipeline_mode = #tpu.pipeline_mode<synchronous>, transform_indices = @transform_2, window_bounds = array<i64: 8, 1>}, {transform_indices = @transform_3, window_bounds = array<i64: 1, 8, 256>}, {transform_indices = @transform_4, window_bounds = array<i64: 1, 8, 1>}, {transform_indices = @transform_5, window_bounds = array<i64: 1, 8, 1>}]} {
    %0 = tpu.iota {dimensions = array<i32: 1>} : vector<8x256xi32>
    %c16_i32 = arith.constant 16 : i32
    %c0_i32 = arith.constant 0 : i32
    %1 = arith.cmpi eq, %c16_i32, %c0_i32 : i32
    %c1_i32 = arith.constant 1 : i32
    %2 = arith.select %1, %c1_i32, %c16_i32 : i32
    %3 = vector.broadcast %2 : i32 to vector<8x256xi32>
    %4 = arith.remsi %0, %3 : vector<8x256xi32>
    %c0_i32_0 = arith.constant 0 : i32
    %5 = vector.broadcast %c0_i32_0 : i32 to vector<8x256xi32>
    %6 = arith.cmpi ne, %4, %5 : vector<8x256xi32>
    %c0_i32_1 = arith.constant 0 : i32
    %7 = vector.broadcast %c0_i32_1 : i32 to vector<8x256xi32>
    %8 = arith.cmpi slt, %4, %7 : vector<8x256xi32>
    %c0_i32_2 = arith.constant 0 : i32
    %9 = arith.cmpi slt, %2, %c0_i32_2 : i32
    %10 = vector.broadcast %9 : i1 to vector<8x256xi1>
    %11 = vector.broadcast %10 : vector<8x256xi1> to vector<8x256xi1>
    %12 = arith.xori %8, %11 : vector<8x256xi1>
    %13 = arith.andi %12, %6 : vector<8x256xi1>
    %14 = vector.broadcast %2 : i32 to vector<8x256xi32>
    %15 = arith.addi %4, %14 : vector<8x256xi32>
    %16 = arith.select %13, %15, %4 : vector<8x256xi1>, vector<8x256xi32>
    %cst = arith.constant 0.000000e+00 : f32
    %17 = vector.broadcast %cst : f32 to vector<8x256xf32>
    %c0 = arith.constant 0 : index
    %c0_3 = arith.constant 0 : index
    %c15 = arith.constant 15 : index
    %18 = vector.load %arg1[%c0, %c0_3, %c15] : memref<1x8x320xf32, #tpu.memory_space<vmem>>, vector<1x8x256xf32>
    %19 = vector.shape_cast %18 : vector<1x8x256xf32> to vector<8x256xf32>
    %c0_i32_4 = arith.constant 0 : i32
    %20 = vector.broadcast %c0_i32_4 : i32 to vector<8x256xi32>
    %21 = arith.cmpi eq, %16, %20 : vector<8x256xi32>
    %cst_5 = arith.constant 0.000000e+00 : f32
    %22 = vector.broadcast %cst_5 : f32 to vector<8x256xf32>
    %23 = arith.select %21, %22, %19 : vector<8x256xi1>, vector<8x256xf32>
    %c0_6 = arith.constant 0 : index
    %c0_7 = arith.constant 0 : index
    %c0_8 = arith.constant 0 : index
    %24 = vector.load %arg2[%c0_6, %c0_7, %c0_8] : memref<9x8x8xf32, #tpu.memory_space<vmem>>, vector<1x8x8xf32>
    %25 = vector.shape_cast %24 : vector<1x8x8xf32> to vector<8x8xf32>
    %cst_9 = arith.constant dense<0.000000e+00> : vector<8x256xf32>
    %26 = tpu.matmul %25, %23, %cst_9 {dimension_numbers = #tpu.dot_dimension_numbers<[1], [0], [0], [1], [0, 0, 1, 1], [], []>} : vector<8x8xf32>, vector<8x256xf32>, vector<8x256xf32> -> vector<8x256xf32>
    %27 = arith.addf %17, %26 : vector<8x256xf32>
    %c0_10 = arith.constant 0 : index
    %c0_11 = arith.constant 0 : index
    %c16 = arith.constant 16 : index
    %28 = vector.load %arg1[%c0_10, %c0_11, %c16] : memref<1x8x320xf32, #tpu.memory_space<vmem>>, vector<1x8x256xf32>
    %29 = vector.shape_cast %28 : vector<1x8x256xf32> to vector<8x256xf32>
    %c1 = arith.constant 1 : index
    %c0_12 = arith.constant 0 : index
    %c0_13 = arith.constant 0 : index
    %30 = vector.load %arg2[%c1, %c0_12, %c0_13] : memref<9x8x8xf32, #tpu.memory_space<vmem>>, vector<1x8x8xf32>
    %31 = vector.shape_cast %30 : vector<1x8x8xf32> to vector<8x8xf32>
    %cst_14 = arith.constant dense<0.000000e+00> : vector<8x256xf32>
    %32 = tpu.matmul %31, %29, %cst_14 {dimension_numbers = #tpu.dot_dimension_numbers<[1], [0], [0], [1], [0, 0, 1, 1], [], []>} : vector<8x8xf32>, vector<8x256xf32>, vector<8x256xf32> -> vector<8x256xf32>
    %33 = arith.addf %27, %32 : vector<8x256xf32>
    %c0_15 = arith.constant 0 : index
    %c0_16 = arith.constant 0 : index
    %c17 = arith.constant 17 : index
    %34 = vector.load %arg1[%c0_15, %c0_16, %c17] : memref<1x8x320xf32, #tpu.memory_space<vmem>>, vector<1x8x256xf32>
    %35 = vector.shape_cast %34 : vector<1x8x256xf32> to vector<8x256xf32>
    %c15_i32 = arith.constant 15 : i32
    %36 = vector.broadcast %c15_i32 : i32 to vector<8x256xi32>
    %37 = arith.cmpi eq, %16, %36 : vector<8x256xi32>
    %cst_17 = arith.constant 0.000000e+00 : f32
    %38 = vector.broadcast %cst_17 : f32 to vector<8x256xf32>
    %39 = arith.select %37, %38, %35 : vector<8x256xi1>, vector<8x256xf32>
    %c2 = arith.constant 2 : index
    %c0_18 = arith.constant 0 : index
    %c0_19 = arith.constant 0 : index
    %40 = vector.load %arg2[%c2, %c0_18, %c0_19] : memref<9x8x8xf32, #tpu.memory_space<vmem>>, vector<1x8x8xf32>
    %41 = vector.shape_cast %40 : vector<1x8x8xf32> to vector<8x8xf32>
    %cst_20 = arith.constant dense<0.000000e+00> : vector<8x256xf32>
    %42 = tpu.matmul %41, %39, %cst_20 {dimension_numbers = #tpu.dot_dimension_numbers<[1], [0], [0], [1], [0, 0, 1, 1], [], []>} : vector<8x8xf32>, vector<8x256xf32>, vector<8x256xf32> -> vector<8x256xf32>
    %43 = arith.addf %33, %42 : vector<8x256xf32>
    %c0_21 = arith.constant 0 : index
    %c0_22 = arith.constant 0 : index
    %c31 = arith.constant 31 : index
    %44 = vector.load %arg1[%c0_21, %c0_22, %c31] : memref<1x8x320xf32, #tpu.memory_space<vmem>>, vector<1x8x256xf32>
    %45 = vector.shape_cast %44 : vector<1x8x256xf32> to vector<8x256xf32>
    %c0_i32_23 = arith.constant 0 : i32
    %46 = vector.broadcast %c0_i32_23 : i32 to vector<8x256xi32>
    %47 = arith.cmpi eq, %16, %46 : vector<8x256xi32>
    %cst_24 = arith.constant 0.000000e+00 : f32
    %48 = vector.broadcast %cst_24 : f32 to vector<8x256xf32>
    %49 = arith.select %47, %48, %45 : vector<8x256xi1>, vector<8x256xf32>
    %c3 = arith.constant 3 : index
    %c0_25 = arith.constant 0 : index
    %c0_26 = arith.constant 0 : index
    %50 = vector.load %arg2[%c3, %c0_25, %c0_26] : memref<9x8x8xf32, #tpu.memory_space<vmem>>, vector<1x8x8xf32>
    %51 = vector.shape_cast %50 : vector<1x8x8xf32> to vector<8x8xf32>
    %cst_27 = arith.constant dense<0.000000e+00> : vector<8x256xf32>
    %52 = tpu.matmul %51, %49, %cst_27 {dimension_numbers = #tpu.dot_dimension_numbers<[1], [0], [0], [1], [0, 0, 1, 1], [], []>} : vector<8x8xf32>, vector<8x256xf32>, vector<8x256xf32> -> vector<8x256xf32>
    %53 = arith.addf %43, %52 : vector<8x256xf32>
    %c0_28 = arith.constant 0 : index
    %c0_29 = arith.constant 0 : index
    %c32 = arith.constant 32 : index
    %54 = vector.load %arg1[%c0_28, %c0_29, %c32] : memref<1x8x320xf32, #tpu.memory_space<vmem>>, vector<1x8x256xf32>
    %55 = vector.shape_cast %54 : vector<1x8x256xf32> to vector<8x256xf32>
    %c4 = arith.constant 4 : index
    %c0_30 = arith.constant 0 : index
    %c0_31 = arith.constant 0 : index
    %56 = vector.load %arg2[%c4, %c0_30, %c0_31] : memref<9x8x8xf32, #tpu.memory_space<vmem>>, vector<1x8x8xf32>
    %57 = vector.shape_cast %56 : vector<1x8x8xf32> to vector<8x8xf32>
    %cst_32 = arith.constant dense<0.000000e+00> : vector<8x256xf32>
    %58 = tpu.matmul %57, %55, %cst_32 {dimension_numbers = #tpu.dot_dimension_numbers<[1], [0], [0], [1], [0, 0, 1, 1], [], []>} : vector<8x8xf32>, vector<8x256xf32>, vector<8x256xf32> -> vector<8x256xf32>
    %59 = arith.addf %53, %58 : vector<8x256xf32>
    %c0_33 = arith.constant 0 : index
    %c0_34 = arith.constant 0 : index
    %c33 = arith.constant 33 : index
    %60 = vector.load %arg1[%c0_33, %c0_34, %c33] : memref<1x8x320xf32, #tpu.memory_space<vmem>>, vector<1x8x256xf32>
    %61 = vector.shape_cast %60 : vector<1x8x256xf32> to vector<8x256xf32>
    %c15_i32_35 = arith.constant 15 : i32
    %62 = vector.broadcast %c15_i32_35 : i32 to vector<8x256xi32>
    %63 = arith.cmpi eq, %16, %62 : vector<8x256xi32>
    %cst_36 = arith.constant 0.000000e+00 : f32
    %64 = vector.broadcast %cst_36 : f32 to vector<8x256xf32>
    %65 = arith.select %63, %64, %61 : vector<8x256xi1>, vector<8x256xf32>
    %c5 = arith.constant 5 : index
    %c0_37 = arith.constant 0 : index
    %c0_38 = arith.constant 0 : index
    %66 = vector.load %arg2[%c5, %c0_37, %c0_38] : memref<9x8x8xf32, #tpu.memory_space<vmem>>, vector<1x8x8xf32>
    %67 = vector.shape_cast %66 : vector<1x8x8xf32> to vector<8x8xf32>
    %cst_39 = arith.constant dense<0.000000e+00> : vector<8x256xf32>
    %68 = tpu.matmul %67, %65, %cst_39 {dimension_numbers = #tpu.dot_dimension_numbers<[1], [0], [0], [1], [0, 0, 1, 1], [], []>} : vector<8x8xf32>, vector<8x256xf32>, vector<8x256xf32> -> vector<8x256xf32>
    %69 = arith.addf %59, %68 : vector<8x256xf32>
    %c0_40 = arith.constant 0 : index
    %c0_41 = arith.constant 0 : index
    %c47 = arith.constant 47 : index
    %70 = vector.load %arg1[%c0_40, %c0_41, %c47] : memref<1x8x320xf32, #tpu.memory_space<vmem>>, vector<1x8x256xf32>
    %71 = vector.shape_cast %70 : vector<1x8x256xf32> to vector<8x256xf32>
    %c0_i32_42 = arith.constant 0 : i32
    %72 = vector.broadcast %c0_i32_42 : i32 to vector<8x256xi32>
    %73 = arith.cmpi eq, %16, %72 : vector<8x256xi32>
    %cst_43 = arith.constant 0.000000e+00 : f32
    %74 = vector.broadcast %cst_43 : f32 to vector<8x256xf32>
    %75 = arith.select %73, %74, %71 : vector<8x256xi1>, vector<8x256xf32>
    %c6 = arith.constant 6 : index
    %c0_44 = arith.constant 0 : index
    %c0_45 = arith.constant 0 : index
    %76 = vector.load %arg2[%c6, %c0_44, %c0_45] : memref<9x8x8xf32, #tpu.memory_space<vmem>>, vector<1x8x8xf32>
    %77 = vector.shape_cast %76 : vector<1x8x8xf32> to vector<8x8xf32>
    %cst_46 = arith.constant dense<0.000000e+00> : vector<8x256xf32>
    %78 = tpu.matmul %77, %75, %cst_46 {dimension_numbers = #tpu.dot_dimension_numbers<[1], [0], [0], [1], [0, 0, 1, 1], [], []>} : vector<8x8xf32>, vector<8x256xf32>, vector<8x256xf32> -> vector<8x256xf32>
    %79 = arith.addf %69, %78 : vector<8x256xf32>
    %c0_47 = arith.constant 0 : index
    %c0_48 = arith.constant 0 : index
    %c48 = arith.constant 48 : index
    %80 = vector.load %arg1[%c0_47, %c0_48, %c48] : memref<1x8x320xf32, #tpu.memory_space<vmem>>, vector<1x8x256xf32>
    %81 = vector.shape_cast %80 : vector<1x8x256xf32> to vector<8x256xf32>
    %c7 = arith.constant 7 : index
    %c0_49 = arith.constant 0 : index
    %c0_50 = arith.constant 0 : index
    %82 = vector.load %arg2[%c7, %c0_49, %c0_50] : memref<9x8x8xf32, #tpu.memory_space<vmem>>, vector<1x8x8xf32>
    %83 = vector.shape_cast %82 : vector<1x8x8xf32> to vector<8x8xf32>
    %cst_51 = arith.constant dense<0.000000e+00> : vector<8x256xf32>
    %84 = tpu.matmul %83, %81, %cst_51 {dimension_numbers = #tpu.dot_dimension_numbers<[1], [0], [0], [1], [0, 0, 1, 1], [], []>} : vector<8x8xf32>, vector<8x256xf32>, vector<8x256xf32> -> vector<8x256xf32>
    %85 = arith.addf %79, %84 : vector<8x256xf32>
    %c0_52 = arith.constant 0 : index
    %c0_53 = arith.constant 0 : index
    %c49 = arith.constant 49 : index
    %86 = vector.load %arg1[%c0_52, %c0_53, %c49] : memref<1x8x320xf32, #tpu.memory_space<vmem>>, vector<1x8x256xf32>
    %87 = vector.shape_cast %86 : vector<1x8x256xf32> to vector<8x256xf32>
    %c15_i32_54 = arith.constant 15 : i32
    %88 = vector.broadcast %c15_i32_54 : i32 to vector<8x256xi32>
    %89 = arith.cmpi eq, %16, %88 : vector<8x256xi32>
    %cst_55 = arith.constant 0.000000e+00 : f32
    %90 = vector.broadcast %cst_55 : f32 to vector<8x256xf32>
    %91 = arith.select %89, %90, %87 : vector<8x256xi1>, vector<8x256xf32>
    %c8 = arith.constant 8 : index
    %c0_56 = arith.constant 0 : index
    %c0_57 = arith.constant 0 : index
    %92 = vector.load %arg2[%c8, %c0_56, %c0_57] : memref<9x8x8xf32, #tpu.memory_space<vmem>>, vector<1x8x8xf32>
    %93 = vector.shape_cast %92 : vector<1x8x8xf32> to vector<8x8xf32>
    %cst_58 = arith.constant dense<0.000000e+00> : vector<8x256xf32>
    %94 = tpu.matmul %93, %91, %cst_58 {dimension_numbers = #tpu.dot_dimension_numbers<[1], [0], [0], [1], [0, 0, 1, 1], [], []>} : vector<8x8xf32>, vector<8x256xf32>, vector<8x256xf32> -> vector<8x256xf32>
    %95 = arith.addf %85, %94 : vector<8x256xf32>
    %c0_59 = arith.constant 0 : index
    %c0_60 = arith.constant 0 : index
    %96 = vector.load %arg3[%c0_59, %c0_60] : memref<8x1xf32, #tpu.memory_space<vmem>>, vector<8x1xf32>
    %97 = vector.broadcast %96 : vector<8x1xf32> to vector<8x256xf32>
    %98 = arith.addf %95, %97 : vector<8x256xf32>
    %c0_61 = arith.constant 0 : index
    %c0_62 = arith.constant 0 : index
    %c0_63 = arith.constant 0 : index
    %99 = vector.load %arg4[%c0_61, %c0_62, %c0_63] : memref<1x8x256xf32, #tpu.memory_space<vmem>>, vector<1x8x256xf32>
    %100 = vector.shape_cast %99 : vector<1x8x256xf32> to vector<8x256xf32>
    %101 = vector.shape_cast %98 : vector<8x256xf32> to vector<1x8x256xf32>
    tpu.vector_store %arg4[%c0_61, %c0_62, %c0_63], %101 {strides = array<i32>} : memref<1x8x256xf32, #tpu.memory_space<vmem>>, vector<1x8x256xf32>,
    %cst_64 = arith.constant dense<0.000000e+00> : vector<8xf32>
    %102 = vector.multi_reduction <add>, %98, %cst_64 [1] : vector<8x256xf32> to vector<8xf32>
    %103 = vector.shape_cast %102 : vector<8xf32> to vector<8x1xf32>
    %c0_65 = arith.constant 0 : index
    %c0_66 = arith.constant 0 : index
    %c0_67 = arith.constant 0 : index
    %104 = vector.load %arg5[%c0_65, %c0_66, %c0_67] : memref<1x8x1xf32, #tpu.memory_space<vmem>>, vector<1x8x1xf32>
    %105 = vector.shape_cast %104 : vector<1x8x1xf32> to vector<8x1xf32>
    %106 = vector.shape_cast %103 : vector<8x1xf32> to vector<1x8x1xf32>
    tpu.vector_store %arg5[%c0_65, %c0_66, %c0_67], %106 {strides = array<i32>} : memref<1x8x1xf32, #tpu.memory_space<vmem>>, vector<1x8x1xf32>,
    %107 = arith.mulf %98, %98 : vector<8x256xf32>
    %cst_68 = arith.constant dense<0.000000e+00> : vector<8xf32>
    %108 = vector.multi_reduction <add>, %107, %cst_68 [1] : vector<8x256xf32> to vector<8xf32>
    %109 = vector.shape_cast %108 : vector<8xf32> to vector<8x1xf32>
    %c0_69 = arith.constant 0 : index
    %c0_70 = arith.constant 0 : index
    %c0_71 = arith.constant 0 : index
    %110 = vector.load %arg6[%c0_69, %c0_70, %c0_71] : memref<1x8x1xf32, #tpu.memory_space<vmem>>, vector<1x8x1xf32>
    %111 = vector.shape_cast %110 : vector<1x8x1xf32> to vector<8x1xf32>
    %112 = vector.shape_cast %109 : vector<8x1xf32> to vector<1x8x1xf32>
    tpu.vector_store %arg6[%c0_69, %c0_70, %c0_71], %112 {strides = array<i32>} : memref<1x8x1xf32, #tpu.memory_space<vmem>>, vector<1x8x1xf32>,
    return
  }
  func.func @transform_0(%arg0: i32) -> (i32, i32, i32) {
    %c0_i32 = arith.constant 0 : i32
    %c0_i32_0 = arith.constant 0 : i32
    %c0_i32_1 = arith.constant 0 : i32
    return %arg0, %c0_i32, %c0_i32_0 : i32, i32, i32
  }
  func.func @transform_1(%arg0: i32) -> (i32, i32, i32) {
    %c0_i32 = arith.constant 0 : i32
    %c0_i32_0 = arith.constant 0 : i32
    %c0_i32_1 = arith.constant 0 : i32
    %c0_i32_2 = arith.constant 0 : i32
    return %c0_i32, %c0_i32_0, %c0_i32_1 : i32, i32, i32
  }
  func.func @transform_2(%arg0: i32) -> (i32, i32) {
    %c0_i32 = arith.constant 0 : i32
    %c0_i32_0 = arith.constant 0 : i32
    %c0_i32_1 = arith.constant 0 : i32
    return %c0_i32, %c0_i32_0 : i32, i32
  }
  func.func @transform_3(%arg0: i32) -> (i32, i32, i32) {
    %c0_i32 = arith.constant 0 : i32
    %c0_i32_0 = arith.constant 0 : i32
    %c0_i32_1 = arith.constant 0 : i32
    return %arg0, %c0_i32, %c0_i32_0 : i32, i32, i32
  }
  func.func @transform_4(%arg0: i32) -> (i32, i32, i32) {
    %c0_i32 = arith.constant 0 : i32
    %c0_i32_0 = arith.constant 0 : i32
    %c0_i32_1 = arith.constant 0 : i32
    return %arg0, %c0_i32, %c0_i32_0 : i32, i32, i32
  }
  func.func @transform_5(%arg0: i32) -> (i32, i32, i32) {
    %c0_i32 = arith.constant 0 : i32
    %c0_i32_0 = arith.constant 0 : i32
    %c0_i32_1 = arith.constant 0 : i32
    return %arg0, %c0_i32, %c0_i32_0 : i32, i32, i32
  }
}

</mosaic_0001>

<llo_original>
// kernel: conv_block_forward.5
$region0: #{conv_block_forward.5}
  #allocation0 [shape = 'u32[]', space=smem, size = 0x4, offset = 0x4, fixed_abs, tag = 'smem constant byte address 0x4 - core index']
  #allocation1 [shape = 'u32[144,128]{1,0:T(1,128)}', space=vmem, size = 0x12000, scoped, tag = 'internal scratch']
  %s0 = inlined_call_operand.vmem [shape: f32[2,8,256], index: 0, kind: input, shape index: {}]
  %s1 = inlined_call_operand.vmem [shape: f32[8,1], index: 1, kind: input, shape index: {}]
  %s2 = inlined_call_operand.vmem [shape: f32[8,1], index: 2, kind: input, shape index: {}]
  %s3 = inlined_call_operand.vmem [shape: f32[2,8,256], index: 3, kind: output, shape index: {}]
  %s4 = sld [smem:[#allocation0]]
  $region45: #{conv_block_forward.5} parent=0
    _
  %s6 = ssub.s32 1, %s4
  %s7 = scalar_select 0, %s6, %s4
  loop: start=0, step=1, limit=4
  $region2: #{conv_block_forward.5} parent=0 // loop_pre_header
    _
  $region3: #{conv_block_forward.5} parent=0 // loop_header
    %s9 = sphi 0, %s13
    %p10 = scmp.ge.s32.totalorder %s9, 4
    %s19 = sphi 0, %s21
    %s22 = sphi 0, %s19
    %s23 = sphi 0, %s22
    %s39 = sphi 0, %s23
    %s43 = sphi 0, %s43
    %s45 = sphi 0, %s43
    %s46 = sphi 0, %s45
    %s60 = sphi 0, %s46
    %s64 = sphi 0, %s64
    %s66 = sphi 0, %s64
    %s67 = sphi 0, %s66
    %s81 = sphi 0, %s67
    %s87 = sphi 0, %s89
    %s90 = sphi 0, %s87
    %s91 = sphi 0, %s90
    %s107 = sphi 0, %s91
  $region4: #{conv_block_forward.5} parent=0 // loop_header_branch
    %12 = sbr.rel (%p10) target = $region8
  $region5: #{conv_block_forward.5} parent=0 // loop_body
    %s14 = ssub.s32 %s9, 1
    %s15 = ssub.s32 %s9, 2
    %s16 = sadd.s32 %s9, 1
    %s17 = ssub.s32 %s9, %s16
    %p18 = scmp.eq.s32.totalorder %s17, 0
    %s20 = sadd.s32 %s19, 1
    %s21 = scalar_select %p18, %s19, %s20
    %p24 = pneg %p18
    %p25 = scmp.eq.s32.totalorder %s9, 1
    %p26 = por %p24, %p25
    %p27 = scmp.ne.s32.totalorder %s19, %s22
    %p28 = scmp.eq.s32.totalorder %s9, 0
    %p29 = por %p27, %p28
    %p30 = scmp.ne.s32.totalorder %s19, %s22
    %p31 = scmp.eq.s32.totalorder %s14, 1
    %p32 = por %p30, %p31
    %p33 = scmp.ne.s32.totalorder %s22, %s23
    %p34 = scmp.eq.s32.totalorder %s14, 0
    %p35 = por %p33, %p34
    %p36 = scmp.ne.s32.totalorder %s22, %s23
    %p37 = scmp.eq.s32.totalorder %s15, 1
    %p38 = por %p36, %p37
    %p40 = scmp.ne.s32.totalorder %s23, %s39
    %p41 = scmp.eq.s32.totalorder %s15, 0
    %p42 = por %p40, %p41
    %s44 = sadd.s32 %s43, 1
    %p47 = scmp.eq.s32.totalorder %s9, 1
    %p48 = scmp.ne.s32.totalorder %s43, %s45
    %p49 = scmp.eq.s32.totalorder %s9, 0
    %p50 = por %p48, %p49
    %p51 = scmp.ne.s32.totalorder %s43, %s45
    %p52 = scmp.eq.s32.totalorder %s14, 1
    %p53 = por %p51, %p52
    %p54 = scmp.ne.s32.totalorder %s45, %s46
    %p55 = scmp.eq.s32.totalorder %s14, 0
    %p56 = por %p54, %p55
    %p57 = scmp.ne.s32.totalorder %s45, %s46
    %p58 = scmp.eq.s32.totalorder %s15, 1
    %p59 = por %p57, %p58
    %p61 = scmp.ne.s32.totalorder %s46, %s60
    %p62 = scmp.eq.s32.totalorder %s15, 0
    %p63 = por %p61, %p62
    %s65 = sadd.s32 %s64, 1
    %p68 = scmp.eq.s32.totalorder %s9, 1
    %p69 = scmp.ne.s32.totalorder %s64, %s66
    %p70 = scmp.eq.s32.totalorder %s9, 0
    %p71 = por %p69, %p70
    %p72 = scmp.ne.s32.totalorder %s64, %s66
    %p73 = scmp.eq.s32.totalorder %s14, 1
    %p74 = por %p72, %p73
    %p75 = scmp.ne.s32.totalorder %s66, %s67
    %p76 = scmp.eq.s32.totalorder %s14, 0
    %p77 = por %p75, %p76
    %p78 = scmp.ne.s32.totalorder %s66, %s67
    %p79 = scmp.eq.s32.totalorder %s15, 1
    %p80 = por %p78, %p79
    %p82 = scmp.ne.s32.totalorder %s67, %s81
    %p83 = scmp.eq.s32.totalorder %s15, 0
    %p84 = por %p82, %p83
    %s85 = ssub.s32 %s9, %s16
    %p86 = scmp.eq.s32.totalorder %s85, 0
    %s88 = sadd.s32 %s87, 1
    %s89 = scalar_select %p86, %s87, %s88
    %p92 = pneg %p86
    %p93 = scmp.eq.s32.totalorder %s9, 1
    %p94 = por %p92, %p93
    %p95 = scmp.ne.s32.totalorder %s87, %s90
    %p96 = scmp.eq.s32.totalorder %s9, 0
    %p97 = por %p95, %p96
    %p98 = scmp.ne.s32.totalorder %s87, %s90
    %p99 = scmp.eq.s32.totalorder %s14, 1
    %p100 = por %p98, %p99
    %p101 = scmp.ne.s32.totalorder %s90, %s91
    %p102 = scmp.eq.s32.totalorder %s14, 0
    %p103 = por %p101, %p102
    %p104 = scmp.ne.s32.totalorder %s90, %s91
    %p105 = scmp.eq.s32.totalorder %s15, 1
    %p106 = por %p104, %p105
    %p108 = scmp.ne.s32.totalorder %s91, %s107
    %p109 = scmp.eq.s32.totalorder %s15, 0
    %p110 = por %p108, %p109
    %p111 = scmp.le.s32.totalorder 1, %s9
    %p112 = scmp.lt.s32.totalorder %s9, 3
    %p113 = pnand %p111, %p112
    %p114 = pneg %p113
    // Predicated region
    $region9: #{conv_block_forward.5} parent=5 // pred_check
      _
    $region10: #{conv_block_forward.5} parent=5 // pred_check_branch
      %116 = sbr.rel (%p113) target = $region12
    $region11: #{conv_block_forward.5} parent=5 // pred_region
      %s117 = ssub.s32 %s9, 1
      // Predicated region
      $region13: #{conv_block_forward.5} parent=11 // pred_check
        %p118 = pneg %p56
      $region14: #{conv_block_forward.5} parent=11 // pred_check_branch
        %120 = sbr.rel (%p118) target = $region16
      $region15: #{conv_block_forward.5} parent=11 // pred_region
        _
      $region16: #{conv_block_forward.5} parent=11 // pred_fallthru
        _
      // Predicated region
      $region17: #{conv_block_forward.5} parent=11 // pred_check
        %p121 = pneg %p77
      $region18: #{conv_block_forward.5} parent=11 // pred_check_branch
        %123 = sbr.rel (%p121) target = $region20
      $region19: #{conv_block_forward.5} parent=11 // pred_region
        _
      $region20: #{conv_block_forward.5} parent=11 // pred_fallthru
        _
    $region12: #{conv_block_forward.5} parent=5 // pred_fallthru
      _
    %p124 = scmp.lt.s32.totalorder %s9, 2
    // Predicated region
    $region21: #{conv_block_forward.5} parent=5 // pred_check
      %p125 = pneg %p124
    $region22: #{conv_block_forward.5} parent=5 // pred_check_branch
      %127 = sbr.rel (%p125) target = $region24
    $region23: #{conv_block_forward.5} parent=5 // pred_region
      // Predicated region
      $region25: #{conv_block_forward.5} parent=23 // pred_check
        %p128 = pneg %p29
      $region26: #{conv_block_forward.5} parent=23 // pred_check_branch
        %130 = sbr.rel (%p128) target = $region28
      $region27: #{conv_block_forward.5} parent=23 // pred_region
        %p131 = scmp.lt.s32.totalorder %s9, 1
        %s132 = scalar_select %p131, %s9, 1
        %s133 = smul.addr %s132, 2
        %s134 = smul.addr %s133, 8
        %s135 = scalar_lea.vmem %s0, %s134
      $region28: #{conv_block_forward.5} parent=23 // pred_fallthru
        _
    $region24: #{conv_block_forward.5} parent=5 // pred_fallthru
      _
    %p136 = scmp.le.s32.totalorder 1, %s9
    %p137 = scmp.lt.s32.totalorder %s9, 3
    %p138 = pnand %p136, %p137
    %p139 = pneg %p138
    // Predicated region
    $region29: #{conv_block_forward.5} parent=5 // pred_check
      _
    $region30: #{conv_block_forward.5} parent=5 // pred_check_branch
      %141 = sbr.rel (%p138) target = $region32
    $region31: #{conv_block_forward.5} parent=5 // pred_region
      %s142 = ssub.s32 %s9, 1
      %p143 = scmp.lt.s32.totalorder %s14, 1
      %s144 = scalar_select %p143, %s14, 1
      %s145 = smul.addr %s144, 2
      %s146 = smul.addr %s145, 8
      %s147 = scalar_lea.vmem %s0, %s146
      %p148 = pneg %p35
      %p149 = pneg %p32
      %p150 = pneg %p56
      %p151 = pneg %p53
      %p152 = pneg %p77
      %p153 = pneg %p74
      %p154 = pneg %p103
      %p155 = pneg %p100
      %p156 = scmp.lt.s32.totalorder %s14, 1
      %s157 = scalar_select %p156, %s14, 1
      %s158 = smul.addr %s157, 2
      %s159 = smul.addr %s158, 8
      %s160 = scalar_lea.vmem %s3, %s159
      %p161 = scmp.lt.s32.totalorder %s14, 1
      %s162 = scalar_select %p161, %s14, 1
      %s163 = smul.addr %s162, 2
      %s164 = smul.addr %s163, 8
      %s165 = scalar_lea.vmem %s0, %s164
      %p166 = scmp.lt.s32.totalorder %s14, 1
      %s167 = scalar_select %p166, %s14, 1
      %s168 = smul.addr %s167, 2
      %s169 = smul.addr %s168, 8
      %s170 = scalar_lea.vmem %s3, %s169
      %v171 = vld [vmem:[%s165] sm:$0xff]
      %v172 = vld [vmem:[%s165 + $0x8] sm:$0xff]
      %v173 = vld [vmem:[%s1] sm:$0xff]
      %175 = vset.pattern.permute.xlu0 0
      %176 = vperm.xlu0 %175, %v173
      %v177 = vpop.permute.xlu0 %176
      %v179 = vmul.f32 %v171, %v177
      %v180 = vmul.f32 %v172, %v177
      %v181 = vld [vmem:[%s2] sm:$0xff]
      %183 = vset.pattern.permute.xlu0 0
      %184 = vperm.xlu0 %183, %v181
      %v185 = vpop.permute.xlu0 %184
      %v187 = vadd.f32 %v179, %v185
      %v188 = vadd.f32 %v180, %v185
      %v189 = vmax.f32 %v187, 0.0
      %v190 = vmax.f32 %v188, 0.0
      %191 = vst [vmem:[%s170] sm:$0xff] %v189
      %192 = vst [vmem:[%s170 + $0x8] sm:$0xff] %v190
      %p193 = scmp.lt.s32.totalorder %s14, 1
      %s194 = scalar_select %p193, %s14, 1
      %s195 = smul.addr %s194, 2
      %s196 = smul.addr %s195, 8
      %s197 = scalar_lea.vmem %s3, %s196
      // Predicated region
      $region33: #{conv_block_forward.5} parent=31 // pred_check
        %p198 = pneg %p100
      $region34: #{conv_block_forward.5} parent=31 // pred_check_branch
        %200 = sbr.rel (%p198) target = $region36
      $region35: #{conv_block_forward.5} parent=31 // pred_region
        _
      $region36: #{conv_block_forward.5} parent=31 // pred_fallthru
        _
    $region32: #{conv_block_forward.5} parent=5 // pred_fallthru
      _
    %p201 = scmp.le.s32.totalorder 2, %s9
    // Predicated region
    $region37: #{conv_block_forward.5} parent=5 // pred_check
      %p202 = pneg %p201
    $region38: #{conv_block_forward.5} parent=5 // pred_check_branch
      %204 = sbr.rel (%p202) target = $region40
    $region39: #{conv_block_forward.5} parent=5 // pred_region
      %s205 = ssub.s32 %s9, 2
      // Predicated region
      $region41: #{conv_block_forward.5} parent=39 // pred_check
        %p206 = pneg %p106
      $region42: #{conv_block_forward.5} parent=39 // pred_check_branch
        %208 = sbr.rel (%p206) target = $region44
      $region43: #{conv_block_forward.5} parent=39 // pred_region
        %p209 = scmp.lt.s32.totalorder %s15, 1
        %s210 = scalar_select %p209, %s15, 1
        %s211 = smul.addr %s210, 2
        %s212 = smul.addr %s211, 8
        %s213 = scalar_lea.vmem %s3, %s212
      $region44: #{conv_block_forward.5} parent=39 // pred_fallthru
        _
    $region40: #{conv_block_forward.5} parent=5 // pred_fallthru
      _
  $region6: #{conv_block_forward.5} parent=0 // loop_footer
    %s13 = sadd.s32 1, %s9
  $region7: #{conv_block_forward.5} parent=0 // loop_footer_branch
    %8 = sbr.rel target = $region3
  $region8: #{conv_block_forward.5} parent=0 // loop_exit
    _

// kernel: conv_block_forward.6
$region0: #{conv_block_forward.6}
  #allocation0 [shape = 'u32[]', space=smem, size = 0x4, offset = 0x4, fixed_abs, tag = 'smem constant byte address 0x4 - core index']
  #allocation1 [shape = 'u32[144,128]{1,0:T(1,128)}', space=vmem, size = 0x12000, scoped, tag = 'internal scratch']
  %s0 = inlined_call_operand.vmem [shape: f32[2,8,320], index: 0, kind: input, shape index: {}]
  %s1 = inlined_call_operand.vmem [shape: f32[9,8,8], index: 1, kind: input, shape index: {}]
  %s2 = inlined_call_operand.vmem [shape: f32[8,1], index: 2, kind: input, shape index: {}]
  %s3 = inlined_call_operand.vmem [shape: f32[2,8,256], index: 3, kind: output, shape index: {0}]
  %s4 = inlined_call_operand.vmem [shape: f32[2,8,1], index: 4, kind: output, shape index: {1}]
  %s5 = inlined_call_operand.vmem [shape: f32[2,8,1], index: 5, kind: output, shape index: {2}]
  %6 = xla_tuple %s3, %s4, %s5
  %s7 = sld [smem:[#allocation0]]
  $region61: #{conv_block_forward.6} parent=0
    _
  %s9 = ssub.s32 1, %s7
  %s10 = scalar_select 0, %s9, %s7
  loop: start=0, step=1, limit=4
  $region2: #{conv_block_forward.6} parent=0 // loop_pre_header
    _
  $region3: #{conv_block_forward.6} parent=0 // loop_header
    %s12 = sphi 0, %s16
    %p13 = scmp.ge.s32.totalorder %s12, 4
    %s22 = sphi 0, %s24
    %s25 = sphi 0, %s22
    %s26 = sphi 0, %s25
    %s42 = sphi 0, %s26
    %s46 = sphi 0, %s46
    %s48 = sphi 0, %s46
    %s49 = sphi 0, %s48
    %s63 = sphi 0, %s49
    %s67 = sphi 0, %s67
    %s69 = sphi 0, %s67
    %s70 = sphi 0, %s69
    %s84 = sphi 0, %s70
    %s90 = sphi 0, %s92
    %s93 = sphi 0, %s90
    %s94 = sphi 0, %s93
    %s110 = sphi 0, %s94
    %s116 = sphi 0, %s118
    %s119 = sphi 0, %s116
    %s120 = sphi 0, %s119
    %s136 = sphi 0, %s120
    %s142 = sphi 0, %s144
    %s145 = sphi 0, %s142
    %s146 = sphi 0, %s145
    %s162 = sphi 0, %s146
  $region4: #{conv_block_forward.6} parent=0 // loop_header_branch
    %15 = sbr.rel (%p13) target = $region8
  $region5: #{conv_block_forward.6} parent=0 // loop_body
    %s17 = ssub.s32 %s12, 1
    %s18 = ssub.s32 %s12, 2
    %s19 = sadd.s32 %s12, 1
    %s20 = ssub.s32 %s12, %s19
    %p21 = scmp.eq.s32.totalorder %s20, 0
    %s23 = sadd.s32 %s22, 1
    %s24 = scalar_select %p21, %s22, %s23
    %p27 = pneg %p21
    %p28 = scmp.eq.s32.totalorder %s12, 1
    %p29 = por %p27, %p28
    %p30 = scmp.ne.s32.totalorder %s22, %s25
    %p31 = scmp.eq.s32.totalorder %s12, 0
    %p32 = por %p30, %p31
    %p33 = scmp.ne.s32.totalorder %s22, %s25
    %p34 = scmp.eq.s32.totalorder %s17, 1
    %p35 = por %p33, %p34
    %p36 = scmp.ne.s32.totalorder %s25, %s26
    %p37 = scmp.eq.s32.totalorder %s17, 0
    %p38 = por %p36, %p37
    %p39 = scmp.ne.s32.totalorder %s25, %s26
    %p40 = scmp.eq.s32.totalorder %s18, 1
    %p41 = por %p39, %p40
    %p43 = scmp.ne.s32.totalorder %s26, %s42
    %p44 = scmp.eq.s32.totalorder %s18, 0
    %p45 = por %p43, %p44
    %s47 = sadd.s32 %s46, 1
    %p50 = scmp.eq.s32.totalorder %s12, 1
    %p51 = scmp.ne.s32.totalorder %s46, %s48
    %p52 = scmp.eq.s32.totalorder %s12, 0
    %p53 = por %p51, %p52
    %p54 = scmp.ne.s32.totalorder %s46, %s48
    %p55 = scmp.eq.s32.totalorder %s17, 1
    %p56 = por %p54, %p55
    %p57 = scmp.ne.s32.totalorder %s48, %s49
    %p58 = scmp.eq.s32.totalorder %s17, 0
    %p59 = por %p57, %p58
    %p60 = scmp.ne.s32.totalorder %s48, %s49
    %p61 = scmp.eq.s32.totalorder %s18, 1
    %p62 = por %p60, %p61
    %p64 = scmp.ne.s32.totalorder %s49, %s63
    %p65 = scmp.eq.s32.totalorder %s18, 0
    %p66 = por %p64, %p65
    %s68 = sadd.s32 %s67, 1
    %p71 = scmp.eq.s32.totalorder %s12, 1
    %p72 = scmp.ne.s32.totalorder %s67, %s69
    %p73 = scmp.eq.s32.totalorder %s12, 0
    %p74 = por %p72, %p73
    %p75 = scmp.ne.s32.totalorder %s67, %s69
    %p76 = scmp.eq.s32.totalorder %s17, 1
    %p77 = por %p75, %p76
    %p78 = scmp.ne.s32.totalorder %s69, %s70
    %p79 = scmp.eq.s32.totalorder %s17, 0
    %p80 = por %p78, %p79
    %p81 = scmp.ne.s32.totalorder %s69, %s70
    %p82 = scmp.eq.s32.totalorder %s18, 1
    %p83 = por %p81, %p82
    %p85 = scmp.ne.s32.totalorder %s70, %s84
    %p86 = scmp.eq.s32.totalorder %s18, 0
    %p87 = por %p85, %p86
    %s88 = ssub.s32 %s12, %s19
    %p89 = scmp.eq.s32.totalorder %s88, 0
    %s91 = sadd.s32 %s90, 1
    %s92 = scalar_select %p89, %s90, %s91
    %p95 = pneg %p89
    %p96 = scmp.eq.s32.totalorder %s12, 1
    %p97 = por %p95, %p96
    %p98 = scmp.ne.s32.totalorder %s90, %s93
    %p99 = scmp.eq.s32.totalorder %s12, 0
    %p100 = por %p98, %p99
    %p101 = scmp.ne.s32.totalorder %s90, %s93
    %p102 = scmp.eq.s32.totalorder %s17, 1
    %p103 = por %p101, %p102
    %p104 = scmp.ne.s32.totalorder %s93, %s94
    %p105 = scmp.eq.s32.totalorder %s17, 0
    %p106 = por %p104, %p105
    %p107 = scmp.ne.s32.totalorder %s93, %s94
    %p108 = scmp.eq.s32.totalorder %s18, 1
    %p109 = por %p107, %p108
    %p111 = scmp.ne.s32.totalorder %s94, %s110
    %p112 = scmp.eq.s32.totalorder %s18, 0
    %p113 = por %p111, %p112
    %s114 = ssub.s32 %s12, %s19
    %p115 = scmp.eq.s32.totalorder %s114, 0
    %s117 = sadd.s32 %s116, 1
    %s118 = scalar_select %p115, %s116, %s117
    %p121 = pneg %p115
    %p122 = scmp.eq.s32.totalorder %s12, 1
    %p123 = por %p121, %p122
    %p124 = scmp.ne.s32.totalorder %s116, %s119
    %p125 = scmp.eq.s32.totalorder %s12, 0
    %p126 = por %p124, %p125
    %p127 = scmp.ne.s32.totalorder %s116, %s119
    %p128 = scmp.eq.s32.totalorder %s17, 1
    %p129 = por %p127, %p128
    %p130 = scmp.ne.s32.totalorder %s119, %s120
    %p131 = scmp.eq.s32.totalorder %s17, 0
    %p132 = por %p130, %p131
    %p133 = scmp.ne.s32.totalorder %s119, %s120
    %p134 = scmp.eq.s32.totalorder %s18, 1
    %p135 = por %p133, %p134
    %p137 = scmp.ne.s32.totalorder %s120, %s136
    %p138 = scmp.eq.s32.totalorder %s18, 0
    %p139 = por %p137, %p138
    %s140 = ssub.s32 %s12, %s19
    %p141 = scmp.eq.s32.totalorder %s140, 0
    %s143 = sadd.s32 %s142, 1
    %s144 = scalar_select %p141, %s142, %s143
    %p147 = pneg %p141
    %p148 = scmp.eq.s32.totalorder %s12, 1
    %p149 = por %p147, %p148
    %p150 = scmp.ne.s32.totalorder %s142, %s145
    %p151 = scmp.eq.s32.totalorder %s12, 0
    %p152 = por %p150, %p151
    %p153 = scmp.ne.s32.totalorder %s142, %s145
    %p154 = scmp.eq.s32.totalorder %s17, 1
    %p155 = por %p153, %p154
    %p156 = scmp.ne.s32.totalorder %s145, %s146
    %p157 = scmp.eq.s32.totalorder %s17, 0
    %p158 = por %p156, %p157
    %p159 = scmp.ne.s32.totalorder %s145, %s146
    %p160 = scmp.eq.s32.totalorder %s18, 1
    %p161 = por %p159, %p160
    %p163 = scmp.ne.s32.totalorder %s146, %s162
    %p164 = scmp.eq.s32.totalorder %s18, 0
    %p165 = por %p163, %p164
    %p166 = scmp.le.s32.totalorder 1, %s12
    %p167 = scmp.lt.s32.totalorder %s12, 3
    %p168 = pnand %p166, %p167
    %p169 = pneg %p168
    // Predicated region
    $region9: #{conv_block_forward.6} parent=5 // pred_check
      _
    $region10: #{conv_block_forward.6} parent=5 // pred_check_branch
      %171 = sbr.rel (%p168) target = $region12
    $region11: #{conv_block_forward.6} parent=5 // pred_region
      %s172 = ssub.s32 %s12, 1
      // Predicated region
      $region13: #{conv_block_forward.6} parent=11 // pred_check
        %p173 = pneg %p59
      $region14: #{conv_block_forward.6} parent=11 // pred_check_branch
        %175 = sbr.rel (%p173) target = $region16
      $region15: #{conv_block_forward.6} parent=11 // pred_region
        _
      $region16: #{conv_block_forward.6} parent=11 // pred_fallthru
        _
      // Predicated region
      $region17: #{conv_block_forward.6} parent=11 // pred_check
        %p176 = pneg %p80
      $region18: #{conv_block_forward.6} parent=11 // pred_check_branch
        %178 = sbr.rel (%p176) target = $region20
      $region19: #{conv_block_forward.6} parent=11 // pred_region
        _
      $region20: #{conv_block_forward.6} parent=11 // pred_fallthru
        _
    $region12: #{conv_block_forward.6} parent=5 // pred_fallthru
      _
    %p179 = scmp.lt.s32.totalorder %s12, 2
    // Predicated region
    $region21: #{conv_block_forward.6} parent=5 // pred_check
      %p180 = pneg %p179
    $region22: #{conv_block_forward.6} parent=5 // pred_check_branch
      %182 = sbr.rel (%p180) target = $region24
    $region23: #{conv_block_forward.6} parent=5 // pred_region
      // Predicated region
      $region25: #{conv_block_forward.6} parent=23 // pred_check
        %p183 = pneg %p32
      $region26: #{conv_block_forward.6} parent=23 // pred_check_branch
        %185 = sbr.rel (%p183) target = $region28
      $region27: #{conv_block_forward.6} parent=23 // pred_region
        %p186 = scmp.lt.s32.totalorder %s12, 1
        %s187 = scalar_select %p186, %s12, 1
        %s188 = smul.addr %s187, 3
        %s189 = smul.addr %s188, 8
        %s190 = scalar_lea.vmem %s0, %s189
      $region28: #{conv_block_forward.6} parent=23 // pred_fallthru
        _
    $region24: #{conv_block_forward.6} parent=5 // pred_fallthru
      _
    %p191 = scmp.le.s32.totalorder 1, %s12
    %p192 = scmp.lt.s32.totalorder %s12, 3
    %p193 = pnand %p191, %p192
    %p194 = pneg %p193
    // Predicated region
    $region29: #{conv_block_forward.6} parent=5 // pred_check
      _
    $region30: #{conv_block_forward.6} parent=5 // pred_check_branch
      %196 = sbr.rel (%p193) target = $region32
    $region31: #{conv_block_forward.6} parent=5 // pred_region
      %s197 = ssub.s32 %s12, 1
      %p198 = scmp.lt.s32.totalorder %s17, 1
      %s199 = scalar_select %p198, %s17, 1
      %s200 = smul.addr %s199, 3
      %s201 = smul.addr %s200, 8
      %s202 = scalar_lea.vmem %s0, %s201
      %p203 = pneg %p38
      %p204 = pneg %p35
      %p205 = pneg %p59
      %p206 = pneg %p56
      %p207 = pneg %p80
      %p208 = pneg %p77
      %p209 = pneg %p106
      %p210 = pneg %p103
      %p211 = scmp.lt.s32.totalorder %s17, 1
      %s212 = scalar_select %p211, %s17, 1
      %s213 = smul.addr %s212, 2
      %s214 = smul.addr %s213, 8
      %s215 = scalar_lea.vmem %s3, %s214
      %p216 = pneg %p132
      %p217 = pneg %p129
      %p218 = scmp.lt.s32.totalorder %s17, 1
      %s219 = scalar_select %p218, %s17, 1
      %s220 = smul.addr %s219, 8
      %s221 = scalar_lea.vmem %s4, %s220
      %p222 = pneg %p158
      %p223 = pneg %p155
      %p224 = scmp.lt.s32.totalorder %s17, 1
      %s225 = scalar_select %p224, %s17, 1
      %s226 = smul.addr %s225, 8
      %s227 = scalar_lea.vmem %s5, %s226
      %p228 = scmp.lt.s32.totalorder %s17, 1
      %s229 = scalar_select %p228, %s17, 1
      %s230 = smul.addr %s229, 3
      %s231 = smul.addr %s230, 8
      %s232 = scalar_lea.vmem %s0, %s231
      %p233 = scmp.lt.s32.totalorder %s17, 1
      %s234 = scalar_select %p233, %s17, 1
      %s235 = smul.addr %s234, 2
      %s236 = smul.addr %s235, 8
      %s237 = scalar_lea.vmem %s3, %s236
      %p238 = scmp.lt.s32.totalorder %s17, 1
      %s239 = scalar_select %p238, %s17, 1
      %s240 = smul.addr %s239, 8
      %s241 = scalar_lea.vmem %s4, %s240
      %p242 = scmp.lt.s32.totalorder %s17, 1
      %s243 = scalar_select %p242, %s17, 1
      %s244 = smul.addr %s243, 8
      %s245 = scalar_lea.vmem %s5, %s244
      %v246 = vlaneseq
      %v247 = vand.u32 %v246, 127
      %v248 = vadd.s32 %v247, 128
      %vm249 = vcmp.lt.s32.totalorder %v247, 0
      %v250 = vsub.s32 0, %v247
      %v251 = vsel %vm249, %v250, %v247
      %v252 = vshrl.u32 %v251, 4
      %v253 = vand.u32 %v251, 15
      %v254 = vsub.s32 0, %v253
      %v255 = vsel %vm249, %v254, %v253
      %vm256 = vcmp.lt.s32.totalorder %v248, 0
      %v257 = vsub.s32 0, %v248
      %v258 = vsel %vm256, %v257, %v248
      %v259 = vshrl.u32 %v258, 4
      %v260 = vand.u32 %v258, 15
      %v261 = vsub.s32 0, %v260
      %v262 = vsel %vm256, %v261, %v260
      %vm263 = vcmp.ne.s32.totalorder %v255, 0
      %vm264 = vcmp.ne.s32.totalorder %v262, 0
      %vm265 = vcmp.lt.s32.totalorder %v255, 0
      %vm266 = vcmp.lt.s32.totalorder %v262, 0
      %vm267 = vmand %vm265, %vm263
      %vm268 = vmand %vm266, %vm264
      %v269 = vadd.s32 %v255, 16
      %v270 = vadd.s32 %v262, 16
      %v271 = vsel %vm267, %v269, %v255
      %v272 = vsel %vm268, %v270, %v262
      %v273 = vld [vmem:[%s232] sm:$0xff]
      %v274 = vld [vmem:[%s232 + $0x8] sm:$0xff]
      %v275 = vld [vmem:[%s232 + $0x10] sm:$0xff]
      %vm276 = vcmp.eq.s32.totalorder %v271, 0
      %vm277 = vcmp.eq.s32.totalorder %v272, 0
      %281 = vrot.lane.b32.xlu0 %v273, 113
      %v282 = vpop.permute.xlu0 %281
      %283 = vrot.lane.b32.xlu0 %v274, 113
      %v284 = vpop.permute.xlu0 %283
      %285 = vrot.lane.b32.xlu0 %v275, 113
      %v286 = vpop.permute.xlu0 %285
      %vm287 = vcmask 924672
      %v288 = vsel %vm287, %v282, %v284
      %v289 = vsel %vm287, %v284, %v286
      %v292 = vsel %vm276, 0.0, %v288
      %v293 = vsel %vm277, 0.0, %v289
      %v294 = vld [vmem:[%s1] sm:$0xff]
      %s295 = scalar_lea.vmem %s1, 8
      %v296 = vld [vmem:[%s295] sm:$0xff]
      %297 = vrot.lane.b32.xlu0 %v273, 112
      %v298 = vpop.permute.xlu0 %297
      %299 = vrot.lane.b32.xlu0 %v274, 112
      %v300 = vpop.permute.xlu0 %299
      %301 = vrot.lane.b32.xlu0 %v275, 112
      %v302 = vpop.permute.xlu0 %301
      %vm303 = vcmask 916480
      %v304 = vsel %vm303, %v298, %v300
      %v305 = vsel %vm303, %v300, %v302
      %vm308 = vcmask 64512
      %v310 = vsel %vm308, %v296, 0
      %312 = vmatprep.subr.mxu0 %v305
      %313 = vmatpush1.msra.mxu0 %v304
      %314 = vmatprep.subr.mxu0 0.0
      %315 = vmatpush1.msra.mxu0 0.0
      %316 = vmatprep.subr.mxu0 0.0
      %317 = vmatpush1.msra.mxu0 0.0
      %318 = vmatprep.subr.mxu0 0.0
      %319 = vmatpush1.msra.mxu0 0.0
      %320 = vmatprep.subr.mxu0 0.0
      %321 = vmatpush1.msra.mxu0 0.0
      %322 = vmatprep.subr.mxu0 0.0
      %323 = vmatpush1.msra.mxu0 0.0
      %324 = vmatprep.subr.mxu0 0.0
      %325 = vmatpush1.msra.mxu0 0.0
      %326 = vmatprep.subr.mxu0 0.0
      %327 = vmatpush1.msra.mxu0 0.0
      %328 = vmatprep.subr.mxu0 0.0
      %329 = vmatpush1.msra.mxu0 0.0
      %330 = vmatprep.subr.mxu0 0.0
      %331 = vmatpush1.msra.mxu0 0.0
      %332 = vmatprep.subr.mxu0 0.0
      %333 = vmatpush1.msra.mxu0 0.0
      %334 = vmatprep.subr.mxu0 0.0
      %335 = vmatpush1.msra.mxu0 0.0
      %336 = vmatprep.subr.mxu0 0.0
      %337 = vmatpush1.msra.mxu0 0.0
      %338 = vmatprep.subr.mxu0 0.0
      %339 = vmatpush1.msra.mxu0 0.0
      %340 = vmatprep.subr.mxu0 0.0
      %341 = vmatpush1.msra.mxu0 0.0
      %342 = vmatprep.subr.mxu0 0.0
      %343 = vmatpush1.msra.mxu0 0.0
      %344 = vmatprep.subr.mxu0 0.0
      %345 = vmatpush1.msra.mxu0 0.0
      %346 = vmatprep.subr.mxu0 0.0
      %347 = vmatpush1.msra.mxu0 0.0
      %348 = vmatprep.subr.mxu0 0.0
      %349 = vmatpush1.msra.mxu0 0.0
      %350 = vmatprep.subr.mxu0 0.0
      %351 = vmatpush1.msra.mxu0 0.0
      %352 = vmatprep.subr.mxu0 0.0
      %353 = vmatpush1.msra.mxu0 0.0
      %354 = vmatprep.subr.mxu0 0.0
      %355 = vmatpush1.msra.mxu0 0.0
      %356 = vmatprep.subr.mxu0 0.0
      %357 = vmatpush1.msra.mxu0 0.0
      %358 = vmatprep.subr.mxu0 0.0
      %359 = vmatpush1.msra.mxu0 0.0
      %360 = vmatprep.subr.mxu0 0.0
      %361 = vmatpush1.msra.mxu0 0.0
      %362 = vmatprep.subr.mxu0 0.0
      %363 = vmatpush1.msra.mxu0 0.0
      %364 = vmatprep.subr.mxu0 0.0
      %365 = vmatpush1.msra.mxu0 0.0
      %366 = vmatprep.subr.mxu0 0.0
      %367 = vmatpush1.msra.mxu0 0.0
      %368 = vmatprep.subr.mxu0 0.0
      %369 = vmatpush1.msra.mxu0 0.0
      %370 = vmatprep.subr.mxu0 0.0
      %371 = vmatpush1.msra.mxu0 0.0
      %372 = vmatprep.subr.mxu0 0.0
      %373 = vmatpush1.msra.mxu0 0.0
      %374 = vmatprep.subr.mxu0 0.0
      %375 = vmatpush1.msra.mxu0 0.0
      %376 = vmatprep.mubr.f32.mxu0 0.0
      %377 = vmatmul.mubr.f32.gmra.mrb[0].mxu0 %v310
      %v378 = vpop.f32.mrb[0].mxu0
      %v379 = vadd.f32 0.0, %v378
      %v380 = vpop.f32.mrb[0].mxu0
      %v381 = vadd.f32 0.0, %v380
      %382 = vdwg.mxu0
      %v384 = vsel %vm308, %v294, 0
      %386 = vmatprep.subr.mxu0 %v293
      %387 = vmatpush1.msra.mxu0 %v292
      %388 = vmatprep.subr.mxu0 0.0
      %389 = vmatpush1.msra.mxu0 0.0
      %390 = vmatprep.subr.mxu0 0.0
      %391 = vmatpush1.msra.mxu0 0.0
      %392 = vmatprep.subr.mxu0 0.0
      %393 = vmatpush1.msra.mxu0 0.0
      %394 = vmatprep.subr.mxu0 0.0
      %395 = vmatpush1.msra.mxu0 0.0
      %396 = vmatprep.subr.mxu0 0.0
      %397 = vmatpush1.msra.mxu0 0.0
      %398 = vmatprep.subr.mxu0 0.0
      %399 = vmatpush1.msra.mxu0 0.0
      %400 = vmatprep.subr.mxu0 0.0
      %401 = vmatpush1.msra.mxu0 0.0
      %402 = vmatprep.subr.mxu0 0.0
      %403 = vmatpush1.msra.mxu0 0.0
      %404 = vmatprep.subr.mxu0 0.0
      %405 = vmatpush1.msra.mxu0 0.0
      %406 = vmatprep.subr.mxu0 0.0
      %407 = vmatpush1.msra.mxu0 0.0
      %408 = vmatprep.subr.mxu0 0.0
      %409 = vmatpush1.msra.mxu0 0.0
      %410 = vmatprep.subr.mxu0 0.0
      %411 = vmatpush1.msra.mxu0 0.0
      %412 = vmatprep.subr.mxu0 0.0
      %413 = vmatpush1.msra.mxu0 0.0
      %414 = vmatprep.subr.mxu0 0.0
      %415 = vmatpush1.msra.mxu0 0.0
      %416 = vmatprep.subr.mxu0 0.0
      %417 = vmatpush1.msra.mxu0 0.0
      %418 = vmatprep.subr.mxu0 0.0
      %419 = vmatpush1.msra.mxu0 0.0
      %420 = vmatprep.subr.mxu0 0.0
      %421 = vmatpush1.msra.mxu0 0.0
      %422 = vmatprep.subr.mxu0 0.0
      %423 = vmatpush1.msra.mxu0 0.0
      %424 = vmatprep.subr.mxu0 0.0
      %425 = vmatpush1.msra.mxu0 0.0
      %426 = vmatprep.subr.mxu0 0.0
      %427 = vmatpush1.msra.mxu0 0.0
      %428 = vmatprep.subr.mxu0 0.0
      %429 = vmatpush1.msra.mxu0 0.0
      %430 = vmatprep.subr.mxu0 0.0
      %431 = vmatpush1.msra.mxu0 0.0
      %432 = vmatprep.subr.mxu0 0.0
      %433 = vmatpush1.msra.mxu0 0.0
      %434 = vmatprep.subr.mxu0 0.0
      %435 = vmatpush1.msra.mxu0 0.0
      %436 = vmatprep.subr.mxu0 0.0
      %437 = vmatpush1.msra.mxu0 0.0
      %438 = vmatprep.subr.mxu0 0.0
      %439 = vmatpush1.msra.mxu0 0.0
      %440 = vmatprep.subr.mxu0 0.0
      %441 = vmatpush1.msra.mxu0 0.0
      %442 = vmatprep.subr.mxu0 0.0
      %443 = vmatpush1.msra.mxu0 0.0
      %444 = vmatprep.subr.mxu0 0.0
      %445 = vmatpush1.msra.mxu0 0.0
      %446 = vmatprep.subr.mxu0 0.0
      %447 = vmatpush1.msra.mxu0 0.0
      %448 = vmatprep.subr.mxu0 0.0
      %449 = vmatpush1.msra.mxu0 0.0
      %450 = vmatprep.mubr.f32.mxu0 0.0
      %451 = vmatmul.mubr.f32.gmra.mrb[0].mxu0 %v384
      %v452 = vpop.f32.mrb[0].mxu0
      %v453 = vadd.f32 %v379, %v452
      %v454 = vpop.f32.mrb[0].mxu0
      %v455 = vadd.f32 %v381, %v454
      %456 = vdwg.mxu0
      %vm457 = vcmp.eq.s32.totalorder %v271, 15
      %vm458 = vcmp.eq.s32.totalorder %v272, 15
      %459 = vrot.lane.b32.xlu0 %v273, 111
      %v460 = vpop.permute.xlu0 %459
      %461 = vrot.lane.b32.xlu0 %v274, 111
      %v462 = vpop.permute.xlu0 %461
      %463 = vrot.lane.b32.xlu0 %v275, 111
      %v464 = vpop.permute.xlu0 %463
      %vm465 = vcmask 908288
      %v466 = vsel %vm465, %v460, %v462
      %v467 = vsel %vm465, %v462, %v464
      %v470 = vsel %vm457, 0.0, %v466
      %v471 = vsel %vm458, 0.0, %v467
      %s472 = scalar_lea.vmem %s1, 16
      %v473 = vld [vmem:[%s472] sm:$0xff]
      %v475 = vsel %vm308, %v473, 0
      %477 = vmatprep.subr.mxu0 %v471
      %478 = vmatpush1.msra.mxu0 %v470
      %479 = vmatprep.subr.mxu0 0.0
      %480 = vmatpush1.msra.mxu0 0.0
      %481 = vmatprep.subr.mxu0 0.0
      %482 = vmatpush1.msra.mxu0 0.0
      %483 = vmatprep.subr.mxu0 0.0
      %484 = vmatpush1.msra.mxu0 0.0
      %485 = vmatprep.subr.mxu0 0.0
      %486 = vmatpush1.msra.mxu0 0.0
      %487 = vmatprep.subr.mxu0 0.0
      %488 = vmatpush1.msra.mxu0 0.0
      %489 = vmatprep.subr.mxu0 0.0
      %490 = vmatpush1.msra.mxu0 0.0
      %491 = vmatprep.subr.mxu0 0.0
      %492 = vmatpush1.msra.mxu0 0.0
      %493 = vmatprep.subr.mxu0 0.0
      %494 = vmatpush1.msra.mxu0 0.0
      %495 = vmatprep.subr.mxu0 0.0
      %496 = vmatpush1.msra.mxu0 0.0
      %497 = vmatprep.subr.mxu0 0.0
      %498 = vmatpush1.msra.mxu0 0.0
      %499 = vmatprep.subr.mxu0 0.0
      %500 = vmatpush1.msra.mxu0 0.0
      %501 = vmatprep.subr.mxu0 0.0
      %502 = vmatpush1.msra.mxu0 0.0
      %503 = vmatprep.subr.mxu0 0.0
      %504 = vmatpush1.msra.mxu0 0.0
      %505 = vmatprep.subr.mxu0 0.0
      %506 = vmatpush1.msra.mxu0 0.0
      %507 = vmatprep.subr.mxu0 0.0
      %508 = vmatpush1.msra.mxu0 0.0
      %509 = vmatprep.subr.mxu0 0.0
      %510 = vmatpush1.msra.mxu0 0.0
      %511 = vmatprep.subr.mxu0 0.0
      %512 = vmatpush1.msra.mxu0 0.0
      %513 = vmatprep.subr.mxu0 0.0
      %514 = vmatpush1.msra.mxu0 0.0
      %515 = vmatprep.subr.mxu0 0.0
      %516 = vmatpush1.msra.mxu0 0.0
      %517 = vmatprep.subr.mxu0 0.0
      %518 = vmatpush1.msra.mxu0 0.0
      %519 = vmatprep.subr.mxu0 0.0
      %520 = vmatpush1.msra.mxu0 0.0
      %521 = vmatprep.subr.mxu0 0.0
      %522 = vmatpush1.msra.mxu0 0.0
      %523 = vmatprep.subr.mxu0 0.0
      %524 = vmatpush1.msra.mxu0 0.0
      %525 = vmatprep.subr.mxu0 0.0
      %526 = vmatpush1.msra.mxu0 0.0
      %527 = vmatprep.subr.mxu0 0.0
      %528 = vmatpush1.msra.mxu0 0.0
      %529 = vmatprep.subr.mxu0 0.0
      %530 = vmatpush1.msra.mxu0 0.0
      %531 = vmatprep.subr.mxu0 0.0
      %532 = vmatpush1.msra.mxu0 0.0
      %533 = vmatprep.subr.mxu0 0.0
      %534 = vmatpush1.msra.mxu0 0.0
      %535 = vmatprep.subr.mxu0 0.0
      %536 = vmatpush1.msra.mxu0 0.0
      %537 = vmatprep.subr.mxu0 0.0
      %538 = vmatpush1.msra.mxu0 0.0
      %539 = vmatprep.subr.mxu0 0.0
      %540 = vmatpush1.msra.mxu0 0.0
      %541 = vmatprep.mubr.f32.mxu0 0.0
      %542 = vmatmul.mubr.f32.gmra.mrb[0].mxu0 %v475
      %v543 = vpop.f32.mrb[0].mxu0
      %v544 = vadd.f32 0.0, %v543
      %v545 = vpop.f32.mrb[0].mxu0
      %v546 = vadd.f32 0.0, %v545
      %547 = vdwg.mxu0
      %v548 = vadd.f32 %v453, %v544
      %v549 = vadd.f32 %v455, %v546
      %550 = vrot.lane.b32.xlu0 %v273, 97
      %v551 = vpop.permute.xlu0 %550
      %552 = vrot.lane.b32.xlu0 %v274, 97
      %v553 = vpop.permute.xlu0 %552
      %554 = vrot.lane.b32.xlu0 %v275, 97
      %v555 = vpop.permute.xlu0 %554
      %vm556 = vcmask 793600
      %v557 = vsel %vm556, %v551, %v553
      %v558 = vsel %vm556, %v553, %v555
      %v561 = vsel %vm276, 0.0, %v557
      %v562 = vsel %vm277, 0.0, %v558
      %s563 = scalar_lea.vmem %s1, 24
      %v564 = vld [vmem:[%s563] sm:$0xff]
      %v566 = vsel %vm308, %v564, 0
      %568 = vmatprep.subr.mxu0 %v562
      %569 = vmatpush1.msra.mxu0 %v561
      %570 = vmatprep.subr.mxu0 0.0
      %571 = vmatpush1.msra.mxu0 0.0
      %572 = vmatprep.subr.mxu0 0.0
      %573 = vmatpush1.msra.mxu0 0.0
      %574 = vmatprep.subr.mxu0 0.0
      %575 = vmatpush1.msra.mxu0 0.0
      %576 = vmatprep.subr.mxu0 0.0
      %577 = vmatpush1.msra.mxu0 0.0
      %578 = vmatprep.subr.mxu0 0.0
      %579 = vmatpush1.msra.mxu0 0.0
      %580 = vmatprep.subr.mxu0 0.0
      %581 = vmatpush1.msra.mxu0 0.0
      %582 = vmatprep.subr.mxu0 0.0
      %583 = vmatpush1.msra.mxu0 0.0
      %584 = vmatprep.subr.mxu0 0.0
      %585 = vmatpush1.msra.mxu0 0.0
      %586 = vmatprep.subr.mxu0 0.0
      %587 = vmatpush1.msra.mxu0 0.0
      %588 = vmatprep.subr.mxu0 0.0
      %589 = vmatpush1.msra.mxu0 0.0
      %590 = vmatprep.subr.mxu0 0.0
      %591 = vmatpush1.msra.mxu0 0.0
      %592 = vmatprep.subr.mxu0 0.0
      %593 = vmatpush1.msra.mxu0 0.0
      %594 = vmatprep.subr.mxu0 0.0
      %595 = vmatpush1.msra.mxu0 0.0
      %596 = vmatprep.subr.mxu0 0.0
      %597 = vmatpush1.msra.mxu0 0.0
      %598 = vmatprep.subr.mxu0 0.0
      %599 = vmatpush1.msra.mxu0 0.0
      %600 = vmatprep.subr.mxu0 0.0
      %601 = vmatpush1.msra.mxu0 0.0
      %602 = vmatprep.subr.mxu0 0.0
      %603 = vmatpush1.msra.mxu0 0.0
      %604 = vmatprep.subr.mxu0 0.0
      %605 = vmatpush1.msra.mxu0 0.0
      %606 = vmatprep.subr.mxu0 0.0
      %607 = vmatpush1.msra.mxu0 0.0
      %608 = vmatprep.subr.mxu0 0.0
      %609 = vmatpush1.msra.mxu0 0.0
      %610 = vmatprep.subr.mxu0 0.0
      %611 = vmatpush1.msra.mxu0 0.0
      %612 = vmatprep.subr.mxu0 0.0
      %613 = vmatpush1.msra.mxu0 0.0
      %614 = vmatprep.subr.mxu0 0.0
      %615 = vmatpush1.msra.mxu0 0.0
      %616 = vmatprep.subr.mxu0 0.0
      %617 = vmatpush1.msra.mxu0 0.0
      %618 = vmatprep.subr.mxu0 0.0
      %619 = vmatpush1.msra.mxu0 0.0
      %620 = vmatprep.subr.mxu0 0.0
      %621 = vmatpush1.msra.mxu0 0.0
      %622 = vmatprep.subr.mxu0 0.0
      %623 = vmatpush1.msra.mxu0 0.0
      %624 = vmatprep.subr.mxu0 0.0
      %625 = vmatpush1.msra.mxu0 0.0
      %626 = vmatprep.subr.mxu0 0.0
      %627 = vmatpush1.msra.mxu0 0.0
      %628 = vmatprep.subr.mxu0 0.0
      %629 = vmatpush1.msra.mxu0 0.0
      %630 = vmatprep.subr.mxu0 0.0
      %631 = vmatpush1.msra.mxu0 0.0
      %632 = vmatprep.mubr.f32.mxu0 0.0
      %633 = vmatmul.mubr.f32.gmra.mrb[0].mxu0 %v566
      %v634 = vpop.f32.mrb[0].mxu0
      %v635 = vadd.f32 0.0, %v634
      %v636 = vpop.f32.mrb[0].mxu0
      %v637 = vadd.f32 0.0, %v636
      %638 = vdwg.mxu0
      %v639 = vadd.f32 %v548, %v635
      %v640 = vadd.f32 %v549, %v637
      %s641 = scalar_lea.vmem %s1, 32
      %v642 = vld [vmem:[%s641] sm:$0xff]
      %643 = vrot.lane.b32.xlu0 %v273, 96
      %v644 = vpop.permute.xlu0 %643
      %645 = vrot.lane.b32.xlu0 %v274, 96
      %v646 = vpop.permute.xlu0 %645
      %647 = vrot.lane.b32.xlu0 %v275, 96
      %v648 = vpop.permute.xlu0 %647
      %vm649 = vcmask 785408
      %v650 = vsel %vm649, %v644, %v646
      %v651 = vsel %vm649, %v646, %v648
      %v655 = vsel %vm308, %v642, 0
      %657 = vmatprep.subr.mxu0 %v651
      %658 = vmatpush1.msra.mxu0 %v650
      %659 = vmatprep.subr.mxu0 0.0
      %660 = vmatpush1.msra.mxu0 0.0
      %661 = vmatprep.subr.mxu0 0.0
      %662 = vmatpush1.msra.mxu0 0.0
      %663 = vmatprep.subr.mxu0 0.0
      %664 = vmatpush1.msra.mxu0 0.0
      %665 = vmatprep.subr.mxu0 0.0
      %666 = vmatpush1.msra.mxu0 0.0
      %667 = vmatprep.subr.mxu0 0.0
      %668 = vmatpush1.msra.mxu0 0.0
      %669 = vmatprep.subr.mxu0 0.0
      %670 = vmatpush1.msra.mxu0 0.0
      %671 = vmatprep.subr.mxu0 0.0
      %672 = vmatpush1.msra.mxu0 0.0
      %673 = vmatprep.subr.mxu0 0.0
      %674 = vmatpush1.msra.mxu0 0.0
      %675 = vmatprep.subr.mxu0 0.0
      %676 = vmatpush1.msra.mxu0 0.0
      %677 = vmatprep.subr.mxu0 0.0
      %678 = vmatpush1.msra.mxu0 0.0
      %679 = vmatprep.subr.mxu0 0.0
      %680 = vmatpush1.msra.mxu0 0.0
      %681 = vmatprep.subr.mxu0 0.0
      %682 = vmatpush1.msra.mxu0 0.0
      %683 = vmatprep.subr.mxu0 0.0
      %684 = vmatpush1.msra.mxu0 0.0
      %685 = vmatprep.subr.mxu0 0.0
      %686 = vmatpush1.msra.mxu0 0.0
      %687 = vmatprep.subr.mxu0 0.0
      %688 = vmatpush1.msra.mxu0 0.0
      %689 = vmatprep.subr.mxu0 0.0
      %690 = vmatpush1.msra.mxu0 0.0
      %691 = vmatprep.subr.mxu0 0.0
      %692 = vmatpush1.msra.mxu0 0.0
      %693 = vmatprep.subr.mxu0 0.0
      %694 = vmatpush1.msra.mxu0 0.0
      %695 = vmatprep.subr.mxu0 0.0
      %696 = vmatpush1.msra.mxu0 0.0
      %697 = vmatprep.subr.mxu0 0.0
      %698 = vmatpush1.msra.mxu0 0.0
      %699 = vmatprep.subr.mxu0 0.0
      %700 = vmatpush1.msra.mxu0 0.0
      %701 = vmatprep.subr.mxu0 0.0
      %702 = vmatpush1.msra.mxu0 0.0
      %703 = vmatprep.subr.mxu0 0.0
      %704 = vmatpush1.msra.mxu0 0.0
      %705 = vmatprep.subr.mxu0 0.0
      %706 = vmatpush1.msra.mxu0 0.0
      %707 = vmatprep.subr.mxu0 0.0
      %708 = vmatpush1.msra.mxu0 0.0
      %709 = vmatprep.subr.mxu0 0.0
      %710 = vmatpush1.msra.mxu0 0.0
      %711 = vmatprep.subr.mxu0 0.0
      %712 = vmatpush1.msra.mxu0 0.0
      %713 = vmatprep.subr.mxu0 0.0
      %714 = vmatpush1.msra.mxu0 0.0
      %715 = vmatprep.subr.mxu0 0.0
      %716 = vmatpush1.msra.mxu0 0.0
      %717 = vmatprep.subr.mxu0 0.0
      %718 = vmatpush1.msra.mxu0 0.0
      %719 = vmatprep.subr.mxu0 0.0
      %720 = vmatpush1.msra.mxu0 0.0
      %721 = vmatprep.mubr.f32.mxu0 0.0
      %722 = vmatmul.mubr.f32.gmra.mrb[0].mxu0 %v655
      %v723 = vpop.f32.mrb[0].mxu0
      %v724 = vadd.f32 0.0, %v723
      %v725 = vpop.f32.mrb[0].mxu0
      %v726 = vadd.f32 0.0, %v725
      %727 = vdwg.mxu0
      %v728 = vadd.f32 %v639, %v724
      %v729 = vadd.f32 %v640, %v726
      %730 = vrot.lane.b32.xlu0 %v273, 95
      %v731 = vpop.permute.xlu0 %730
      %732 = vrot.lane.b32.xlu0 %v274, 95
      %v733 = vpop.permute.xlu0 %732
      %734 = vrot.lane.b32.xlu0 %v275, 95
      %v735 = vpop.permute.xlu0 %734
      %vm736 = vcmask 777216
      %v737 = vsel %vm736, %v731, %v733
      %v738 = vsel %vm736, %v733, %v735
      %v741 = vsel %vm457, 0.0, %v737
      %v742 = vsel %vm458, 0.0, %v738
      %s743 = scalar_lea.vmem %s1, 40
      %v744 = vld [vmem:[%s743] sm:$0xff]
      %v746 = vsel %vm308, %v744, 0
      %748 = vmatprep.subr.mxu0 %v742
      %749 = vmatpush1.msra.mxu0 %v741
      %750 = vmatprep.subr.mxu0 0.0
      %751 = vmatpush1.msra.mxu0 0.0
      %752 = vmatprep.subr.mxu0 0.0
      %753 = vmatpush1.msra.mxu0 0.0
      %754 = vmatprep.subr.mxu0 0.0
      %755 = vmatpush1.msra.mxu0 0.0
      %756 = vmatprep.subr.mxu0 0.0
      %757 = vmatpush1.msra.mxu0 0.0
      %758 = vmatprep.subr.mxu0 0.0
      %759 = vmatpush1.msra.mxu0 0.0
      %760 = vmatprep.subr.mxu0 0.0
      %761 = vmatpush1.msra.mxu0 0.0
      %762 = vmatprep.subr.mxu0 0.0
      %763 = vmatpush1.msra.mxu0 0.0
      %764 = vmatprep.subr.mxu0 0.0
      %765 = vmatpush1.msra.mxu0 0.0
      %766 = vmatprep.subr.mxu0 0.0
      %767 = vmatpush1.msra.mxu0 0.0
      %768 = vmatprep.subr.mxu0 0.0
      %769 = vmatpush1.msra.mxu0 0.0
      %770 = vmatprep.subr.mxu0 0.0
      %771 = vmatpush1.msra.mxu0 0.0
      %772 = vmatprep.subr.mxu0 0.0
      %773 = vmatpush1.msra.mxu0 0.0
      %774 = vmatprep.subr.mxu0 0.0
      %775 = vmatpush1.msra.mxu0 0.0
      %776 = vmatprep.subr.mxu0 0.0
      %777 = vmatpush1.msra.mxu0 0.0
      %778 = vmatprep.subr.mxu0 0.0
      %779 = vmatpush1.msra.mxu0 0.0
      %780 = vmatprep.subr.mxu0 0.0
      %781 = vmatpush1.msra.mxu0 0.0
      %782 = vmatprep.subr.mxu0 0.0
      %783 = vmatpush1.msra.mxu0 0.0
      %784 = vmatprep.subr.mxu0 0.0
      %785 = vmatpush1.msra.mxu0 0.0
      %786 = vmatprep.subr.mxu0 0.0
      %787 = vmatpush1.msra.mxu0 0.0
      %788 = vmatprep.subr.mxu0 0.0
      %789 = vmatpush1.msra.mxu0 0.0
      %790 = vmatprep.subr.mxu0 0.0
      %791 = vmatpush1.msra.mxu0 0.0
      %792 = vmatprep.subr.mxu0 0.0
      %793 = vmatpush1.msra.mxu0 0.0
      %794 = vmatprep.subr.mxu0 0.0
      %795 = vmatpush1.msra.mxu0 0.0
      %796 = vmatprep.subr.mxu0 0.0
      %797 = vmatpush1.msra.mxu0 0.0
      %798 = vmatprep.subr.mxu0 0.0
      %799 = vmatpush1.msra.mxu0 0.0
      %800 = vmatprep.subr.mxu0 0.0
      %801 = vmatpush1.msra.mxu0 0.0
      %802 = vmatprep.subr.mxu0 0.0
      %803 = vmatpush1.msra.mxu0 0.0
      %804 = vmatprep.subr.mxu0 0.0
      %805 = vmatpush1.msra.mxu0 0.0
      %806 = vmatprep.subr.mxu0 0.0
      %807 = vmatpush1.msra.mxu0 0.0
      %808 = vmatprep.subr.mxu0 0.0
      %809 = vmatpush1.msra.mxu0 0.0
      %810 = vmatprep.subr.mxu0 0.0
      %811 = vmatpush1.msra.mxu0 0.0
      %812 = vmatprep.mubr.f32.mxu0 0.0
      %813 = vmatmul.mubr.f32.gmra.mrb[0].mxu0 %v746
      %v814 = vpop.f32.mrb[0].mxu0
      %v815 = vadd.f32 0.0, %v814
      %v816 = vpop.f32.mrb[0].mxu0
      %v817 = vadd.f32 0.0, %v816
      %818 = vdwg.mxu0
      %v819 = vadd.f32 %v728, %v815
      %v820 = vadd.f32 %v729, %v817
      %821 = vrot.lane.b32.xlu0 %v273, 81
      %v822 = vpop.permute.xlu0 %821
      %823 = vrot.lane.b32.xlu0 %v274, 81
      %v824 = vpop.permute.xlu0 %823
      %825 = vrot.lane.b32.xlu0 %v275, 81
      %v826 = vpop.permute.xlu0 %825
      %vm827 = vcmask 662528
      %v828 = vsel %vm827, %v822, %v824
      %v829 = vsel %vm827, %v824, %v826
      %v832 = vsel %vm276, 0.0, %v828
      %v833 = vsel %vm277, 0.0, %v829
      %s834 = scalar_lea.vmem %s1, 48
      %v835 = vld [vmem:[%s834] sm:$0xff]
      %v837 = vsel %vm308, %v835, 0
      %839 = vmatprep.subr.mxu0 %v833
      %840 = vmatpush1.msra.mxu0 %v832
      %841 = vmatprep.subr.mxu0 0.0
      %842 = vmatpush1.msra.mxu0 0.0
      %843 = vmatprep.subr.mxu0 0.0
      %844 = vmatpush1.msra.mxu0 0.0
      %845 = vmatprep.subr.mxu0 0.0
      %846 = vmatpush1.msra.mxu0 0.0
      %847 = vmatprep.subr.mxu0 0.0
      %848 = vmatpush1.msra.mxu0 0.0
      %849 = vmatprep.subr.mxu0 0.0
      %850 = vmatpush1.msra.mxu0 0.0
      %851 = vmatprep.subr.mxu0 0.0
      %852 = vmatpush1.msra.mxu0 0.0
      %853 = vmatprep.subr.mxu0 0.0
      %854 = vmatpush1.msra.mxu0 0.0
      %855 = vmatprep.subr.mxu0 0.0
      %856 = vmatpush1.msra.mxu0 0.0
      %857 = vmatprep.subr.mxu0 0.0
      %858 = vmatpush1.msra.mxu0 0.0
      %859 = vmatprep.subr.mxu0 0.0
      %860 = vmatpush1.msra.mxu0 0.0
      %861 = vmatprep.subr.mxu0 0.0
      %862 = vmatpush1.msra.mxu0 0.0
      %863 = vmatprep.subr.mxu0 0.0
      %864 = vmatpush1.msra.mxu0 0.0
      %865 = vmatprep.subr.mxu0 0.0
      %866 = vmatpush1.msra.mxu0 0.0
      %867 = vmatprep.subr.mxu0 0.0
      %868 = vmatpush1.msra.mxu0 0.0
      %869 = vmatprep.subr.mxu0 0.0
      %870 = vmatpush1.msra.mxu0 0.0
      %871 = vmatprep.subr.mxu0 0.0
      %872 = vmatpush1.msra.mxu0 0.0
      %873 = vmatprep.subr.mxu0 0.0
      %874 = vmatpush1.msra.mxu0 0.0
      %875 = vmatprep.subr.mxu0 0.0
      %876 = vmatpush1.msra.mxu0 0.0
      %877 = vmatprep.subr.mxu0 0.0
      %878 = vmatpush1.msra.mxu0 0.0
      %879 = vmatprep.subr.mxu0 0.0
      %880 = vmatpush1.msra.mxu0 0.0
      %881 = vmatprep.subr.mxu0 0.0
      %882 = vmatpush1.msra.mxu0 0.0
      %883 = vmatprep.subr.mxu0 0.0
      %884 = vmatpush1.msra.mxu0 0.0
      %885 = vmatprep.subr.mxu0 0.0
      %886 = vmatpush1.msra.mxu0 0.0
      %887 = vmatprep.subr.mxu0 0.0
      %888 = vmatpush1.msra.mxu0 0.0
      %889 = vmatprep.subr.mxu0 0.0
      %890 = vmatpush1.msra.mxu0 0.0
      %891 = vmatprep.subr.mxu0 0.0
      %892 = vmatpush1.msra.mxu0 0.0
      %893 = vmatprep.subr.mxu0 0.0
      %894 = vmatpush1.msra.mxu0 0.0
      %895 = vmatprep.subr.mxu0 0.0
      %896 = vmatpush1.msra.mxu0 0.0
      %897 = vmatprep.subr.mxu0 0.0
      %898 = vmatpush1.msra.mxu0 0.0
      %899 = vmatprep.subr.mxu0 0.0
      %900 = vmatpush1.msra.mxu0 0.0
      %901 = vmatprep.subr.mxu0 0.0
      %902 = vmatpush1.msra.mxu0 0.0
      %903 = vmatprep.mubr.f32.mxu0 0.0
      %904 = vmatmul.mubr.f32.gmra.mrb[0].mxu0 %v837
      %v905 = vpop.f32.mrb[0].mxu0
      %v906 = vadd.f32 0.0, %v905
      %v907 = vpop.f32.mrb[0].mxu0
      %v908 = vadd.f32 0.0, %v907
      %909 = vdwg.mxu0
      %v910 = vadd.f32 %v819, %v906
      %v911 = vadd.f32 %v820, %v908
      %s912 = scalar_lea.vmem %s1, 56
      %v913 = vld [vmem:[%s912] sm:$0xff]
      %914 = vrot.lane.b32.xlu0 %v273, 80
      %v915 = vpop.permute.xlu0 %914
      %916 = vrot.lane.b32.xlu0 %v274, 80
      %v917 = vpop.permute.xlu0 %916
      %918 = vrot.lane.b32.xlu0 %v275, 80
      %v919 = vpop.permute.xlu0 %918
      %vm920 = vcmask 654336
      %v921 = vsel %vm920, %v915, %v917
      %v922 = vsel %vm920, %v917, %v919
      %v926 = vsel %vm308, %v913, 0
      %928 = vmatprep.subr.mxu0 %v922
      %929 = vmatpush1.msra.mxu0 %v921
      %930 = vmatprep.subr.mxu0 0.0
      %931 = vmatpush1.msra.mxu0 0.0
      %932 = vmatprep.subr.mxu0 0.0
      %933 = vmatpush1.msra.mxu0 0.0
      %934 = vmatprep.subr.mxu0 0.0
      %935 = vmatpush1.msra.mxu0 0.0
      %936 = vmatprep.subr.mxu0 0.0
      %937 = vmatpush1.msra.mxu0 0.0
      %938 = vmatprep.subr.mxu0 0.0
      %939 = vmatpush1.msra.mxu0 0.0
      %940 = vmatprep.subr.mxu0 0.0
      %941 = vmatpush1.msra.mxu0 0.0
      %942 = vmatprep.subr.mxu0 0.0
      %943 = vmatpush1.msra.mxu0 0.0
      %944 = vmatprep.subr.mxu0 0.0
      %945 = vmatpush1.msra.mxu0 0.0
      %946 = vmatprep.subr.mxu0 0.0
      %947 = vmatpush1.msra.mxu0 0.0
      %948 = vmatprep.subr.mxu0 0.0
      %949 = vmatpush1.msra.mxu0 0.0
      %950 = vmatprep.subr.mxu0 0.0
      %951 = vmatpush1.msra.mxu0 0.0
      %952 = vmatprep.subr.mxu0 0.0
      %953 = vmatpush1.msra.mxu0 0.0
      %954 = vmatprep.subr.mxu0 0.0
      %955 = vmatpush1.msra.mxu0 0.0
      %956 = vmatprep.subr.mxu0 0.0
      %957 = vmatpush1.msra.mxu0 0.0
      %958 = vmatprep.subr.mxu0 0.0
      %959 = vmatpush1.msra.mxu0 0.0
      %960 = vmatprep.subr.mxu0 0.0
      %961 = vmatpush1.msra.mxu0 0.0
      %962 = vmatprep.subr.mxu0 0.0
      %963 = vmatpush1.msra.mxu0 0.0
      %964 = vmatprep.subr.mxu0 0.0
      %965 = vmatpush1.msra.mxu0 0.0
      %966 = vmatprep.subr.mxu0 0.0
      %967 = vmatpush1.msra.mxu0 0.0
      %968 = vmatprep.subr.mxu0 0.0
      %969 = vmatpush1.msra.mxu0 0.0
      %970 = vmatprep.subr.mxu0 0.0
      %971 = vmatpush1.msra.mxu0 0.0
      %972 = vmatprep.subr.mxu0 0.0
      %973 = vmatpush1.msra.mxu0 0.0
      %974 = vmatprep.subr.mxu0 0.0
      %975 = vmatpush1.msra.mxu0 0.0
      %976 = vmatprep.subr.mxu0 0.0
      %977 = vmatpush1.msra.mxu0 0.0
      %978 = vmatprep.subr.mxu0 0.0
      %979 = vmatpush1.msra.mxu0 0.0
      %980 = vmatprep.subr.mxu0 0.0
      %981 = vmatpush1.msra.mxu0 0.0
      %982 = vmatprep.subr.mxu0 0.0
      %983 = vmatpush1.msra.mxu0 0.0
      %984 = vmatprep.subr.mxu0 0.0
      %985 = vmatpush1.msra.mxu0 0.0
      %986 = vmatprep.subr.mxu0 0.0
      %987 = vmatpush1.msra.mxu0 0.0
      %988 = vmatprep.subr.mxu0 0.0
      %989 = vmatpush1.msra.mxu0 0.0
      %990 = vmatprep.subr.mxu0 0.0
      %991 = vmatpush1.msra.mxu0 0.0
      %992 = vmatprep.mubr.f32.mxu0 0.0
      %993 = vmatmul.mubr.f32.gmra.mrb[0].mxu0 %v926
      %v994 = vpop.f32.mrb[0].mxu0
      %v995 = vadd.f32 0.0, %v994
      %v996 = vpop.f32.mrb[0].mxu0
      %v997 = vadd.f32 0.0, %v996
      %998 = vdwg.mxu0
      %v999 = vadd.f32 %v910, %v995
      %v1000 = vadd.f32 %v911, %v997
      %1001 = vrot.lane.b32.xlu0 %v273, 79
      %v1002 = vpop.permute.xlu0 %1001
      %1003 = vrot.lane.b32.xlu0 %v274, 79
      %v1004 = vpop.permute.xlu0 %1003
      %1005 = vrot.lane.b32.xlu0 %v275, 79
      %v1006 = vpop.permute.xlu0 %1005
      %vm1007 = vcmask 646144
      %v1008 = vsel %vm1007, %v1002, %v1004
      %v1009 = vsel %vm1007, %v1004, %v1006
      %v1012 = vsel %vm457, 0.0, %v1008
      %v1013 = vsel %vm458, 0.0, %v1009
      %s1014 = scalar_lea.vmem %s1, 64
      %v1015 = vld [vmem:[%s1014] sm:$0xff]
      %v1017 = vsel %vm308, %v1015, 0
      %1019 = vmatprep.subr.mxu0 %v1013
      %1020 = vmatpush1.msra.mxu0 %v1012
      %1021 = vmatprep.subr.mxu0 0.0
      %1022 = vmatpush1.msra.mxu0 0.0
      %1023 = vmatprep.subr.mxu0 0.0
      %1024 = vmatpush1.msra.mxu0 0.0
      %1025 = vmatprep.subr.mxu0 0.0
      %1026 = vmatpush1.msra.mxu0 0.0
      %1027 = vmatprep.subr.mxu0 0.0
      %1028 = vmatpush1.msra.mxu0 0.0
      %1029 = vmatprep.subr.mxu0 0.0
      %1030 = vmatpush1.msra.mxu0 0.0
      %1031 = vmatprep.subr.mxu0 0.0
      %1032 = vmatpush1.msra.mxu0 0.0
      %1033 = vmatprep.subr.mxu0 0.0
      %1034 = vmatpush1.msra.mxu0 0.0
      %1035 = vmatprep.subr.mxu0 0.0
      %1036 = vmatpush1.msra.mxu0 0.0
      %1037 = vmatprep.subr.mxu0 0.0
      %1038 = vmatpush1.msra.mxu0 0.0
      %1039 = vmatprep.subr.mxu0 0.0
      %1040 = vmatpush1.msra.mxu0 0.0
      %1041 = vmatprep.subr.mxu0 0.0
      %1042 = vmatpush1.msra.mxu0 0.0
      %1043 = vmatprep.subr.mxu0 0.0
      %1044 = vmatpush1.msra.mxu0 0.0
      %1045 = vmatprep.subr.mxu0 0.0
      %1046 = vmatpush1.msra.mxu0 0.0
      %1047 = vmatprep.subr.mxu0 0.0
      %1048 = vmatpush1.msra.mxu0 0.0
      %1049 = vmatprep.subr.mxu0 0.0
      %1050 = vmatpush1.msra.mxu0 0.0
      %1051 = vmatprep.subr.mxu0 0.0
      %1052 = vmatpush1.msra.mxu0 0.0
      %1053 = vmatprep.subr.mxu0 0.0
      %1054 = vmatpush1.msra.mxu0 0.0
      %1055 = vmatprep.subr.mxu0 0.0
      %1056 = vmatpush1.msra.mxu0 0.0
      %1057 = vmatprep.subr.mxu0 0.0
      %1058 = vmatpush1.msra.mxu0 0.0
      %1059 = vmatprep.subr.mxu0 0.0
      %1060 = vmatpush1.msra.mxu0 0.0
      %1061 = vmatprep.subr.mxu0 0.0
      %1062 = vmatpush1.msra.mxu0 0.0
      %1063 = vmatprep.subr.mxu0 0.0
      %1064 = vmatpush1.msra.mxu0 0.0
      %1065 = vmatprep.subr.mxu0 0.0
      %1066 = vmatpush1.msra.mxu0 0.0
      %1067 = vmatprep.subr.mxu0 0.0
      %1068 = vmatpush1.msra.mxu0 0.0
      %1069 = vmatprep.subr.mxu0 0.0
      %1070 = vmatpush1.msra.mxu0 0.0
      %1071 = vmatprep.subr.mxu0 0.0
      %1072 = vmatpush1.msra.mxu0 0.0
      %1073 = vmatprep.subr.mxu0 0.0
      %1074 = vmatpush1.msra.mxu0 0.0
      %1075 = vmatprep.subr.mxu0 0.0
      %1076 = vmatpush1.msra.mxu0 0.0
      %1077 = vmatprep.subr.mxu0 0.0
      %1078 = vmatpush1.msra.mxu0 0.0
      %1079 = vmatprep.subr.mxu0 0.0
      %1080 = vmatpush1.msra.mxu0 0.0
      %1081 = vmatprep.subr.mxu0 0.0
      %1082 = vmatpush1.msra.mxu0 0.0
      %1083 = vmatprep.mubr.f32.mxu0 0.0
      %1084 = vmatmul.mubr.f32.gmra.mrb[0].mxu0 %v1017
      %v1085 = vpop.f32.mrb[0].mxu0
      %v1086 = vadd.f32 0.0, %v1085
      %v1087 = vpop.f32.mrb[0].mxu0
      %v1088 = vadd.f32 0.0, %v1087
      %1089 = vdwg.mxu0
      %v1090 = vadd.f32 %v999, %v1086
      %v1091 = vadd.f32 %v1000, %v1088
      %v1092 = vld [vmem:[%s2] sm:$0xff]
      %1094 = vset.pattern.permute.xlu0 0
      %1095 = vperm.xlu0 %1094, %v1092
      %v1096 = vpop.permute.xlu0 %1095
      %v1098 = vadd.f32 %v1090, %v1096
      %v1099 = vadd.f32 %v1091, %v1096
      %1100 = vst [vmem:[%s237] sm:$0xff] %v1098
      %1101 = vst [vmem:[%s237 + $0x8] sm:$0xff] %v1099
      %v1102 = vadd.f32 %v1098, %v1099
      %1103 = vadd.xlane.f32.xlu0 %v1102
      %v1104 = vpop.xlane.xlu0 %1103
      %vm1105 = vcmask 7168
      %1106 = vst.msk [vmem:[%s241] sm:$0xff] %vm1105, %v1104
      %v1107 = vmul.f32 %v1098, %v1098
      %v1108 = vmul.f32 %v1099, %v1099
      %v1109 = vadd.f32 %v1107, %v1108
      %1110 = vadd.xlane.f32.xlu0 %v1109
      %v1111 = vpop.xlane.xlu0 %1110
      %1112 = vst.msk [vmem:[%s245] sm:$0xff] %vm1105, %v1111
      %p1113 = scmp.lt.s32.totalorder %s17, 1
      %s1114 = scalar_select %p1113, %s17, 1
      %s1115 = smul.addr %s1114, 2
      %s1116 = smul.addr %s1115, 8
      %s1117 = scalar_lea.vmem %s3, %s1116
      %p1118 = scmp.lt.s32.totalorder %s17, 1
      %s1119 = scalar_select %p1118, %s17, 1
      %s1120 = smul.addr %s1119, 8
      %s1121 = scalar_lea.vmem %s4, %s1120
      %p1122 = scmp.lt.s32.totalorder %s17, 1
      %s1123 = scalar_select %p1122, %s17, 1
      %s1124 = smul.addr %s1123, 8
      %s1125 = scalar_lea.vmem %s5, %s1124
      // Predicated region
      $region33: #{conv_block_forward.6} parent=31 // pred_check
        %p1126 = pneg %p103
      $region34: #{conv_block_forward.6} parent=31 // pred_check_branch
        %1128 = sbr.rel (%p1126) target = $region36
      $region35: #{conv_block_forward.6} parent=31 // pred_region
        _
      $region36: #{conv_block_forward.6} parent=31 // pred_fallthru
        _
      // Predicated region
      $region37: #{conv_block_forward.6} parent=31 // pred_check
        %p1129 = pneg %p129
      $region38: #{conv_block_forward.6} parent=31 // pred_check_branch
        %1131 = sbr.rel (%p1129) target = $region40
      $region39: #{conv_block_forward.6} parent=31 // pred_region
        _
      $region40: #{conv_block_forward.6} parent=31 // pred_fallthru
        _
      // Predicated region
      $region41: #{conv_block_forward.6} parent=31 // pred_check
        %p1132 = pneg %p155
      $region42: #{conv_block_forward.6} parent=31 // pred_check_branch
        %1134 = sbr.rel (%p1132) target = $region44
      $region43: #{conv_block_forward.6} parent=31 // pred_region
        _
      $region44: #{conv_block_forward.6} parent=31 // pred_fallthru
        _
    $region32: #{conv_block_forward.6} parent=5 // pred_fallthru
      _
    %p1135 = scmp.le.s32.totalorder 2, %s12
    // Predicated region
    $region45: #{conv_block_forward.6} parent=5 // pred_check
      %p1136 = pneg %p1135
    $region46: #{conv_block_forward.6} parent=5 // pred_check_branch
      %1138 = sbr.rel (%p1136) target = $region48
    $region47: #{conv_block_forward.6} parent=5 // pred_region
      %s1139 = ssub.s32 %s12, 2
      // Predicated region
      $region49: #{conv_block_forward.6} parent=47 // pred_check
        %p1140 = pneg %p109
      $region50: #{conv_block_forward.6} parent=47 // pred_check_branch
        %1142 = sbr.rel (%p1140) target = $region52
      $region51: #{conv_block_forward.6} parent=47 // pred_region
        %p1143 = scmp.lt.s32.totalorder %s18, 1
        %s1144 = scalar_select %p1143, %s18, 1
        %s1145 = smul.addr %s1144, 2
        %s1146 = smul.addr %s1145, 8
        %s1147 = scalar_lea.vmem %s3, %s1146
      $region52: #{conv_block_forward.6} parent=47 // pred_fallthru
        _
      // Predicated region
      $region53: #{conv_block_forward.6} parent=47 // pred_check
        %p1148 = pneg %p135
      $region54: #{conv_block_forward.6} parent=47 // pred_check_branch
        %1150 = sbr.rel (%p1148) target = $region56
      $region55: #{conv_block_forward.6} parent=47 // pred_region
        %p1151 = scmp.lt.s32.totalorder %s18, 1
        %s1152 = scalar_select %p1151, %s18, 1
        %s1153 = smul.addr %s1152, 8
        %s1154 = scalar_lea.vmem %s4, %s1153
      $region56: #{conv_block_forward.6} parent=47 // pred_fallthru
        _
      // Predicated region
      $region57: #{conv_block_forward.6} parent=47 // pred_check
        %p1155 = pneg %p161
      $region58: #{conv_block_forward.6} parent=47 // pred_check_branch
        %1157 = sbr.rel (%p1155) target = $region60
      $region59: #{conv_block_forward.6} parent=47 // pred_region
        %p1158 = scmp.lt.s32.totalorder %s18, 1
        %s1159 = scalar_select %p1158, %s18, 1
        %s1160 = smul.addr %s1159, 8
        %s1161 = scalar_lea.vmem %s5, %s1160
      $region60: #{conv_block_forward.6} parent=47 // pred_fallthru
        _
    $region48: #{conv_block_forward.6} parent=5 // pred_fallthru
      _
  $region6: #{conv_block_forward.6} parent=0 // loop_footer
    %s16 = sadd.s32 1, %s12
  $region7: #{conv_block_forward.6} parent=0 // loop_footer_branch
    %11 = sbr.rel target = $region3
  $region8: #{conv_block_forward.6} parent=0 // loop_exit
    _

// kernel: conv_block_forward.4
$region0: #{conv_block_forward.4}
  #allocation0 [shape = 'u32[]', space=smem, size = 0x4, offset = 0x4, fixed_abs, tag = 'smem constant byte address 0x4 - core index']
  #allocation1 [shape = 'u32[144,128]{1,0:T(1,128)}', space=vmem, size = 0x12000, scoped, tag = 'internal scratch']
  %s0 = inlined_call_operand.vmem [shape: f32[2,4,320], index: 0, kind: input, shape index: {}]
  %s1 = inlined_call_operand.vmem [shape: f32[9,8,4], index: 1, kind: input, shape index: {}]
  %s2 = inlined_call_operand.vmem [shape: f32[8,1], index: 2, kind: input, shape index: {}]
  %s3 = inlined_call_operand.vmem [shape: f32[2,8,256], index: 3, kind: output, shape index: {0}]
  %s4 = inlined_call_operand.vmem [shape: f32[2,8,1], index: 4, kind: output, shape index: {1}]
  %s5 = inlined_call_operand.vmem [shape: f32[2,8,1], index: 5, kind: output, shape index: {2}]
  %6 = xla_tuple %s3, %s4, %s5
  %s7 = sld [smem:[#allocation0]]
  $region61: #{conv_block_forward.4} parent=0
    _
  %s9 = ssub.s32 1, %s7
  %s10 = scalar_select 0, %s9, %s7
  loop: start=0, step=1, limit=4
  $region2: #{conv_block_forward.4} parent=0 // loop_pre_header
    _
  $region3: #{conv_block_forward.4} parent=0 // loop_header
    %s12 = sphi 0, %s16
    %p13 = scmp.ge.s32.totalorder %s12, 4
    %s22 = sphi 0, %s24
    %s25 = sphi 0, %s22
    %s26 = sphi 0, %s25
    %s42 = sphi 0, %s26
    %s46 = sphi 0, %s46
    %s48 = sphi 0, %s46
    %s49 = sphi 0, %s48
    %s63 = sphi 0, %s49
    %s67 = sphi 0, %s67
    %s69 = sphi 0, %s67
    %s70 = sphi 0, %s69
    %s84 = sphi 0, %s70
    %s90 = sphi 0, %s92
    %s93 = sphi 0, %s90
    %s94 = sphi 0, %s93
    %s110 = sphi 0, %s94
    %s116 = sphi 0, %s118
    %s119 = sphi 0, %s116
    %s120 = sphi 0, %s119
    %s136 = sphi 0, %s120
    %s142 = sphi 0, %s144
    %s145 = sphi 0, %s142
    %s146 = sphi 0, %s145
    %s162 = sphi 0, %s146
  $region4: #{conv_block_forward.4} parent=0 // loop_header_branch
    %15 = sbr.rel (%p13) target = $region8
  $region5: #{conv_block_forward.4} parent=0 // loop_body
    %s17 = ssub.s32 %s12, 1
    %s18 = ssub.s32 %s12, 2
    %s19 = sadd.s32 %s12, 1
    %s20 = ssub.s32 %s12, %s19
    %p21 = scmp.eq.s32.totalorder %s20, 0
    %s23 = sadd.s32 %s22, 1
    %s24 = scalar_select %p21, %s22, %s23
    %p27 = pneg %p21
    %p28 = scmp.eq.s32.totalorder %s12, 1
    %p29 = por %p27, %p28
    %p30 = scmp.ne.s32.totalorder %s22, %s25
    %p31 = scmp.eq.s32.totalorder %s12, 0
    %p32 = por %p30, %p31
    %p33 = scmp.ne.s32.totalorder %s22, %s25
    %p34 = scmp.eq.s32.totalorder %s17, 1
    %p35 = por %p33, %p34
    %p36 = scmp.ne.s32.totalorder %s25, %s26
    %p37 = scmp.eq.s32.totalorder %s17, 0
    %p38 = por %p36, %p37
    %p39 = scmp.ne.s32.totalorder %s25, %s26
    %p40 = scmp.eq.s32.totalorder %s18, 1
    %p41 = por %p39, %p40
    %p43 = scmp.ne.s32.totalorder %s26, %s42
    %p44 = scmp.eq.s32.totalorder %s18, 0
    %p45 = por %p43, %p44
    %s47 = sadd.s32 %s46, 1
    %p50 = scmp.eq.s32.totalorder %s12, 1
    %p51 = scmp.ne.s32.totalorder %s46, %s48
    %p52 = scmp.eq.s32.totalorder %s12, 0
    %p53 = por %p51, %p52
    %p54 = scmp.ne.s32.totalorder %s46, %s48
    %p55 = scmp.eq.s32.totalorder %s17, 1
    %p56 = por %p54, %p55
    %p57 = scmp.ne.s32.totalorder %s48, %s49
    %p58 = scmp.eq.s32.totalorder %s17, 0
    %p59 = por %p57, %p58
    %p60 = scmp.ne.s32.totalorder %s48, %s49
    %p61 = scmp.eq.s32.totalorder %s18, 1
    %p62 = por %p60, %p61
    %p64 = scmp.ne.s32.totalorder %s49, %s63
    %p65 = scmp.eq.s32.totalorder %s18, 0
    %p66 = por %p64, %p65
    %s68 = sadd.s32 %s67, 1
    %p71 = scmp.eq.s32.totalorder %s12, 1
    %p72 = scmp.ne.s32.totalorder %s67, %s69
    %p73 = scmp.eq.s32.totalorder %s12, 0
    %p74 = por %p72, %p73
    %p75 = scmp.ne.s32.totalorder %s67, %s69
    %p76 = scmp.eq.s32.totalorder %s17, 1
    %p77 = por %p75, %p76
    %p78 = scmp.ne.s32.totalorder %s69, %s70
    %p79 = scmp.eq.s32.totalorder %s17, 0
    %p80 = por %p78, %p79
    %p81 = scmp.ne.s32.totalorder %s69, %s70
    %p82 = scmp.eq.s32.totalorder %s18, 1
    %p83 = por %p81, %p82
    %p85 = scmp.ne.s32.totalorder %s70, %s84
    %p86 = scmp.eq.s32.totalorder %s18, 0
    %p87 = por %p85, %p86
    %s88 = ssub.s32 %s12, %s19
    %p89 = scmp.eq.s32.totalorder %s88, 0
    %s91 = sadd.s32 %s90, 1
    %s92 = scalar_select %p89, %s90, %s91
    %p95 = pneg %p89
    %p96 = scmp.eq.s32.totalorder %s12, 1
    %p97 = por %p95, %p96
    %p98 = scmp.ne.s32.totalorder %s90, %s93
    %p99 = scmp.eq.s32.totalorder %s12, 0
    %p100 = por %p98, %p99
    %p101 = scmp.ne.s32.totalorder %s90, %s93
    %p102 = scmp.eq.s32.totalorder %s17, 1
    %p103 = por %p101, %p102
    %p104 = scmp.ne.s32.totalorder %s93, %s94
    %p105 = scmp.eq.s32.totalorder %s17, 0
    %p106 = por %p104, %p105
    %p107 = scmp.ne.s32.totalorder %s93, %s94
    %p108 = scmp.eq.s32.totalorder %s18, 1
    %p109 = por %p107, %p108
    %p111 = scmp.ne.s32.totalorder %s94, %s110
    %p112 = scmp.eq.s32.totalorder %s18, 0
    %p113 = por %p111, %p112
    %s114 = ssub.s32 %s12, %s19
    %p115 = scmp.eq.s32.totalorder %s114, 0
    %s117 = sadd.s32 %s116, 1
    %s118 = scalar_select %p115, %s116, %s117
    %p121 = pneg %p115
    %p122 = scmp.eq.s32.totalorder %s12, 1
    %p123 = por %p121, %p122
    %p124 = scmp.ne.s32.totalorder %s116, %s119
    %p125 = scmp.eq.s32.totalorder %s12, 0
    %p126 = por %p124, %p125
    %p127 = scmp.ne.s32.totalorder %s116, %s119
    %p128 = scmp.eq.s32.totalorder %s17, 1
    %p129 = por %p127, %p128
    %p130 = scmp.ne.s32.totalorder %s119, %s120
    %p131 = scmp.eq.s32.totalorder %s17, 0
    %p132 = por %p130, %p131
    %p133 = scmp.ne.s32.totalorder %s119, %s120
    %p134 = scmp.eq.s32.totalorder %s18, 1
    %p135 = por %p133, %p134
    %p137 = scmp.ne.s32.totalorder %s120, %s136
    %p138 = scmp.eq.s32.totalorder %s18, 0
    %p139 = por %p137, %p138
    %s140 = ssub.s32 %s12, %s19
    %p141 = scmp.eq.s32.totalorder %s140, 0
    %s143 = sadd.s32 %s142, 1
    %s144 = scalar_select %p141, %s142, %s143
    %p147 = pneg %p141
    %p148 = scmp.eq.s32.totalorder %s12, 1
    %p149 = por %p147, %p148
    %p150 = scmp.ne.s32.totalorder %s142, %s145
    %p151 = scmp.eq.s32.totalorder %s12, 0
    %p152 = por %p150, %p151
    %p153 = scmp.ne.s32.totalorder %s142, %s145
    %p154 = scmp.eq.s32.totalorder %s17, 1
    %p155 = por %p153, %p154
    %p156 = scmp.ne.s32.totalorder %s145, %s146
    %p157 = scmp.eq.s32.totalorder %s17, 0
    %p158 = por %p156, %p157
    %p159 = scmp.ne.s32.totalorder %s145, %s146
    %p160 = scmp.eq.s32.totalorder %s18, 1
    %p161 = por %p159, %p160
    %p163 = scmp.ne.s32.totalorder %s146, %s162
    %p164 = scmp.eq.s32.totalorder %s18, 0
    %p165 = por %p163, %p164
    %p166 = scmp.le.s32.totalorder 1, %s12
    %p167 = scmp.lt.s32.totalorder %s12, 3
    %p168 = pnand %p166, %p167
    %p169 = pneg %p168
    // Predicated region
    $region9: #{conv_block_forward.4} parent=5 // pred_check
      _
    $region10: #{conv_block_forward.4} parent=5 // pred_check_branch
      %171 = sbr.rel (%p168) target = $region12
    $region11: #{conv_block_forward.4} parent=5 // pred_region
      %s172 = ssub.s32 %s12, 1
      // Predicated region
      $region13: #{conv_block_forward.4} parent=11 // pred_check
        %p173 = pneg %p59
      $region14: #{conv_block_forward.4} parent=11 // pred_check_branch
        %175 = sbr.rel (%p173) target = $region16
      $region15: #{conv_block_forward.4} parent=11 // pred_region
        _
      $region16: #{conv_block_forward.4} parent=11 // pred_fallthru
        _
      // Predicated region
      $region17: #{conv_block_forward.4} parent=11 // pred_check
        %p176 = pneg %p80
      $region18: #{conv_block_forward.4} parent=11 // pred_check_branch
        %178 = sbr.rel (%p176) target = $region20
      $region19: #{conv_block_forward.4} parent=11 // pred_region
        _
      $region20: #{conv_block_forward.4} parent=11 // pred_fallthru
        _
    $region12: #{conv_block_forward.4} parent=5 // pred_fallthru
      _
    %p179 = scmp.lt.s32.totalorder %s12, 2
    // Predicated region
    $region21: #{conv_block_forward.4} parent=5 // pred_check
      %p180 = pneg %p179
    $region22: #{conv_block_forward.4} parent=5 // pred_check_branch
      %182 = sbr.rel (%p180) target = $region24
    $region23: #{conv_block_forward.4} parent=5 // pred_region
      // Predicated region
      $region25: #{conv_block_forward.4} parent=23 // pred_check
        %p183 = pneg %p32
      $region26: #{conv_block_forward.4} parent=23 // pred_check_branch
        %185 = sbr.rel (%p183) target = $region28
      $region27: #{conv_block_forward.4} parent=23 // pred_region
        %p186 = scmp.lt.s32.totalorder %s12, 1
        %s187 = scalar_select %p186, %s12, 1
        %s188 = smul.addr %s187, 3
        %s189 = smul.addr %s188, 4
        %s190 = scalar_lea.vmem %s0, %s189
      $region28: #{conv_block_forward.4} parent=23 // pred_fallthru
        _
    $region24: #{conv_block_forward.4} parent=5 // pred_fallthru
      _
    %p191 = scmp.le.s32.totalorder 1, %s12
    %p192 = scmp.lt.s32.totalorder %s12, 3
    %p193 = pnand %p191, %p192
    %p194 = pneg %p193
    // Predicated region
    $region29: #{conv_block_forward.4} parent=5 // pred_check
      _
    $region30: #{conv_block_forward.4} parent=5 // pred_check_branch
      %196 = sbr.rel (%p193) target = $region32
    $region31: #{conv_block_forward.4} parent=5 // pred_region
      %s197 = ssub.s32 %s12, 1
      %p198 = scmp.lt.s32.totalorder %s17, 1
      %s199 = scalar_select %p198, %s17, 1
      %s200 = smul.addr %s199, 3
      %s201 = smul.addr %s200, 4
      %s202 = scalar_lea.vmem %s0, %s201
      %p203 = pneg %p38
      %p204 = pneg %p35
      %p205 = pneg %p59
      %p206 = pneg %p56
      %p207 = pneg %p80
      %p208 = pneg %p77
      %p209 = pneg %p106
      %p210 = pneg %p103
      %p211 = scmp.lt.s32.totalorder %s17, 1
      %s212 = scalar_select %p211, %s17, 1
      %s213 = smul.addr %s212, 2
      %s214 = smul.addr %s213, 8
      %s215 = scalar_lea.vmem %s3, %s214
      %p216 = pneg %p132
      %p217 = pneg %p129
      %p218 = scmp.lt.s32.totalorder %s17, 1
      %s219 = scalar_select %p218, %s17, 1
      %s220 = smul.addr %s219, 8
      %s221 = scalar_lea.vmem %s4, %s220
      %p222 = pneg %p158
      %p223 = pneg %p155
      %p224 = scmp.lt.s32.totalorder %s17, 1
      %s225 = scalar_select %p224, %s17, 1
      %s226 = smul.addr %s225, 8
      %s227 = scalar_lea.vmem %s5, %s226
      %p228 = scmp.lt.s32.totalorder %s17, 1
      %s229 = scalar_select %p228, %s17, 1
      %s230 = smul.addr %s229, 3
      %s231 = smul.addr %s230, 4
      %s232 = scalar_lea.vmem %s0, %s231
      %p233 = scmp.lt.s32.totalorder %s17, 1
      %s234 = scalar_select %p233, %s17, 1
      %s235 = smul.addr %s234, 2
      %s236 = smul.addr %s235, 8
      %s237 = scalar_lea.vmem %s3, %s236
      %p238 = scmp.lt.s32.totalorder %s17, 1
      %s239 = scalar_select %p238, %s17, 1
      %s240 = smul.addr %s239, 8
      %s241 = scalar_lea.vmem %s4, %s240
      %p242 = scmp.lt.s32.totalorder %s17, 1
      %s243 = scalar_select %p242, %s17, 1
      %s244 = smul.addr %s243, 8
      %s245 = scalar_lea.vmem %s5, %s244
      %v246 = vlaneseq
      %v247 = vand.u32 %v246, 127
      %v248 = vadd.s32 %v247, 128
      %vm249 = vcmp.lt.s32.totalorder %v247, 0
      %v250 = vsub.s32 0, %v247
      %v251 = vsel %vm249, %v250, %v247
      %v252 = vshrl.u32 %v251, 4
      %v253 = vand.u32 %v251, 15
      %v254 = vsub.s32 0, %v253
      %v255 = vsel %vm249, %v254, %v253
      %vm256 = vcmp.lt.s32.totalorder %v248, 0
      %v257 = vsub.s32 0, %v248
      %v258 = vsel %vm256, %v257, %v248
      %v259 = vshrl.u32 %v258, 4
      %v260 = vand.u32 %v258, 15
      %v261 = vsub.s32 0, %v260
      %v262 = vsel %vm256, %v261, %v260
      %vm263 = vcmp.ne.s32.totalorder %v255, 0
      %vm264 = vcmp.ne.s32.totalorder %v262, 0
      %vm265 = vcmp.lt.s32.totalorder %v255, 0
      %vm266 = vcmp.lt.s32.totalorder %v262, 0
      %vm267 = vmand %vm265, %vm263
      %vm268 = vmand %vm266, %vm264
      %v269 = vadd.s32 %v255, 16
      %v270 = vadd.s32 %v262, 16
      %v271 = vsel %vm267, %v269, %v255
      %v272 = vsel %vm268, %v270, %v262
      %v273 = vld [vmem:[%s232] sm:$0xff]
      %v274 = vld [vmem:[%s232 + $0x8] sm:$0xf]
      %vm275 = vcmp.eq.s32.totalorder %v271, 0
      %vm276 = vcmp.eq.s32.totalorder %v272, 0
      %v279 = vcombine.high %v273, %v273
      %280 = vrot.lane.b32.xlu0 %v273, 113
      %v281 = vpop.permute.xlu0 %280
      %282 = vrot.lane.b32.xlu0 %v279, 113
      %v283 = vpop.permute.xlu0 %282
      %284 = vrot.lane.b32.xlu0 %v274, 113
      %v285 = vpop.permute.xlu0 %284
      %vm286 = vcmask 924672
      %v287 = vsel %vm286, %v281, %v283
      %v288 = vsel %vm286, %v283, %v285
      %v291 = vsel %vm275, 0.0, %v287
      %v292 = vsel %vm276, 0.0, %v288
      %v293 = vld [vmem:[%s1] sm:$0xff]
      %s294 = scalar_lea.vmem %s1, 8
      %v295 = vld [vmem:[%s294] sm:$0xff]
      %296 = vrot.lane.b32.xlu0 %v273, 112
      %v297 = vpop.permute.xlu0 %296
      %298 = vrot.lane.b32.xlu0 %v279, 112
      %v299 = vpop.permute.xlu0 %298
      %300 = vrot.lane.b32.xlu0 %v274, 112
      %v301 = vpop.permute.xlu0 %300
      %vm302 = vcmask 916480
      %v303 = vsel %vm302, %v297, %v299
      %v304 = vsel %vm302, %v299, %v301
      %vm305 = vcmask 31744
      %v307 = vsel %vm305, %v295, 0
      %vm309 = vcmask 1043456
      %v310 = vsel %vm309, %v303, 0
      %v312 = vsel %vm309, %v304, 0
      %314 = vmatprep.subr.mxu0 %v312
      %315 = vmatpush1.msra.mxu0 %v310
      %316 = vmatprep.subr.mxu0 0.0
      %317 = vmatpush1.msra.mxu0 0.0
      %318 = vmatprep.subr.mxu0 0.0
      %319 = vmatpush1.msra.mxu0 0.0
      %320 = vmatprep.subr.mxu0 0.0
      %321 = vmatpush1.msra.mxu0 0.0
      %322 = vmatprep.subr.mxu0 0.0
      %323 = vmatpush1.msra.mxu0 0.0
      %324 = vmatprep.subr.mxu0 0.0
      %325 = vmatpush1.msra.mxu0 0.0
      %326 = vmatprep.subr.mxu0 0.0
      %327 = vmatpush1.msra.mxu0 0.0
      %328 = vmatprep.subr.mxu0 0.0
      %329 = vmatpush1.msra.mxu0 0.0
      %330 = vmatprep.subr.mxu0 0.0
      %331 = vmatpush1.msra.mxu0 0.0
      %332 = vmatprep.subr.mxu0 0.0
      %333 = vmatpush1.msra.mxu0 0.0
      %334 = vmatprep.subr.mxu0 0.0
      %335 = vmatpush1.msra.mxu0 0.0
      %336 = vmatprep.subr.mxu0 0.0
      %337 = vmatpush1.msra.mxu0 0.0
      %338 = vmatprep.subr.mxu0 0.0
      %339 = vmatpush1.msra.mxu0 0.0
      %340 = vmatprep.subr.mxu0 0.0
      %341 = vmatpush1.msra.mxu0 0.0
      %342 = vmatprep.subr.mxu0 0.0
      %343 = vmatpush1.msra.mxu0 0.0
      %344 = vmatprep.subr.mxu0 0.0
      %345 = vmatpush1.msra.mxu0 0.0
      %346 = vmatprep.subr.mxu0 0.0
      %347 = vmatpush1.msra.mxu0 0.0
      %348 = vmatprep.subr.mxu0 0.0
      %349 = vmatpush1.msra.mxu0 0.0
      %350 = vmatprep.subr.mxu0 0.0
      %351 = vmatpush1.msra.mxu0 0.0
      %352 = vmatprep.subr.mxu0 0.0
      %353 = vmatpush1.msra.mxu0 0.0
      %354 = vmatprep.subr.mxu0 0.0
      %355 = vmatpush1.msra.mxu0 0.0
      %356 = vmatprep.subr.mxu0 0.0
      %357 = vmatpush1.msra.mxu0 0.0
      %358 = vmatprep.subr.mxu0 0.0
      %359 = vmatpush1.msra.mxu0 0.0
      %360 = vmatprep.subr.mxu0 0.0
      %361 = vmatpush1.msra.mxu0 0.0
      %362 = vmatprep.subr.mxu0 0.0
      %363 = vmatpush1.msra.mxu0 0.0
      %364 = vmatprep.subr.mxu0 0.0
      %365 = vmatpush1.msra.mxu0 0.0
      %366 = vmatprep.subr.mxu0 0.0
      %367 = vmatpush1.msra.mxu0 0.0
      %368 = vmatprep.subr.mxu0 0.0
      %369 = vmatpush1.msra.mxu0 0.0
      %370 = vmatprep.subr.mxu0 0.0
      %371 = vmatpush1.msra.mxu0 0.0
      %372 = vmatprep.subr.mxu0 0.0
      %373 = vmatpush1.msra.mxu0 0.0
      %374 = vmatprep.subr.mxu0 0.0
      %375 = vmatpush1.msra.mxu0 0.0
      %376 = vmatprep.subr.mxu0 0.0
      %377 = vmatpush1.msra.mxu0 0.0
      %378 = vmatprep.mubr.f32.mxu0 0.0
      %379 = vmatmul.mubr.f32.gmra.mrb[0].mxu0 %v307
      %v380 = vpop.f32.mrb[0].mxu0
      %v381 = vadd.f32 0.0, %v380
      %v382 = vpop.f32.mrb[0].mxu0
      %v383 = vadd.f32 0.0, %v382
      %384 = vdwg.mxu0
      %v386 = vsel %vm305, %v293, 0
      %v389 = vsel %vm309, %v291, 0
      %v392 = vsel %vm309, %v292, 0
      %394 = vmatprep.subr.mxu0 %v392
      %395 = vmatpush1.msra.mxu0 %v389
      %396 = vmatprep.subr.mxu0 0.0
      %397 = vmatpush1.msra.mxu0 0.0
      %398 = vmatprep.subr.mxu0 0.0
      %399 = vmatpush1.msra.mxu0 0.0
      %400 = vmatprep.subr.mxu0 0.0
      %401 = vmatpush1.msra.mxu0 0.0
      %402 = vmatprep.subr.mxu0 0.0
      %403 = vmatpush1.msra.mxu0 0.0
      %404 = vmatprep.subr.mxu0 0.0
      %405 = vmatpush1.msra.mxu0 0.0
      %406 = vmatprep.subr.mxu0 0.0
      %407 = vmatpush1.msra.mxu0 0.0
      %408 = vmatprep.subr.mxu0 0.0
      %409 = vmatpush1.msra.mxu0 0.0
      %410 = vmatprep.subr.mxu0 0.0
      %411 = vmatpush1.msra.mxu0 0.0
      %412 = vmatprep.subr.mxu0 0.0
      %413 = vmatpush1.msra.mxu0 0.0
      %414 = vmatprep.subr.mxu0 0.0
      %415 = vmatpush1.msra.mxu0 0.0
      %416 = vmatprep.subr.mxu0 0.0
      %417 = vmatpush1.msra.mxu0 0.0
      %418 = vmatprep.subr.mxu0 0.0
      %419 = vmatpush1.msra.mxu0 0.0
      %420 = vmatprep.subr.mxu0 0.0
      %421 = vmatpush1.msra.mxu0 0.0
      %422 = vmatprep.subr.mxu0 0.0
      %423 = vmatpush1.msra.mxu0 0.0
      %424 = vmatprep.subr.mxu0 0.0
      %425 = vmatpush1.msra.mxu0 0.0
      %426 = vmatprep.subr.mxu0 0.0
      %427 = vmatpush1.msra.mxu0 0.0
      %428 = vmatprep.subr.mxu0 0.0
      %429 = vmatpush1.msra.mxu0 0.0
      %430 = vmatprep.subr.mxu0 0.0
      %431 = vmatpush1.msra.mxu0 0.0
      %432 = vmatprep.subr.mxu0 0.0
      %433 = vmatpush1.msra.mxu0 0.0
      %434 = vmatprep.subr.mxu0 0.0
      %435 = vmatpush1.msra.mxu0 0.0
      %436 = vmatprep.subr.mxu0 0.0
      %437 = vmatpush1.msra.mxu0 0.0
      %438 = vmatprep.subr.mxu0 0.0
      %439 = vmatpush1.msra.mxu0 0.0
      %440 = vmatprep.subr.mxu0 0.0
      %441 = vmatpush1.msra.mxu0 0.0
      %442 = vmatprep.subr.mxu0 0.0
      %443 = vmatpush1.msra.mxu0 0.0
      %444 = vmatprep.subr.mxu0 0.0
      %445 = vmatpush1.msra.mxu0 0.0
      %446 = vmatprep.subr.mxu0 0.0
      %447 = vmatpush1.msra.mxu0 0.0
      %448 = vmatprep.subr.mxu0 0.0
      %449 = vmatpush1.msra.mxu0 0.0
      %450 = vmatprep.subr.mxu0 0.0
      %451 = vmatpush1.msra.mxu0 0.0
      %452 = vmatprep.subr.mxu0 0.0
      %453 = vmatpush1.msra.mxu0 0.0
      %454 = vmatprep.subr.mxu0 0.0
      %455 = vmatpush1.msra.mxu0 0.0
      %456 = vmatprep.subr.mxu0 0.0
      %457 = vmatpush1.msra.mxu0 0.0
      %458 = vmatprep.mubr.f32.mxu0 0.0
      %459 = vmatmul.mubr.f32.gmra.mrb[0].mxu0 %v386
      %v460 = vpop.f32.mrb[0].mxu0
      %v461 = vadd.f32 %v381, %v460
      %v462 = vpop.f32.mrb[0].mxu0
      %v463 = vadd.f32 %v383, %v462
      %464 = vdwg.mxu0
      %v465 = vld [vmem:[%s232] sm:$0xff]
      %v466 = vld [vmem:[%s232 + $0x8] sm:$0xf]
      %vm467 = vcmp.eq.s32.totalorder %v271, 15
      %vm468 = vcmp.eq.s32.totalorder %v272, 15
      %v471 = vcombine.high %v465, %v465
      %472 = vrot.lane.b32.xlu0 %v465, 111
      %v473 = vpop.permute.xlu0 %472
      %474 = vrot.lane.b32.xlu0 %v471, 111
      %v475 = vpop.permute.xlu0 %474
      %476 = vrot.lane.b32.xlu0 %v466, 111
      %v477 = vpop.permute.xlu0 %476
      %vm478 = vcmask 908288
      %v479 = vsel %vm478, %v473, %v475
      %v480 = vsel %vm478, %v475, %v477
      %v483 = vsel %vm467, 0.0, %v479
      %v484 = vsel %vm468, 0.0, %v480
      %s485 = scalar_lea.vmem %s1, 16
      %v486 = vld [vmem:[%s485] sm:$0xff]
      %v488 = vsel %vm305, %v486, 0
      %v491 = vsel %vm309, %v483, 0
      %v494 = vsel %vm309, %v484, 0
      %496 = vmatprep.subr.mxu0 %v494
      %497 = vmatpush1.msra.mxu0 %v491
      %498 = vmatprep.subr.mxu0 0.0
      %499 = vmatpush1.msra.mxu0 0.0
      %500 = vmatprep.subr.mxu0 0.0
      %501 = vmatpush1.msra.mxu0 0.0
      %502 = vmatprep.subr.mxu0 0.0
      %503 = vmatpush1.msra.mxu0 0.0
      %504 = vmatprep.subr.mxu0 0.0
      %505 = vmatpush1.msra.mxu0 0.0
      %506 = vmatprep.subr.mxu0 0.0
      %507 = vmatpush1.msra.mxu0 0.0
      %508 = vmatprep.subr.mxu0 0.0
      %509 = vmatpush1.msra.mxu0 0.0
      %510 = vmatprep.subr.mxu0 0.0
      %511 = vmatpush1.msra.mxu0 0.0
      %512 = vmatprep.subr.mxu0 0.0
      %513 = vmatpush1.msra.mxu0 0.0
      %514 = vmatprep.subr.mxu0 0.0
      %515 = vmatpush1.msra.mxu0 0.0
      %516 = vmatprep.subr.mxu0 0.0
      %517 = vmatpush1.msra.mxu0 0.0
      %518 = vmatprep.subr.mxu0 0.0
      %519 = vmatpush1.msra.mxu0 0.0
      %520 = vmatprep.subr.mxu0 0.0
      %521 = vmatpush1.msra.mxu0 0.0
      %522 = vmatprep.subr.mxu0 0.0
      %523 = vmatpush1.msra.mxu0 0.0
      %524 = vmatprep.subr.mxu0 0.0
      %525 = vmatpush1.msra.mxu0 0.0
      %526 = vmatprep.subr.mxu0 0.0
      %527 = vmatpush1.msra.mxu0 0.0
      %528 = vmatprep.subr.mxu0 0.0
      %529 = vmatpush1.msra.mxu0 0.0
      %530 = vmatprep.subr.mxu0 0.0
      %531 = vmatpush1.msra.mxu0 0.0
      %532 = vmatprep.subr.mxu0 0.0
      %533 = vmatpush1.msra.mxu0 0.0
      %534 = vmatprep.subr.mxu0 0.0
      %535 = vmatpush1.msra.mxu0 0.0
      %536 = vmatprep.subr.mxu0 0.0
      %537 = vmatpush1.msra.mxu0 0.0
      %538 = vmatprep.subr.mxu0 0.0
      %539 = vmatpush1.msra.mxu0 0.0
      %540 = vmatprep.subr.mxu0 0.0
      %541 = vmatpush1.msra.mxu0 0.0
      %542 = vmatprep.subr.mxu0 0.0
      %543 = vmatpush1.msra.mxu0 0.0
      %544 = vmatprep.subr.mxu0 0.0
      %545 = vmatpush1.msra.mxu0 0.0
      %546 = vmatprep.subr.mxu0 0.0
      %547 = vmatpush1.msra.mxu0 0.0
      %548 = vmatprep.subr.mxu0 0.0
      %549 = vmatpush1.msra.mxu0 0.0
      %550 = vmatprep.subr.mxu0 0.0
      %551 = vmatpush1.msra.mxu0 0.0
      %552 = vmatprep.subr.mxu0 0.0
      %553 = vmatpush1.msra.mxu0 0.0
      %554 = vmatprep.subr.mxu0 0.0
      %555 = vmatpush1.msra.mxu0 0.0
      %556 = vmatprep.subr.mxu0 0.0
      %557 = vmatpush1.msra.mxu0 0.0
      %558 = vmatprep.subr.mxu0 0.0
      %559 = vmatpush1.msra.mxu0 0.0
      %560 = vmatprep.mubr.f32.mxu0 0.0
      %561 = vmatmul.mubr.f32.gmra.mrb[0].mxu0 %v488
      %v562 = vpop.f32.mrb[0].mxu0
      %v563 = vadd.f32 0.0, %v562
      %v564 = vpop.f32.mrb[0].mxu0
      %v565 = vadd.f32 0.0, %v564
      %566 = vdwg.mxu0
      %v567 = vadd.f32 %v461, %v563
      %v568 = vadd.f32 %v463, %v565
      %v569 = vld [vmem:[%s232] sm:$0xff]
      %v570 = vld [vmem:[%s232 + $0x8] sm:$0xf]
      %v573 = vcombine.high %v569, %v569
      %574 = vrot.lane.b32.xlu0 %v569, 97
      %v575 = vpop.permute.xlu0 %574
      %576 = vrot.lane.b32.xlu0 %v573, 97
      %v577 = vpop.permute.xlu0 %576
      %578 = vrot.lane.b32.xlu0 %v570, 97
      %v579 = vpop.permute.xlu0 %578
      %vm580 = vcmask 793600
      %v581 = vsel %vm580, %v575, %v577
      %v582 = vsel %vm580, %v577, %v579
      %v585 = vsel %vm275, 0.0, %v581
      %v586 = vsel %vm276, 0.0, %v582
      %s587 = scalar_lea.vmem %s1, 24
      %v588 = vld [vmem:[%s587] sm:$0xff]
      %v590 = vsel %vm305, %v588, 0
      %v593 = vsel %vm309, %v585, 0
      %v596 = vsel %vm309, %v586, 0
      %598 = vmatprep.subr.mxu0 %v596
      %599 = vmatpush1.msra.mxu0 %v593
      %600 = vmatprep.subr.mxu0 0.0
      %601 = vmatpush1.msra.mxu0 0.0
      %602 = vmatprep.subr.mxu0 0.0
      %603 = vmatpush1.msra.mxu0 0.0
      %604 = vmatprep.subr.mxu0 0.0
      %605 = vmatpush1.msra.mxu0 0.0
      %606 = vmatprep.subr.mxu0 0.0
      %607 = vmatpush1.msra.mxu0 0.0
      %608 = vmatprep.subr.mxu0 0.0
      %609 = vmatpush1.msra.mxu0 0.0
      %610 = vmatprep.subr.mxu0 0.0
      %611 = vmatpush1.msra.mxu0 0.0
      %612 = vmatprep.subr.mxu0 0.0
      %613 = vmatpush1.msra.mxu0 0.0
      %614 = vmatprep.subr.mxu0 0.0
      %615 = vmatpush1.msra.mxu0 0.0
      %616 = vmatprep.subr.mxu0 0.0
      %617 = vmatpush1.msra.mxu0 0.0
      %618 = vmatprep.subr.mxu0 0.0
      %619 = vmatpush1.msra.mxu0 0.0
      %620 = vmatprep.subr.mxu0 0.0
      %621 = vmatpush1.msra.mxu0 0.0
      %622 = vmatprep.subr.mxu0 0.0
      %623 = vmatpush1.msra.mxu0 0.0
      %624 = vmatprep.subr.mxu0 0.0
      %625 = vmatpush1.msra.mxu0 0.0
      %626 = vmatprep.subr.mxu0 0.0
      %627 = vmatpush1.msra.mxu0 0.0
      %628 = vmatprep.subr.mxu0 0.0
      %629 = vmatpush1.msra.mxu0 0.0
      %630 = vmatprep.subr.mxu0 0.0
      %631 = vmatpush1.msra.mxu0 0.0
      %632 = vmatprep.subr.mxu0 0.0
      %633 = vmatpush1.msra.mxu0 0.0
      %634 = vmatprep.subr.mxu0 0.0
      %635 = vmatpush1.msra.mxu0 0.0
      %636 = vmatprep.subr.mxu0 0.0
      %637 = vmatpush1.msra.mxu0 0.0
      %638 = vmatprep.subr.mxu0 0.0
      %639 = vmatpush1.msra.mxu0 0.0
      %640 = vmatprep.subr.mxu0 0.0
      %641 = vmatpush1.msra.mxu0 0.0
      %642 = vmatprep.subr.mxu0 0.0
      %643 = vmatpush1.msra.mxu0 0.0
      %644 = vmatprep.subr.mxu0 0.0
      %645 = vmatpush1.msra.mxu0 0.0
      %646 = vmatprep.subr.mxu0 0.0
      %647 = vmatpush1.msra.mxu0 0.0
      %648 = vmatprep.subr.mxu0 0.0
      %649 = vmatpush1.msra.mxu0 0.0
      %650 = vmatprep.subr.mxu0 0.0
      %651 = vmatpush1.msra.mxu0 0.0
      %652 = vmatprep.subr.mxu0 0.0
      %653 = vmatpush1.msra.mxu0 0.0
      %654 = vmatprep.subr.mxu0 0.0
      %655 = vmatpush1.msra.mxu0 0.0
      %656 = vmatprep.subr.mxu0 0.0
      %657 = vmatpush1.msra.mxu0 0.0
      %658 = vmatprep.subr.mxu0 0.0
      %659 = vmatpush1.msra.mxu0 0.0
      %660 = vmatprep.subr.mxu0 0.0
      %661 = vmatpush1.msra.mxu0 0.0
      %662 = vmatprep.mubr.f32.mxu0 0.0
      %663 = vmatmul.mubr.f32.gmra.mrb[0].mxu0 %v590
      %v664 = vpop.f32.mrb[0].mxu0
      %v665 = vadd.f32 0.0, %v664
      %v666 = vpop.f32.mrb[0].mxu0
      %v667 = vadd.f32 0.0, %v666
      %668 = vdwg.mxu0
      %v669 = vadd.f32 %v567, %v665
      %v670 = vadd.f32 %v568, %v667
      %v671 = vld [vmem:[%s232] sm:$0xff]
      %v672 = vld [vmem:[%s232 + $0x8] sm:$0xf]
      %s673 = scalar_lea.vmem %s1, 32
      %v674 = vld [vmem:[%s673] sm:$0xff]
      %v677 = vcombine.high %v671, %v671
      %678 = vrot.lane.b32.xlu0 %v671, 96
      %v679 = vpop.permute.xlu0 %678
      %680 = vrot.lane.b32.xlu0 %v677, 96
      %v681 = vpop.permute.xlu0 %680
      %682 = vrot.lane.b32.xlu0 %v672, 96
      %v683 = vpop.permute.xlu0 %682
      %vm684 = vcmask 785408
      %v685 = vsel %vm684, %v679, %v681
      %v686 = vsel %vm684, %v681, %v683
      %v688 = vsel %vm305, %v674, 0
      %v690 = vsel %vm309, %v685, 0
      %v692 = vsel %vm309, %v686, 0
      %694 = vmatprep.subr.mxu0 %v692
      %695 = vmatpush1.msra.mxu0 %v690
      %696 = vmatprep.subr.mxu0 0.0
      %697 = vmatpush1.msra.mxu0 0.0
      %698 = vmatprep.subr.mxu0 0.0
      %699 = vmatpush1.msra.mxu0 0.0
      %700 = vmatprep.subr.mxu0 0.0
      %701 = vmatpush1.msra.mxu0 0.0
      %702 = vmatprep.subr.mxu0 0.0
      %703 = vmatpush1.msra.mxu0 0.0
      %704 = vmatprep.subr.mxu0 0.0
      %705 = vmatpush1.msra.mxu0 0.0
      %706 = vmatprep.subr.mxu0 0.0
      %707 = vmatpush1.msra.mxu0 0.0
      %708 = vmatprep.subr.mxu0 0.0
      %709 = vmatpush1.msra.mxu0 0.0
      %710 = vmatprep.subr.mxu0 0.0
      %711 = vmatpush1.msra.mxu0 0.0
      %712 = vmatprep.subr.mxu0 0.0
      %713 = vmatpush1.msra.mxu0 0.0
      %714 = vmatprep.subr.mxu0 0.0
      %715 = vmatpush1.msra.mxu0 0.0
      %716 = vmatprep.subr.mxu0 0.0
      %717 = vmatpush1.msra.mxu0 0.0
      %718 = vmatprep.subr.mxu0 0.0
      %719 = vmatpush1.msra.mxu0 0.0
      %720 = vmatprep.subr.mxu0 0.0
      %721 = vmatpush1.msra.mxu0 0.0
      %722 = vmatprep.subr.mxu0 0.0
      %723 = vmatpush1.msra.mxu0 0.0
      %724 = vmatprep.subr.mxu0 0.0
      %725 = vmatpush1.msra.mxu0 0.0
      %726 = vmatprep.subr.mxu0 0.0
      %727 = vmatpush1.msra.mxu0 0.0
      %728 = vmatprep.subr.mxu0 0.0
      %729 = vmatpush1.msra.mxu0 0.0
      %730 = vmatprep.subr.mxu0 0.0
      %731 = vmatpush1.msra.mxu0 0.0
      %732 = vmatprep.subr.mxu0 0.0
      %733 = vmatpush1.msra.mxu0 0.0
      %734 = vmatprep.subr.mxu0 0.0
      %735 = vmatpush1.msra.mxu0 0.0
      %736 = vmatprep.subr.mxu0 0.0
      %737 = vmatpush1.msra.mxu0 0.0
      %738 = vmatprep.subr.mxu0 0.0
      %739 = vmatpush1.msra.mxu0 0.0
      %740 = vmatprep.subr.mxu0 0.0
      %741 = vmatpush1.msra.mxu0 0.0
      %742 = vmatprep.subr.mxu0 0.0
      %743 = vmatpush1.msra.mxu0 0.0
      %744 = vmatprep.subr.mxu0 0.0
      %745 = vmatpush1.msra.mxu0 0.0
      %746 = vmatprep.subr.mxu0 0.0
      %747 = vmatpush1.msra.mxu0 0.0
      %748 = vmatprep.subr.mxu0 0.0
      %749 = vmatpush1.msra.mxu0 0.0
      %750 = vmatprep.subr.mxu0 0.0
      %751 = vmatpush1.msra.mxu0 0.0
      %752 = vmatprep.subr.mxu0 0.0
      %753 = vmatpush1.msra.mxu0 0.0
      %754 = vmatprep.subr.mxu0 0.0
      %755 = vmatpush1.msra.mxu0 0.0
      %756 = vmatprep.subr.mxu0 0.0
      %757 = vmatpush1.msra.mxu0 0.0
      %758 = vmatprep.mubr.f32.mxu0 0.0
      %759 = vmatmul.mubr.f32.gmra.mrb[0].mxu0 %v688
      %v760 = vpop.f32.mrb[0].mxu0
      %v761 = vadd.f32 0.0, %v760
      %v762 = vpop.f32.mrb[0].mxu0
      %v763 = vadd.f32 0.0, %v762
      %764 = vdwg.mxu0
      %v765 = vadd.f32 %v669, %v761
      %v766 = vadd.f32 %v670, %v763
      %v767 = vld [vmem:[%s232] sm:$0xff]
      %v768 = vld [vmem:[%s232 + $0x8] sm:$0xf]
      %v771 = vcombine.high %v767, %v767
      %772 = vrot.lane.b32.xlu0 %v767, 95
      %v773 = vpop.permute.xlu0 %772
      %774 = vrot.lane.b32.xlu0 %v771, 95
      %v775 = vpop.permute.xlu0 %774
      %776 = vrot.lane.b32.xlu0 %v768, 95
      %v777 = vpop.permute.xlu0 %776
      %vm778 = vcmask 777216
      %v779 = vsel %vm778, %v773, %v775
      %v780 = vsel %vm778, %v775, %v777
      %v783 = vsel %vm467, 0.0, %v779
      %v784 = vsel %vm468, 0.0, %v780
      %s785 = scalar_lea.vmem %s1, 40
      %v786 = vld [vmem:[%s785] sm:$0xff]
      %v788 = vsel %vm305, %v786, 0
      %v791 = vsel %vm309, %v783, 0
      %v794 = vsel %vm309, %v784, 0
      %796 = vmatprep.subr.mxu0 %v794
      %797 = vmatpush1.msra.mxu0 %v791
      %798 = vmatprep.subr.mxu0 0.0
      %799 = vmatpush1.msra.mxu0 0.0
      %800 = vmatprep.subr.mxu0 0.0
      %801 = vmatpush1.msra.mxu0 0.0
      %802 = vmatprep.subr.mxu0 0.0
      %803 = vmatpush1.msra.mxu0 0.0
      %804 = vmatprep.subr.mxu0 0.0
      %805 = vmatpush1.msra.mxu0 0.0
      %806 = vmatprep.subr.mxu0 0.0
      %807 = vmatpush1.msra.mxu0 0.0
      %808 = vmatprep.subr.mxu0 0.0
      %809 = vmatpush1.msra.mxu0 0.0
      %810 = vmatprep.subr.mxu0 0.0
      %811 = vmatpush1.msra.mxu0 0.0
      %812 = vmatprep.subr.mxu0 0.0
      %813 = vmatpush1.msra.mxu0 0.0
      %814 = vmatprep.subr.mxu0 0.0
      %815 = vmatpush1.msra.mxu0 0.0
      %816 = vmatprep.subr.mxu0 0.0
      %817 = vmatpush1.msra.mxu0 0.0
      %818 = vmatprep.subr.mxu0 0.0
      %819 = vmatpush1.msra.mxu0 0.0
      %820 = vmatprep.subr.mxu0 0.0
      %821 = vmatpush1.msra.mxu0 0.0
      %822 = vmatprep.subr.mxu0 0.0
      %823 = vmatpush1.msra.mxu0 0.0
      %824 = vmatprep.subr.mxu0 0.0
      %825 = vmatpush1.msra.mxu0 0.0
      %826 = vmatprep.subr.mxu0 0.0
      %827 = vmatpush1.msra.mxu0 0.0
      %828 = vmatprep.subr.mxu0 0.0
      %829 = vmatpush1.msra.mxu0 0.0
      %830 = vmatprep.subr.mxu0 0.0
      %831 = vmatpush1.msra.mxu0 0.0
      %832 = vmatprep.subr.mxu0 0.0
      %833 = vmatpush1.msra.mxu0 0.0
      %834 = vmatprep.subr.mxu0 0.0
      %835 = vmatpush1.msra.mxu0 0.0
      %836 = vmatprep.subr.mxu0 0.0
      %837 = vmatpush1.msra.mxu0 0.0
      %838 = vmatprep.subr.mxu0 0.0
      %839 = vmatpush1.msra.mxu0 0.0
      %840 = vmatprep.subr.mxu0 0.0
      %841 = vmatpush1.msra.mxu0 0.0
      %842 = vmatprep.subr.mxu0 0.0
      %843 = vmatpush1.msra.mxu0 0.0
      %844 = vmatprep.subr.mxu0 0.0
      %845 = vmatpush1.msra.mxu0 0.0
      %846 = vmatprep.subr.mxu0 0.0
      %847 = vmatpush1.msra.mxu0 0.0
      %848 = vmatprep.subr.mxu0 0.0
      %849 = vmatpush1.msra.mxu0 0.0
      %850 = vmatprep.subr.mxu0 0.0
      %851 = vmatpush1.msra.mxu0 0.0
      %852 = vmatprep.subr.mxu0 0.0
      %853 = vmatpush1.msra.mxu0 0.0
      %854 = vmatprep.subr.mxu0 0.0
      %855 = vmatpush1.msra.mxu0 0.0
      %856 = vmatprep.subr.mxu0 0.0
      %857 = vmatpush1.msra.mxu0 0.0
      %858 = vmatprep.subr.mxu0 0.0
      %859 = vmatpush1.msra.mxu0 0.0
      %860 = vmatprep.mubr.f32.mxu0 0.0
      %861 = vmatmul.mubr.f32.gmra.mrb[0].mxu0 %v788
      %v862 = vpop.f32.mrb[0].mxu0
      %v863 = vadd.f32 0.0, %v862
      %v864 = vpop.f32.mrb[0].mxu0
      %v865 = vadd.f32 0.0, %v864
      %866 = vdwg.mxu0
      %v867 = vadd.f32 %v765, %v863
      %v868 = vadd.f32 %v766, %v865
      %v869 = vld [vmem:[%s232] sm:$0xff]
      %v870 = vld [vmem:[%s232 + $0x8] sm:$0xf]
      %v873 = vcombine.high %v869, %v869
      %874 = vrot.lane.b32.xlu0 %v869, 81
      %v875 = vpop.permute.xlu0 %874
      %876 = vrot.lane.b32.xlu0 %v873, 81
      %v877 = vpop.permute.xlu0 %876
      %878 = vrot.lane.b32.xlu0 %v870, 81
      %v879 = vpop.permute.xlu0 %878
      %vm880 = vcmask 662528
      %v881 = vsel %vm880, %v875, %v877
      %v882 = vsel %vm880, %v877, %v879
      %v885 = vsel %vm275, 0.0, %v881
      %v886 = vsel %vm276, 0.0, %v882
      %s887 = scalar_lea.vmem %s1, 48
      %v888 = vld [vmem:[%s887] sm:$0xff]
      %v890 = vsel %vm305, %v888, 0
      %v893 = vsel %vm309, %v885, 0
      %v896 = vsel %vm309, %v886, 0
      %898 = vmatprep.subr.mxu0 %v896
      %899 = vmatpush1.msra.mxu0 %v893
      %900 = vmatprep.subr.mxu0 0.0
      %901 = vmatpush1.msra.mxu0 0.0
      %902 = vmatprep.subr.mxu0 0.0
      %903 = vmatpush1.msra.mxu0 0.0
      %904 = vmatprep.subr.mxu0 0.0
      %905 = vmatpush1.msra.mxu0 0.0
      %906 = vmatprep.subr.mxu0 0.0
      %907 = vmatpush1.msra.mxu0 0.0
      %908 = vmatprep.subr.mxu0 0.0
      %909 = vmatpush1.msra.mxu0 0.0
      %910 = vmatprep.subr.mxu0 0.0
      %911 = vmatpush1.msra.mxu0 0.0
      %912 = vmatprep.subr.mxu0 0.0
      %913 = vmatpush1.msra.mxu0 0.0
      %914 = vmatprep.subr.mxu0 0.0
      %915 = vmatpush1.msra.mxu0 0.0
      %916 = vmatprep.subr.mxu0 0.0
      %917 = vmatpush1.msra.mxu0 0.0
      %918 = vmatprep.subr.mxu0 0.0
      %919 = vmatpush1.msra.mxu0 0.0
      %920 = vmatprep.subr.mxu0 0.0
      %921 = vmatpush1.msra.mxu0 0.0
      %922 = vmatprep.subr.mxu0 0.0
      %923 = vmatpush1.msra.mxu0 0.0
      %924 = vmatprep.subr.mxu0 0.0
      %925 = vmatpush1.msra.mxu0 0.0
      %926 = vmatprep.subr.mxu0 0.0
      %927 = vmatpush1.msra.mxu0 0.0
      %928 = vmatprep.subr.mxu0 0.0
      %929 = vmatpush1.msra.mxu0 0.0
      %930 = vmatprep.subr.mxu0 0.0
      %931 = vmatpush1.msra.mxu0 0.0
      %932 = vmatprep.subr.mxu0 0.0
      %933 = vmatpush1.msra.mxu0 0.0
      %934 = vmatprep.subr.mxu0 0.0
      %935 = vmatpush1.msra.mxu0 0.0
      %936 = vmatprep.subr.mxu0 0.0
      %937 = vmatpush1.msra.mxu0 0.0
      %938 = vmatprep.subr.mxu0 0.0
      %939 = vmatpush1.msra.mxu0 0.0
      %940 = vmatprep.subr.mxu0 0.0
      %941 = vmatpush1.msra.mxu0 0.0
      %942 = vmatprep.subr.mxu0 0.0
      %943 = vmatpush1.msra.mxu0 0.0
      %944 = vmatprep.subr.mxu0 0.0
      %945 = vmatpush1.msra.mxu0 0.0
      %946 = vmatprep.subr.mxu0 0.0
      %947 = vmatpush1.msra.mxu0 0.0
      %948 = vmatprep.subr.mxu0 0.0
      %949 = vmatpush1.msra.mxu0 0.0
      %950 = vmatprep.subr.mxu0 0.0
      %951 = vmatpush1.msra.mxu0 0.0
      %952 = vmatprep.subr.mxu0 0.0
      %953 = vmatpush1.msra.mxu0 0.0
      %954 = vmatprep.subr.mxu0 0.0
      %955 = vmatpush1.msra.mxu0 0.0
      %956 = vmatprep.subr.mxu0 0.0
      %957 = vmatpush1.msra.mxu0 0.0
      %958 = vmatprep.subr.mxu0 0.0
      %959 = vmatpush1.msra.mxu0 0.0
      %960 = vmatprep.subr.mxu0 0.0
      %961 = vmatpush1.msra.mxu0 0.0
      %962 = vmatprep.mubr.f32.mxu0 0.0
      %963 = vmatmul.mubr.f32.gmra.mrb[0].mxu0 %v890
      %v964 = vpop.f32.mrb[0].mxu0
      %v965 = vadd.f32 0.0, %v964
      %v966 = vpop.f32.mrb[0].mxu0
      %v967 = vadd.f32 0.0, %v966
      %968 = vdwg.mxu0
      %v969 = vadd.f32 %v867, %v965
      %v970 = vadd.f32 %v868, %v967
      %v971 = vld [vmem:[%s232] sm:$0xff]
      %v972 = vld [vmem:[%s232 + $0x8] sm:$0xf]
      %s973 = scalar_lea.vmem %s1, 56
      %v974 = vld [vmem:[%s973] sm:$0xff]
      %v977 = vcombine.high %v971, %v971
      %978 = vrot.lane.b32.xlu0 %v971, 80
      %v979 = vpop.permute.xlu0 %978
      %980 = vrot.lane.b32.xlu0 %v977, 80
      %v981 = vpop.permute.xlu0 %980
      %982 = vrot.lane.b32.xlu0 %v972, 80
      %v983 = vpop.permute.xlu0 %982
      %vm984 = vcmask 654336
      %v985 = vsel %vm984, %v979, %v981
      %v986 = vsel %vm984, %v981, %v983
      %v988 = vsel %vm305, %v974, 0
      %v990 = vsel %vm309, %v985, 0
      %v992 = vsel %vm309, %v986, 0
      %994 = vmatprep.subr.mxu0 %v992
      %995 = vmatpush1.msra.mxu0 %v990
      %996 = vmatprep.subr.mxu0 0.0
      %997 = vmatpush1.msra.mxu0 0.0
      %998 = vmatprep.subr.mxu0 0.0
      %999 = vmatpush1.msra.mxu0 0.0
      %1000 = vmatprep.subr.mxu0 0.0
      %1001 = vmatpush1.msra.mxu0 0.0
      %1002 = vmatprep.subr.mxu0 0.0
      %1003 = vmatpush1.msra.mxu0 0.0
      %1004 = vmatprep.subr.mxu0 0.0
      %1005 = vmatpush1.msra.mxu0 0.0
      %1006 = vmatprep.subr.mxu0 0.0
      %1007 = vmatpush1.msra.mxu0 0.0
      %1008 = vmatprep.subr.mxu0 0.0
      %1009 = vmatpush1.msra.mxu0 0.0
      %1010 = vmatprep.subr.mxu0 0.0
      %1011 = vmatpush1.msra.mxu0 0.0
      %1012 = vmatprep.subr.mxu0 0.0
      %1013 = vmatpush1.msra.mxu0 0.0
      %1014 = vmatprep.subr.mxu0 0.0
      %1015 = vmatpush1.msra.mxu0 0.0
      %1016 = vmatprep.subr.mxu0 0.0
      %1017 = vmatpush1.msra.mxu0 0.0
      %1018 = vmatprep.subr.mxu0 0.0
      %1019 = vmatpush1.msra.mxu0 0.0
      %1020 = vmatprep.subr.mxu0 0.0
      %1021 = vmatpush1.msra.mxu0 0.0
      %1022 = vmatprep.subr.mxu0 0.0
      %1023 = vmatpush1.msra.mxu0 0.0
      %1024 = vmatprep.subr.mxu0 0.0
      %1025 = vmatpush1.msra.mxu0 0.0
      %1026 = vmatprep.subr.mxu0 0.0
      %1027 = vmatpush1.msra.mxu0 0.0
      %1028 = vmatprep.subr.mxu0 0.0
      %1029 = vmatpush1.msra.mxu0 0.0
      %1030 = vmatprep.subr.mxu0 0.0
      %1031 = vmatpush1.msra.mxu0 0.0
      %1032 = vmatprep.subr.mxu0 0.0
      %1033 = vmatpush1.msra.mxu0 0.0
      %1034 = vmatprep.subr.mxu0 0.0
      %1035 = vmatpush1.msra.mxu0 0.0
      %1036 = vmatprep.subr.mxu0 0.0
      %1037 = vmatpush1.msra.mxu0 0.0
      %1038 = vmatprep.subr.mxu0 0.0
      %1039 = vmatpush1.msra.mxu0 0.0
      %1040 = vmatprep.subr.mxu0 0.0
      %1041 = vmatpush1.msra.mxu0 0.0
      %1042 = vmatprep.subr.mxu0 0.0
      %1043 = vmatpush1.msra.mxu0 0.0
      %1044 = vmatprep.subr.mxu0 0.0
      %1045 = vmatpush1.msra.mxu0 0.0
      %1046 = vmatprep.subr.mxu0 0.0
      %1047 = vmatpush1.msra.mxu0 0.0
      %1048 = vmatprep.subr.mxu0 0.0
      %1049 = vmatpush1.msra.mxu0 0.0
      %1050 = vmatprep.subr.mxu0 0.0
      %1051 = vmatpush1.msra.mxu0 0.0
      %1052 = vmatprep.subr.mxu0 0.0
      %1053 = vmatpush1.msra.mxu0 0.0
      %1054 = vmatprep.subr.mxu0 0.0
      %1055 = vmatpush1.msra.mxu0 0.0
      %1056 = vmatprep.subr.mxu0 0.0
      %1057 = vmatpush1.msra.mxu0 0.0
      %1058 = vmatprep.mubr.f32.mxu0 0.0
      %1059 = vmatmul.mubr.f32.gmra.mrb[0].mxu0 %v988
      %v1060 = vpop.f32.mrb[0].mxu0
      %v1061 = vadd.f32 0.0, %v1060
      %v1062 = vpop.f32.mrb[0].mxu0
      %v1063 = vadd.f32 0.0, %v1062
      %1064 = vdwg.mxu0
      %v1065 = vadd.f32 %v969, %v1061
      %v1066 = vadd.f32 %v970, %v1063
      %v1067 = vld [vmem:[%s232] sm:$0xff]
      %v1068 = vld [vmem:[%s232 + $0x8] sm:$0xf]
      %v1071 = vcombine.high %v1067, %v1067
      %1072 = vrot.lane.b32.xlu0 %v1067, 79
      %v1073 = vpop.permute.xlu0 %1072
      %1074 = vrot.lane.b32.xlu0 %v1071, 79
      %v1075 = vpop.permute.xlu0 %1074
      %1076 = vrot.lane.b32.xlu0 %v1068, 79
      %v1077 = vpop.permute.xlu0 %1076
      %vm1078 = vcmask 646144
      %v1079 = vsel %vm1078, %v1073, %v1075
      %v1080 = vsel %vm1078, %v1075, %v1077
      %v1083 = vsel %vm467, 0.0, %v1079
      %v1084 = vsel %vm468, 0.0, %v1080
      %s1085 = scalar_lea.vmem %s1, 64
      %v1086 = vld [vmem:[%s1085] sm:$0xff]
      %v1088 = vsel %vm305, %v1086, 0
      %v1091 = vsel %vm309, %v1083, 0
      %v1094 = vsel %vm309, %v1084, 0
      %1096 = vmatprep.subr.mxu0 %v1094
      %1097 = vmatpush1.msra.mxu0 %v1091
      %1098 = vmatprep.subr.mxu0 0.0
      %1099 = vmatpush1.msra.mxu0 0.0
      %1100 = vmatprep.subr.mxu0 0.0
      %1101 = vmatpush1.msra.mxu0 0.0
      %1102 = vmatprep.subr.mxu0 0.0
      %1103 = vmatpush1.msra.mxu0 0.0
      %1104 = vmatprep.subr.mxu0 0.0
      %1105 = vmatpush1.msra.mxu0 0.0
      %1106 = vmatprep.subr.mxu0 0.0
      %1107 = vmatpush1.msra.mxu0 0.0
      %1108 = vmatprep.subr.mxu0 0.0
      %1109 = vmatpush1.msra.mxu0 0.0
      %1110 = vmatprep.subr.mxu0 0.0
      %1111 = vmatpush1.msra.mxu0 0.0
      %1112 = vmatprep.subr.mxu0 0.0
      %1113 = vmatpush1.msra.mxu0 0.0
      %1114 = vmatprep.subr.mxu0 0.0
      %1115 = vmatpush1.msra.mxu0 0.0
      %1116 = vmatprep.subr.mxu0 0.0
      %1117 = vmatpush1.msra.mxu0 0.0
      %1118 = vmatprep.subr.mxu0 0.0
      %1119 = vmatpush1.msra.mxu0 0.0
      %1120 = vmatprep.subr.mxu0 0.0
      %1121 = vmatpush1.msra.mxu0 0.0
      %1122 = vmatprep.subr.mxu0 0.0
      %1123 = vmatpush1.msra.mxu0 0.0
      %1124 = vmatprep.subr.mxu0 0.0
      %1125 = vmatpush1.msra.mxu0 0.0
      %1126 = vmatprep.subr.mxu0 0.0
      %1127 = vmatpush1.msra.mxu0 0.0
      %1128 = vmatprep.subr.mxu0 0.0
      %1129 = vmatpush1.msra.mxu0 0.0
      %1130 = vmatprep.subr.mxu0 0.0
      %1131 = vmatpush1.msra.mxu0 0.0
      %1132 = vmatprep.subr.mxu0 0.0
      %1133 = vmatpush1.msra.mxu0 0.0
      %1134 = vmatprep.subr.mxu0 0.0
      %1135 = vmatpush1.msra.mxu0 0.0
      %1136 = vmatprep.subr.mxu0 0.0
      %1137 = vmatpush1.msra.mxu0 0.0
      %1138 = vmatprep.subr.mxu0 0.0
      %1139 = vmatpush1.msra.mxu0 0.0
      %1140 = vmatprep.subr.mxu0 0.0
      %1141 = vmatpush1.msra.mxu0 0.0
      %1142 = vmatprep.subr.mxu0 0.0
      %1143 = vmatpush1.msra.mxu0 0.0
      %1144 = vmatprep.subr.mxu0 0.0
      %1145 = vmatpush1.msra.mxu0 0.0
      %1146 = vmatprep.subr.mxu0 0.0
      %1147 = vmatpush1.msra.mxu0 0.0
      %1148 = vmatprep.subr.mxu0 0.0
      %1149 = vmatpush1.msra.mxu0 0.0
      %1150 = vmatprep.subr.mxu0 0.0
      %1151 = vmatpush1.msra.mxu0 0.0
      %1152 = vmatprep.subr.mxu0 0.0
      %1153 = vmatpush1.msra.mxu0 0.0
      %1154 = vmatprep.subr.mxu0 0.0
      %1155 = vmatpush1.msra.mxu0 0.0
      %1156 = vmatprep.subr.mxu0 0.0
      %1157 = vmatpush1.msra.mxu0 0.0
      %1158 = vmatprep.subr.mxu0 0.0
      %1159 = vmatpush1.msra.mxu0 0.0
      %1160 = vmatprep.mubr.f32.mxu0 0.0
      %1161 = vmatmul.mubr.f32.gmra.mrb[0].mxu0 %v1088
      %v1162 = vpop.f32.mrb[0].mxu0
      %v1163 = vadd.f32 0.0, %v1162
      %v1164 = vpop.f32.mrb[0].mxu0
      %v1165 = vadd.f32 0.0, %v1164
      %1166 = vdwg.mxu0
      %v1167 = vadd.f32 %v1065, %v1163
      %v1168 = vadd.f32 %v1066, %v1165
      %v1169 = vld [vmem:[%s2] sm:$0xff]
      %1171 = vset.pattern.permute.xlu0 0
      %1172 = vperm.xlu0 %1171, %v1169
      %v1173 = vpop.permute.xlu0 %1172
      %v1175 = vadd.f32 %v1167, %v1173
      %v1176 = vadd.f32 %v1168, %v1173
      %1177 = vst [vmem:[%s237] sm:$0xff] %v1175
      %1178 = vst [vmem:[%s237 + $0x8] sm:$0xff] %v1176
      %v1179 = vadd.f32 %v1175, %v1176
      %1180 = vadd.xlane.f32.xlu0 %v1179
      %v1181 = vpop.xlane.xlu0 %1180
      %vm1182 = vcmask 7168
      %1183 = vst.msk [vmem:[%s241] sm:$0xff] %vm1182, %v1181
      %v1184 = vmul.f32 %v1175, %v1175
      %v1185 = vmul.f32 %v1176, %v1176
      %v1186 = vadd.f32 %v1184, %v1185
      %1187 = vadd.xlane.f32.xlu0 %v1186
      %v1188 = vpop.xlane.xlu0 %1187
      %1189 = vst.msk [vmem:[%s245] sm:$0xff] %vm1182, %v1188
      %p1190 = scmp.lt.s32.totalorder %s17, 1
      %s1191 = scalar_select %p1190, %s17, 1
      %s1192 = smul.addr %s1191, 2
      %s1193 = smul.addr %s1192, 8
      %s1194 = scalar_lea.vmem %s3, %s1193
      %p1195 = scmp.lt.s32.totalorder %s17, 1
      %s1196 = scalar_select %p1195, %s17, 1
      %s1197 = smul.addr %s1196, 8
      %s1198 = scalar_lea.vmem %s4, %s1197
      %p1199 = scmp.lt.s32.totalorder %s17, 1
      %s1200 = scalar_select %p1199, %s17, 1
      %s1201 = smul.addr %s1200, 8
      %s1202 = scalar_lea.vmem %s5, %s1201
      // Predicated region
      $region33: #{conv_block_forward.4} parent=31 // pred_check
        %p1203 = pneg %p103
      $region34: #{conv_block_forward.4} parent=31 // pred_check_branch
        %1205 = sbr.rel (%p1203) target = $region36
      $region35: #{conv_block_forward.4} parent=31 // pred_region
        _
      $region36: #{conv_block_forward.4} parent=31 // pred_fallthru
        _
      // Predicated region
      $region37: #{conv_block_forward.4} parent=31 // pred_check
        %p1206 = pneg %p129
      $region38: #{conv_block_forward.4} parent=31 // pred_check_branch
        %1208 = sbr.rel (%p1206) target = $region40
      $region39: #{conv_block_forward.4} parent=31 // pred_region
        _
      $region40: #{conv_block_forward.4} parent=31 // pred_fallthru
        _
      // Predicated region
      $region41: #{conv_block_forward.4} parent=31 // pred_check
        %p1209 = pneg %p155
      $region42: #{conv_block_forward.4} parent=31 // pred_check_branch
        %1211 = sbr.rel (%p1209) target = $region44
      $region43: #{conv_block_forward.4} parent=31 // pred_region
        _
      $region44: #{conv_block_forward.4} parent=31 // pred_fallthru
        _
    $region32: #{conv_block_forward.4} parent=5 // pred_fallthru
      _
    %p1212 = scmp.le.s32.totalorder 2, %s12
    // Predicated region
    $region45: #{conv_block_forward.4} parent=5 // pred_check
      %p1213 = pneg %p1212
    $region46: #{conv_block_forward.4} parent=5 // pred_check_branch
      %1215 = sbr.rel (%p1213) target = $region48
    $region47: #{conv_block_forward.4} parent=5 // pred_region
      %s1216 = ssub.s32 %s12, 2
      // Predicated region
      $region49: #{conv_block_forward.4} parent=47 // pred_check
        %p1217 = pneg %p109
      $region50: #{conv_block_forward.4} parent=47 // pred_check_branch
        %1219 = sbr.rel (%p1217) target = $region52
      $region51: #{conv_block_forward.4} parent=47 // pred_region
        %p1220 = scmp.lt.s32.totalorder %s18, 1
        %s1221 = scalar_select %p1220, %s18, 1
        %s1222 = smul.addr %s1221, 2
        %s1223 = smul.addr %s1222, 8
        %s1224 = scalar_lea.vmem %s3, %s1223
      $region52: #{conv_block_forward.4} parent=47 // pred_fallthru
        _
      // Predicated region
      $region53: #{conv_block_forward.4} parent=47 // pred_check
        %p1225 = pneg %p135
      $region54: #{conv_block_forward.4} parent=47 // pred_check_branch
        %1227 = sbr.rel (%p1225) target = $region56
      $region55: #{conv_block_forward.4} parent=47 // pred_region
        %p1228 = scmp.lt.s32.totalorder %s18, 1
        %s1229 = scalar_select %p1228, %s18, 1
        %s1230 = smul.addr %s1229, 8
        %s1231 = scalar_lea.vmem %s4, %s1230
      $region56: #{conv_block_forward.4} parent=47 // pred_fallthru
        _
      // Predicated region
      $region57: #{conv_block_forward.4} parent=47 // pred_check
        %p1232 = pneg %p161
      $region58: #{conv_block_forward.4} parent=47 // pred_check_branch
        %1234 = sbr.rel (%p1232) target = $region60
      $region59: #{conv_block_forward.4} parent=47 // pred_region
        %p1235 = scmp.lt.s32.totalorder %s18, 1
        %s1236 = scalar_select %p1235, %s18, 1
        %s1237 = smul.addr %s1236, 8
        %s1238 = scalar_lea.vmem %s5, %s1237
      $region60: #{conv_block_forward.4} parent=47 // pred_fallthru
        _
    $region48: #{conv_block_forward.4} parent=5 // pred_fallthru
      _
  $region6: #{conv_block_forward.4} parent=0 // loop_footer
    %s16 = sadd.s32 1, %s12
  $region7: #{conv_block_forward.4} parent=0 // loop_footer_branch
    %11 = sbr.rel target = $region3
  $region8: #{conv_block_forward.4} parent=0 // loop_exit
    _

</llo_original>
